<compile_context>
chip_gen: v7x
topology: tpu7x:2x2x1
jax: 0.10.0
libtpu: 0.0.40
codegen_flags: <defaults>
</compile_context>

<pallas_src>
import functools

import jax
import jax.numpy as jnp
from jax.experimental import pallas as pl
from jax.experimental.pallas import tpu as pltpu

LN_EPS = 1e-5


# ----------------------------- generation tuning -----------------------------

def _device_kind():
    try:
        return jax.devices()[0].device_kind.lower()
    except Exception:
        return ""


def _default_ew_dtype():
    """Elementwise dtype: bf16 on bf16-capable VPU/EUP (v6e/v7x), else f32."""
    kind = _device_kind()
    if "v6" in kind or "v7" in kind:
        return jnp.bfloat16
    return jnp.float32  # v5e and older: no bf16 VPU/EUP; avoid extra cast passes


def _tpu_tuning():
    """(min_grid_steps, block_budget_bytes, vmem_limit_bytes) per generation."""
    kind = _device_kind()
    if "v7" in kind:                       # 2 TCs/chip, 64 MiB VMEM per TC
        return 4, 16 << 20, 48 << 20       # >=2 steps per TC so DMA overlaps compute
    if "v6" in kind or "v5e" in kind or "v5 lite" in kind:   # 1 TC, 128 MiB VMEM
        return 1, 32 << 20, 64 << 20       # grid=1 is fine (and best) on single-TC parts
    return 2, 16 << 20, 48 << 20           # unknown: conservative


def _pick_block_n(n, t, c, x_itemsize, dot_itemsize, *, budget_bytes, min_grid):
    """Largest divisor of n such that (a) grid has >= min_grid steps and
    (b) double-buffered activation blocks + resident weights + f32 in-kernel
    intermediates fit the VMEM budget."""
    min_grid = max(1, min(min_grid, n))
    weights = 2 * 3 * c * c * dot_itemsize + 2 * 16 * c * 4   # mats + 1-D params (x2 bufs)
    best = 1
    for d in range(1, n + 1):
        if n % d or (n // d) < min_grid:
            continue
        act_io = 2 * 2 * d * t * c * x_itemsize    # double-buffered in + out blocks
        interm = 5 * d * t * c * 4                 # x2d / h / out2d / y f32 temporaries
        if weights + act_io + interm <= budget_bytes:
            best = d
    return best


# --------------------------------- kernel ------------------------------------

def _silu(h):
    return h * jax.nn.sigmoid(h)


def _layernorm(h, w, b):
    """Two-pass LayerNorm. Stats accumulate in f32; the full-tensor subtract,
    square and scale/shift run in h.dtype (bf16 on v6e/v7x, f32 on v5e)."""
    mu = jnp.mean(h.astype(jnp.float32), axis=-1, keepdims=True)
    d = h - mu.astype(h.dtype)
    var = jnp.mean((d * d).astype(jnp.float32), axis=-1, keepdims=True)
    inv = jax.lax.rsqrt(var + LN_EPS).astype(h.dtype)
    return d * inv * w + b


def _resblock_kernel(x_ref,
                     ln1w_ref, ln1b_ref, w1_ref, b1_ref,
                     ln2w_ref, ln2b_ref, w2_ref, b2_ref,
                     wg_ref, bg_ref,
                     o_ref,
                     *, block_n, seq_len, dot_dtype, ew_dtype):
    nb, t = block_n, seq_len
    c = x_ref.shape[-1]

    # Lane-dense load; (nb, T) -> nb*T is a leading-dim merge (free when T is a
    # sublane multiple, e.g. T=8).
    x3d = x_ref[...]                                   # (nb, T, C)
    x2d = x3d.reshape(nb * t, c)                       # (nb*T, C)
    pooled = jnp.max(x3d, axis=1)                      # (nb, C) max over T

    # ---- body: SiLU -> LN -> Linear -> SiLU -> LN -> Linear, all rows ----
    h = _silu(x2d.astype(ew_dtype))
    h = _layernorm(h, ln1w_ref[...], ln1b_ref[...])
    h = jnp.dot(h.astype(dot_dtype), w1_ref[...],
                preferred_element_type=jnp.float32) + b1_ref[...]
    h = _silu(h.astype(ew_dtype))
    h = _layernorm(h, ln2w_ref[...], ln2b_ref[...])
    out2d = jnp.dot(h.astype(dot_dtype), w2_ref[...],
                    preferred_element_type=jnp.float32) + b2_ref[...]

    # ---- gate: one (nb, C) @ (C, C) matmul + tanh ----
    gate = jnp.tanh(jnp.dot(pooled.astype(dot_dtype), wg_ref[...],
                            preferred_element_type=jnp.float32) + bg_ref[...])

    # ---- residual + gate (f32 for output fidelity), lane-dense writeback ----
    y = (x_ref[...].astype(jnp.float32)
         + out2d.reshape(nb, t, c) * gate[:, None, :])
    o_ref[...] = y.astype(o_ref.dtype)


# -------------------------------- wrapper ------------------------------------

def resblock_pallas(x_nct, params, *, dot_dtype=jnp.bfloat16, ew_dtype=None,
                    block_n=None):
    """ResBlock forward. x_nct: (N, C, T), same layout as the PyTorch module.
    Matmuls run in `dot_dtype` (bf16 default) with f32 accumulation; elementwise
    math runs in `ew_dtype` (auto: bf16 on v6e/v7x, f32 on v5e). pool_op='max'."""
    N, C, T = x_nct.shape
    (ln1w, ln1b, w1, b1, ln2w, ln2b, w2, b2, wg, bg) = params

    if ew_dtype is None:
        ew_dtype = _default_ew_dtype()
    min_grid, budget, vmem_limit = _tpu_tuning()
    if block_n is None:
        block_n = _pick_block_n(N, T, C, x_nct.dtype.itemsize,
                                jnp.dtype(dot_dtype).itemsize,
                                budget_bytes=budget, min_grid=min_grid)
    assert N % block_n == 0, "block_n must divide N"

    # Lane-dense working layout: one cheap XLA transpose in the wrapper.
    x_ntc = jnp.transpose(x_nct, (0, 2, 1))           # (N, T, C)

    # PyTorch Linear: y = x @ W.T + b -> pre-transpose weights, cast to dot_dtype.
    w1t = w1.T.astype(dot_dtype)
    w2t = w2.T.astype(dot_dtype)
    wgt = wg.T.astype(dot_dtype)
    rowf = lambda v: v.reshape(1, C).astype(jnp.float32)   # biases (f32 add)
    rowe = lambda v: v.reshape(1, C).astype(ew_dtype)      # LN scale/shift

    # Constant across grid steps (index_map always (0,0)).
    full_mat = pl.BlockSpec((C, C), lambda n: (0, 0))
    full_vec = pl.BlockSpec((1, C), lambda n: (0, 0))
    act_spec = pl.BlockSpec((block_n, T, C), lambda n: (n, 0, 0))

    kernel = functools.partial(_resblock_kernel, block_n=block_n, seq_len=T,
                               dot_dtype=dot_dtype, ew_dtype=ew_dtype)

    out_ntc = pl.pallas_call(
        kernel,
        out_shape=jax.ShapeDtypeStruct((N, T, C), x_nct.dtype),
        grid_spec=pltpu.PrefetchScalarGridSpec(
            num_scalar_prefetch=0,
            grid=(N // block_n,),
            in_specs=[
                act_spec,                             # x (lane-dense)
                full_vec, full_vec,                   # ln1 w, b
                full_mat, full_vec,                   # W1^T, b1
                full_vec, full_vec,                   # ln2 w, b
                full_mat, full_vec,                   # W2^T, b2
                full_mat, full_vec,                   # Wg^T, bg
            ],
            out_specs=act_spec,
        ),
        compiler_params=pltpu.CompilerParams(
            dimension_semantics=("parallel",),
            vmem_limit_bytes=vmem_limit,
        ),
    )(x_ntc,
      rowe(ln1w), rowe(ln1b), w1t, rowf(b1),
      rowe(ln2w), rowe(ln2b), w2t, rowf(b2),
      wgt, rowf(bg))

    # Back to the module's (N, C, T) output layout.
    return jnp.transpose(out_ntc, (0, 2, 1))


# ------------------------------- reference -----------------------------------

def resblock_reference(x_nct, params):
    """Pure-JAX reference mirroring the PyTorch forward (pool_op='max')."""
    (ln1w, ln1b, w1, b1, ln2w, ln2b, w2, b2, wg, bg) = params
    N, C, T = x_nct.shape
    h = jnp.transpose(x_nct, (0, 2, 1)).reshape(N * T, C)

    h = h * jax.nn.sigmoid(h)
    mu = jnp.mean(h, axis=-1, keepdims=True)
    var = jnp.mean((h - mu) ** 2, axis=-1, keepdims=True)
    h = (h - mu) / jnp.sqrt(var + LN_EPS) * ln1w + ln1b
    h = h @ w1.T + b1

    h = h * jax.nn.sigmoid(h)
    mu = jnp.mean(h, axis=-1, keepdims=True)
    var = jnp.mean((h - mu) ** 2, axis=-1, keepdims=True)
    h = (h - mu) / jnp.sqrt(var + LN_EPS) * ln2w + ln2b
    h = h @ w2.T + b2

    out = jnp.transpose(h.reshape(N, T, C), (0, 2, 1))        # (N, C, T)
    pooled = jnp.max(x_nct, axis=-1)                          # (N, C)
    gate = jnp.tanh(pooled @ wg.T + bg)                       # (N, C)
    return x_nct + out * gate[..., None]


def init_params(key, hidden_size):
    ks = jax.random.split(key, 6)
    C = hidden_size
    scale = 1.0 / jnp.sqrt(C)
    ln1w = jnp.ones((C,), jnp.float32)
    ln1b = jnp.zeros((C,), jnp.float32)
    w1 = jax.random.uniform(ks[0], (C, C), jnp.float32, -scale, scale)
    b1 = jax.random.uniform(ks[1], (C,), jnp.float32, -scale, scale)
    ln2w = jnp.ones((C,), jnp.float32)
    ln2b = jnp.zeros((C,), jnp.float32)
    w2 = jax.random.uniform(ks[2], (C, C), jnp.float32, -scale, scale)
    b2 = jax.random.uniform(ks[3], (C,), jnp.float32, -scale, scale)
    wg = jax.random.uniform(ks[4], (C, C), jnp.float32, -scale, scale)
    bg = jax.random.uniform(ks[5], (C,), jnp.float32, -scale, scale)
    return (ln1w, ln1b, w1, b1, ln2w, ln2b, w2, b2, wg, bg)


if __name__ == "__main__":
    # (N, C, T) = (batch, hidden_size, tokens). C lane-dense (128), T sublane (8).
    N, C, T = 64, 128, 8
    key = jax.random.PRNGKey(0)
    kx, kp = jax.random.split(key)
    x = jax.random.normal(kx, (N, C, T), jnp.float32)
    params = init_params(kp, C)

    ref = resblock_reference(x, params)

    # Exact-math path (f32 matmuls + f32 elementwise) for a tight check.
    out_f32 = jax.block_until_ready(
        resblock_pallas(x, params, dot_dtype=jnp.float32, ew_dtype=jnp.float32))
    # Default fast path: bf16 matmuls (f32 accumulate); elementwise dtype
    # auto-selected per TPU generation.
    out_fast = jax.block_until_ready(resblock_pallas(x, params))

    assert out_f32.shape == (N, C, T)
    assert jnp.allclose(out_f32, ref, atol=1e-4, rtol=1e-4), "f32 kernel mismatch"
    assert jnp.allclose(out_fast, ref, atol=5e-2, rtol=5e-2), "fast kernel mismatch"

    print("KERNEL_OK")
</pallas_src>

<mosaic_0001>
module attributes {stable_mosaic.version = 11 : i64} {
  func.func @_resblock_kernel(%arg0: i32, %arg1: memref<32x8x128xf32, #tpu.memory_space<vmem>>, %arg2: memref<1x128xf32, #tpu.memory_space<vmem>>, %arg3: memref<1x128xf32, #tpu.memory_space<vmem>>, %arg4: memref<128x128xf32, #tpu.memory_space<vmem>>, %arg5: memref<1x128xf32, #tpu.memory_space<vmem>>, %arg6: memref<1x128xf32, #tpu.memory_space<vmem>>, %arg7: memref<1x128xf32, #tpu.memory_space<vmem>>, %arg8: memref<128x128xf32, #tpu.memory_space<vmem>>, %arg9: memref<1x128xf32, #tpu.memory_space<vmem>>, %arg10: memref<128x128xf32, #tpu.memory_space<vmem>>, %arg11: memref<1x128xf32, #tpu.memory_space<vmem>>, %arg12: memref<32x8x128xf32, #tpu.memory_space<vmem>>) attributes {dimension_semantics = [#tpu.dimension_semantics<parallel>], iteration_bounds = array<i64: 2>, scalar_prefetch = 0 : i64, scratch_operands = 0 : i64, tpu.core_type = #tpu.core_type<tc>, window_params = [{transform_indices = @transform_0, window_bounds = array<i64: 32, 8, 128>}, {pipeline_mode = #tpu.pipeline_mode<synchronous>, transform_indices = @transform_1, window_bounds = array<i64: 1, 128>}, {pipeline_mode = #tpu.pipeline_mode<synchronous>, transform_indices = @transform_2, window_bounds = array<i64: 1, 128>}, {pipeline_mode = #tpu.pipeline_mode<synchronous>, transform_indices = @transform_3, window_bounds = array<i64: 128, 128>}, {pipeline_mode = #tpu.pipeline_mode<synchronous>, transform_indices = @transform_4, window_bounds = array<i64: 1, 128>}, {pipeline_mode = #tpu.pipeline_mode<synchronous>, transform_indices = @transform_5, window_bounds = array<i64: 1, 128>}, {pipeline_mode = #tpu.pipeline_mode<synchronous>, transform_indices = @transform_6, window_bounds = array<i64: 1, 128>}, {pipeline_mode = #tpu.pipeline_mode<synchronous>, transform_indices = @transform_7, window_bounds = array<i64: 128, 128>}, {pipeline_mode = #tpu.pipeline_mode<synchronous>, transform_indices = @transform_8, window_bounds = array<i64: 1, 128>}, {pipeline_mode = #tpu.pipeline_mode<synchronous>, transform_indices = @transform_9, window_bounds = array<i64: 128, 128>}, {pipeline_mode = #tpu.pipeline_mode<synchronous>, transform_indices = @transform_10, window_bounds = array<i64: 1, 128>}, {transform_indices = @transform_11, window_bounds = array<i64: 32, 8, 128>}]} {
    %c0 = arith.constant 0 : index
    %c0_0 = arith.constant 0 : index
    %c0_1 = arith.constant 0 : index
    %0 = vector.load %arg1[%c0, %c0_0, %c0_1] : memref<32x8x128xf32, #tpu.memory_space<vmem>>, vector<32x8x128xf32>
    %1 = vector.shape_cast %0 : vector<32x8x128xf32> to vector<256x128xf32>
    %cst = arith.constant dense<0xFF800000> : vector<32x128xf32>
    %2 = vector.multi_reduction <maximumf>, %0, %cst [1] : vector<32x8x128xf32> to vector<32x128xf32>
    %3 = arith.negf %1 : vector<256x128xf32>
    %4 = math.exp %3 : vector<256x128xf32>
    %cst_2 = arith.constant 1.000000e+00 : f32
    %5 = vector.broadcast %cst_2 : f32 to vector<256x128xf32>
    %6 = arith.addf %5, %4 : vector<256x128xf32>
    %7 = arith.divf %5, %6 : vector<256x128xf32>
    %8 = arith.mulf %1, %7 : vector<256x128xf32>
    %c0_3 = arith.constant 0 : index
    %c0_4 = arith.constant 0 : index
    %9 = vector.load %arg2[%c0_3, %c0_4] : memref<1x128xf32, #tpu.memory_space<vmem>>, vector<1x128xf32>
    %c0_5 = arith.constant 0 : index
    %c0_6 = arith.constant 0 : index
    %10 = vector.load %arg3[%c0_5, %c0_6] : memref<1x128xf32, #tpu.memory_space<vmem>>, vector<1x128xf32>
    %cst_7 = arith.constant dense<0.000000e+00> : vector<256xf32>
    %11 = vector.multi_reduction <add>, %8, %cst_7 [1] : vector<256x128xf32> to vector<256xf32>
    %12 = vector.shape_cast %11 : vector<256xf32> to vector<256x1xf32>
    %cst_8 = arith.constant 1.280000e+02 : f32
    %13 = vector.broadcast %cst_8 : f32 to vector<256x1xf32>
    %14 = arith.divf %12, %13 : vector<256x1xf32>
    %15 = vector.broadcast %14 : vector<256x1xf32> to vector<256x128xf32>
    %16 = arith.subf %8, %15 : vector<256x128xf32>
    %17 = arith.mulf %16, %16 : vector<256x128xf32>
    %cst_9 = arith.constant dense<0.000000e+00> : vector<256xf32>
    %18 = vector.multi_reduction <add>, %17, %cst_9 [1] : vector<256x128xf32> to vector<256xf32>
    %19 = vector.shape_cast %18 : vector<256xf32> to vector<256x1xf32>
    %cst_10 = arith.constant 1.280000e+02 : f32
    %20 = vector.broadcast %cst_10 : f32 to vector<256x1xf32>
    %21 = arith.divf %19, %20 : vector<256x1xf32>
    %cst_11 = arith.constant 9.99999974E-6 : f32
    %22 = vector.broadcast %cst_11 : f32 to vector<256x1xf32>
    %23 = arith.addf %21, %22 : vector<256x1xf32>
    %24 = math.rsqrt %23 : vector<256x1xf32>
    %25 = vector.broadcast %24 : vector<256x1xf32> to vector<256x128xf32>
    %26 = arith.mulf %16, %25 : vector<256x128xf32>
    %27 = vector.broadcast %9 : vector<1x128xf32> to vector<256x128xf32>
    %28 = arith.mulf %26, %27 : vector<256x128xf32>
    %29 = vector.broadcast %10 : vector<1x128xf32> to vector<256x128xf32>
    %30 = arith.addf %28, %29 : vector<256x128xf32>
    %c0_12 = arith.constant 0 : index
    %c0_13 = arith.constant 0 : index
    %31 = vector.load %arg4[%c0_12, %c0_13] : memref<128x128xf32, #tpu.memory_space<vmem>>, vector<128x128xf32>
    %cst_14 = arith.constant dense<0.000000e+00> : vector<256x128xf32>
    %32 = tpu.matmul %30, %31, %cst_14 {dimension_numbers = #tpu.dot_dimension_numbers<[1], [0], [0], [1], [0, 0, 1, 1], [], []>} : vector<256x128xf32>, vector<128x128xf32>, vector<256x128xf32> -> vector<256x128xf32>
    %c0_15 = arith.constant 0 : index
    %c0_16 = arith.constant 0 : index
    %33 = vector.load %arg5[%c0_15, %c0_16] : memref<1x128xf32, #tpu.memory_space<vmem>>, vector<1x128xf32>
    %34 = vector.broadcast %33 : vector<1x128xf32> to vector<256x128xf32>
    %35 = arith.addf %32, %34 : vector<256x128xf32>
    %36 = arith.negf %35 : vector<256x128xf32>
    %37 = math.exp %36 : vector<256x128xf32>
    %cst_17 = arith.constant 1.000000e+00 : f32
    %38 = vector.broadcast %cst_17 : f32 to vector<256x128xf32>
    %39 = arith.addf %38, %37 : vector<256x128xf32>
    %40 = arith.divf %38, %39 : vector<256x128xf32>
    %41 = arith.mulf %35, %40 : vector<256x128xf32>
    %c0_18 = arith.constant 0 : index
    %c0_19 = arith.constant 0 : index
    %42 = vector.load %arg6[%c0_18, %c0_19] : memref<1x128xf32, #tpu.memory_space<vmem>>, vector<1x128xf32>
    %c0_20 = arith.constant 0 : index
    %c0_21 = arith.constant 0 : index
    %43 = vector.load %arg7[%c0_20, %c0_21] : memref<1x128xf32, #tpu.memory_space<vmem>>, vector<1x128xf32>
    %cst_22 = arith.constant dense<0.000000e+00> : vector<256xf32>
    %44 = vector.multi_reduction <add>, %41, %cst_22 [1] : vector<256x128xf32> to vector<256xf32>
    %45 = vector.shape_cast %44 : vector<256xf32> to vector<256x1xf32>
    %cst_23 = arith.constant 1.280000e+02 : f32
    %46 = vector.broadcast %cst_23 : f32 to vector<256x1xf32>
    %47 = arith.divf %45, %46 : vector<256x1xf32>
    %48 = vector.broadcast %47 : vector<256x1xf32> to vector<256x128xf32>
    %49 = arith.subf %41, %48 : vector<256x128xf32>
    %50 = arith.mulf %49, %49 : vector<256x128xf32>
    %cst_24 = arith.constant dense<0.000000e+00> : vector<256xf32>
    %51 = vector.multi_reduction <add>, %50, %cst_24 [1] : vector<256x128xf32> to vector<256xf32>
    %52 = vector.shape_cast %51 : vector<256xf32> to vector<256x1xf32>
    %cst_25 = arith.constant 1.280000e+02 : f32
    %53 = vector.broadcast %cst_25 : f32 to vector<256x1xf32>
    %54 = arith.divf %52, %53 : vector<256x1xf32>
    %cst_26 = arith.constant 9.99999974E-6 : f32
    %55 = vector.broadcast %cst_26 : f32 to vector<256x1xf32>
    %56 = arith.addf %54, %55 : vector<256x1xf32>
    %57 = math.rsqrt %56 : vector<256x1xf32>
    %58 = vector.broadcast %57 : vector<256x1xf32> to vector<256x128xf32>
    %59 = arith.mulf %49, %58 : vector<256x128xf32>
    %60 = vector.broadcast %42 : vector<1x128xf32> to vector<256x128xf32>
    %61 = arith.mulf %59, %60 : vector<256x128xf32>
    %62 = vector.broadcast %43 : vector<1x128xf32> to vector<256x128xf32>
    %63 = arith.addf %61, %62 : vector<256x128xf32>
    %c0_27 = arith.constant 0 : index
    %c0_28 = arith.constant 0 : index
    %64 = vector.load %arg8[%c0_27, %c0_28] : memref<128x128xf32, #tpu.memory_space<vmem>>, vector<128x128xf32>
    %cst_29 = arith.constant dense<0.000000e+00> : vector<256x128xf32>
    %65 = tpu.matmul %63, %64, %cst_29 {dimension_numbers = #tpu.dot_dimension_numbers<[1], [0], [0], [1], [0, 0, 1, 1], [], []>} : vector<256x128xf32>, vector<128x128xf32>, vector<256x128xf32> -> vector<256x128xf32>
    %c0_30 = arith.constant 0 : index
    %c0_31 = arith.constant 0 : index
    %66 = vector.load %arg9[%c0_30, %c0_31] : memref<1x128xf32, #tpu.memory_space<vmem>>, vector<1x128xf32>
    %67 = vector.broadcast %66 : vector<1x128xf32> to vector<256x128xf32>
    %68 = arith.addf %65, %67 : vector<256x128xf32>
    %c0_32 = arith.constant 0 : index
    %c0_33 = arith.constant 0 : index
    %69 = vector.load %arg10[%c0_32, %c0_33] : memref<128x128xf32, #tpu.memory_space<vmem>>, vector<128x128xf32>
    %cst_34 = arith.constant dense<0.000000e+00> : vector<32x128xf32>
    %70 = tpu.matmul %2, %69, %cst_34 {dimension_numbers = #tpu.dot_dimension_numbers<[1], [0], [0], [1], [0, 0, 1, 1], [], []>} : vector<32x128xf32>, vector<128x128xf32>, vector<32x128xf32> -> vector<32x128xf32>
    %c0_35 = arith.constant 0 : index
    %c0_36 = arith.constant 0 : index
    %71 = vector.load %arg11[%c0_35, %c0_36] : memref<1x128xf32, #tpu.memory_space<vmem>>, vector<1x128xf32>
    %72 = vector.broadcast %71 : vector<1x128xf32> to vector<32x128xf32>
    %73 = arith.addf %70, %72 : vector<32x128xf32>
    %74 = math.tanh %73 : vector<32x128xf32>
    %c0_37 = arith.constant 0 : index
    %c0_38 = arith.constant 0 : index
    %c0_39 = arith.constant 0 : index
    %75 = vector.load %arg1[%c0_37, %c0_38, %c0_39] : memref<32x8x128xf32, #tpu.memory_space<vmem>>, vector<32x8x128xf32>
    %76 = vector.shape_cast %68 : vector<256x128xf32> to vector<32x8x128xf32>
    %77 = vector.shape_cast %74 : vector<32x128xf32> to vector<32x1x128xf32>
    %78 = vector.broadcast %77 : vector<32x1x128xf32> to vector<32x8x128xf32>
    %79 = arith.mulf %76, %78 : vector<32x8x128xf32>
    %80 = arith.addf %75, %79 : vector<32x8x128xf32>
    %c0_40 = arith.constant 0 : index
    %c0_41 = arith.constant 0 : index
    %c0_42 = arith.constant 0 : index
    %81 = vector.load %arg12[%c0_40, %c0_41, %c0_42] : memref<32x8x128xf32, #tpu.memory_space<vmem>>, vector<32x8x128xf32>
    tpu.vector_store %arg12[%c0_40, %c0_41, %c0_42], %80 {strides = array<i32>} : memref<32x8x128xf32, #tpu.memory_space<vmem>>, vector<32x8x128xf32>,
    return
  }
  func.func @transform_0(%arg0: i32) -> (i32, i32, i32) {
    %c0_i32 = arith.constant 0 : i32
    %c0_i32_0 = arith.constant 0 : i32
    %c0_i32_1 = arith.constant 0 : i32
    return %arg0, %c0_i32, %c0_i32_0 : i32, i32, i32
  }
  func.func @transform_1(%arg0: i32) -> (i32, i32) {
    %c0_i32 = arith.constant 0 : i32
    %c0_i32_0 = arith.constant 0 : i32
    %c0_i32_1 = arith.constant 0 : i32
    return %c0_i32, %c0_i32_0 : i32, i32
  }
  func.func @transform_2(%arg0: i32) -> (i32, i32) {
    %c0_i32 = arith.constant 0 : i32
    %c0_i32_0 = arith.constant 0 : i32
    %c0_i32_1 = arith.constant 0 : i32
    return %c0_i32, %c0_i32_0 : i32, i32
  }
  func.func @transform_3(%arg0: i32) -> (i32, i32) {
    %c0_i32 = arith.constant 0 : i32
    %c0_i32_0 = arith.constant 0 : i32
    %c0_i32_1 = arith.constant 0 : i32
    return %c0_i32, %c0_i32_0 : i32, i32
  }
  func.func @transform_4(%arg0: i32) -> (i32, i32) {
    %c0_i32 = arith.constant 0 : i32
    %c0_i32_0 = arith.constant 0 : i32
    %c0_i32_1 = arith.constant 0 : i32
    return %c0_i32, %c0_i32_0 : i32, i32
  }
  func.func @transform_5(%arg0: i32) -> (i32, i32) {
    %c0_i32 = arith.constant 0 : i32
    %c0_i32_0 = arith.constant 0 : i32
    %c0_i32_1 = arith.constant 0 : i32
    return %c0_i32, %c0_i32_0 : i32, i32
  }
  func.func @transform_6(%arg0: i32) -> (i32, i32) {
    %c0_i32 = arith.constant 0 : i32
    %c0_i32_0 = arith.constant 0 : i32
    %c0_i32_1 = arith.constant 0 : i32
    return %c0_i32, %c0_i32_0 : i32, i32
  }
  func.func @transform_7(%arg0: i32) -> (i32, i32) {
    %c0_i32 = arith.constant 0 : i32
    %c0_i32_0 = arith.constant 0 : i32
    %c0_i32_1 = arith.constant 0 : i32
    return %c0_i32, %c0_i32_0 : i32, i32
  }
  func.func @transform_8(%arg0: i32) -> (i32, i32) {
    %c0_i32 = arith.constant 0 : i32
    %c0_i32_0 = arith.constant 0 : i32
    %c0_i32_1 = arith.constant 0 : i32
    return %c0_i32, %c0_i32_0 : i32, i32
  }
  func.func @transform_9(%arg0: i32) -> (i32, i32) {
    %c0_i32 = arith.constant 0 : i32
    %c0_i32_0 = arith.constant 0 : i32
    %c0_i32_1 = arith.constant 0 : i32
    return %c0_i32, %c0_i32_0 : i32, i32
  }
  func.func @transform_10(%arg0: i32) -> (i32, i32) {
    %c0_i32 = arith.constant 0 : i32
    %c0_i32_0 = arith.constant 0 : i32
    %c0_i32_1 = arith.constant 0 : i32
    return %c0_i32, %c0_i32_0 : i32, i32
  }
  func.func @transform_11(%arg0: i32) -> (i32, i32, i32) {
    %c0_i32 = arith.constant 0 : i32
    %c0_i32_0 = arith.constant 0 : i32
    %c0_i32_1 = arith.constant 0 : i32
    return %arg0, %c0_i32, %c0_i32_0 : i32, i32, i32
  }
}

</mosaic_0001>

<llo_original>
// kernel: tpu_custom_call.1
$region0: #{tpu_custom_call.1}
  #allocation0 [shape = 'u32[]', space=smem, size = 0x4, offset = 0x4, fixed_abs, tag = 'smem constant byte address 0x4 - core index']
  #allocation1 [shape = 'u32[144,128]{1,0:T(1,128)}', space=vmem, size = 0x12000, scoped, tag = 'internal scratch']
  %s0 = inlined_call_operand.hbm [shape: f32[64,8,128], index: 0, kind: input, shape index: {}]
  %s1 = inlined_call_operand.vmem [shape: f32[1,128], index: 1, kind: input, shape index: {}]
  %s2 = inlined_call_operand.vmem [shape: f32[1,128], index: 2, kind: input, shape index: {}]
  %s3 = inlined_call_operand.hbm [shape: f32[128,128], index: 3, kind: input, shape index: {}]
  %s4 = inlined_call_operand.vmem [shape: f32[1,128], index: 4, kind: input, shape index: {}]
  %s5 = inlined_call_operand.vmem [shape: f32[1,128], index: 5, kind: input, shape index: {}]
  %s6 = inlined_call_operand.vmem [shape: f32[1,128], index: 6, kind: input, shape index: {}]
  %s7 = inlined_call_operand.hbm [shape: f32[128,128], index: 7, kind: input, shape index: {}]
  %s8 = inlined_call_operand.vmem [shape: f32[1,128], index: 8, kind: input, shape index: {}]
  %s9 = inlined_call_operand.hbm [shape: f32[128,128], index: 9, kind: input, shape index: {}]
  %s10 = inlined_call_operand.vmem [shape: f32[1,128], index: 10, kind: input, shape index: {}]
  %s11 = inlined_call_operand.hbm [shape: f32[64,8,128], index: 11, kind: output, shape index: {}]
  %s12 = sld [smem:[#allocation0]]
  $region93: #{tpu_custom_call.1} parent=0
    _
  %s14 = ssub.s32 1, %s12
  %s15 = scalar_select 0, %s14, %s12
  $region1: #{tpu_custom_call.1} parent=0
    #allocation2 [shape = 'u8[262144]{0}', space=vmem, size = 0x40000, scoped, tag = 'input window, operand 0']
    #allocation3 [shape = 's32[2]{0}', space=sflag, size = 0x8, scoped, tag = 'scoped memory for tpu_custom_call.1']
    #allocation4 [shape = 's32[2]{0}', space=sflag, size = 0x8, scoped, tag = 'scoped memory for tpu_custom_call.1']
    #allocation5 [shape = 'u8[65536]{0}', space=vmem, size = 0x10000, scoped, tag = 'input window, operand 3, single buffered']
    #allocation6 [shape = 's32[1]{0}', space=sflag, size = 0x4, scoped, tag = 'scoped memory for tpu_custom_call.1']
    #allocation7 [shape = 'u8[65536]{0}', space=vmem, size = 0x10000, scoped, tag = 'input window, operand 7, single buffered']
    #allocation8 [shape = 'u8[65536]{0}', space=vmem, size = 0x10000, scoped, tag = 'input window, operand 9, single buffered']
    #allocation9 [shape = 's32[1]{0}', space=sflag, size = 0x4, scoped, tag = 'scoped memory for tpu_custom_call.1']
    #allocation10 [shape = 'u8[262144]{0}', space=vmem, size = 0x40000, scoped, tag = 'output window, operand 0']
    %16 = vsyncpa [#allocation3], 0
    %s17 = scalar_lea.sflag [#allocation3], 1
    %18 = vsyncpa %s17, 0
    %19 = vsyncpa [#allocation6], 0
    %20 = vsyncpa [#allocation9], 0
    %21 = vsyncpa [#allocation4], 0
    %s22 = scalar_lea.sflag [#allocation4], 1
    %23 = vsyncpa %s22, 0
    loop: start=0, step=1, limit=4
    $region2: #{tpu_custom_call.1} parent=1 // loop_pre_header
      _
    $region3: #{tpu_custom_call.1} parent=1 // loop_header
      %s25 = sphi 0, %s29
      %p26 = scmp.ge.s32.totalorder %s25, 4
      %s35 = sphi 0, %s37
      %s38 = sphi 0, %s35
      %s39 = sphi 0, %s38
      %s55 = sphi 0, %s39
      %s59 = sphi 0, %s59
      %s61 = sphi 0, %s59
      %s62 = sphi 0, %s61
      %s76 = sphi 0, %s62
      %s80 = sphi 0, %s80
      %s82 = sphi 0, %s80
      %s83 = sphi 0, %s82
      %s97 = sphi 0, %s83
      %s101 = sphi 0, %s101
      %s103 = sphi 0, %s101
      %s104 = sphi 0, %s103
      %s118 = sphi 0, %s104
      %s122 = sphi 0, %s122
      %s124 = sphi 0, %s122
      %s125 = sphi 0, %s124
      %s139 = sphi 0, %s125
      %s143 = sphi 0, %s143
      %s145 = sphi 0, %s143
      %s146 = sphi 0, %s145
      %s160 = sphi 0, %s146
      %s164 = sphi 0, %s164
      %s166 = sphi 0, %s164
      %s167 = sphi 0, %s166
      %s181 = sphi 0, %s167
      %s185 = sphi 0, %s185
      %s187 = sphi 0, %s185
      %s188 = sphi 0, %s187
      %s202 = sphi 0, %s188
      %s206 = sphi 0, %s206
      %s208 = sphi 0, %s206
      %s209 = sphi 0, %s208
      %s223 = sphi 0, %s209
      %s227 = sphi 0, %s227
      %s229 = sphi 0, %s227
      %s230 = sphi 0, %s229
      %s244 = sphi 0, %s230
      %s248 = sphi 0, %s248
      %s250 = sphi 0, %s248
      %s251 = sphi 0, %s250
      %s265 = sphi 0, %s251
      %s271 = sphi 0, %s273
      %s274 = sphi 0, %s271
      %s275 = sphi 0, %s274
      %s291 = sphi 0, %s275
    $region4: #{tpu_custom_call.1} parent=1 // loop_header_branch
      %28 = sbr.rel (%p26) target = $region8
    $region5: #{tpu_custom_call.1} parent=1 // loop_body
      %s30 = ssub.s32 %s25, 1
      %s31 = ssub.s32 %s25, 2
      %s32 = sadd.s32 %s25, 1
      %s33 = ssub.s32 %s25, %s32
      %p34 = scmp.eq.s32.totalorder %s33, 0
      %s36 = sadd.s32 %s35, 1
      %s37 = scalar_select %p34, %s35, %s36
      %p40 = pneg %p34
      %p41 = scmp.eq.s32.totalorder %s25, 1
      %p42 = por %p40, %p41
      %p43 = scmp.ne.s32.totalorder %s35, %s38
      %p44 = scmp.eq.s32.totalorder %s25, 0
      %p45 = por %p43, %p44
      %p46 = scmp.ne.s32.totalorder %s35, %s38
      %p47 = scmp.eq.s32.totalorder %s30, 1
      %p48 = por %p46, %p47
      %p49 = scmp.ne.s32.totalorder %s38, %s39
      %p50 = scmp.eq.s32.totalorder %s30, 0
      %p51 = por %p49, %p50
      %p52 = scmp.ne.s32.totalorder %s38, %s39
      %p53 = scmp.eq.s32.totalorder %s31, 1
      %p54 = por %p52, %p53
      %p56 = scmp.ne.s32.totalorder %s39, %s55
      %p57 = scmp.eq.s32.totalorder %s31, 0
      %p58 = por %p56, %p57
      %s60 = sadd.s32 %s59, 1
      %p63 = scmp.eq.s32.totalorder %s25, 1
      %p64 = scmp.ne.s32.totalorder %s59, %s61
      %p65 = scmp.eq.s32.totalorder %s25, 0
      %p66 = por %p64, %p65
      %p67 = scmp.ne.s32.totalorder %s59, %s61
      %p68 = scmp.eq.s32.totalorder %s30, 1
      %p69 = por %p67, %p68
      %p70 = scmp.ne.s32.totalorder %s61, %s62
      %p71 = scmp.eq.s32.totalorder %s30, 0
      %p72 = por %p70, %p71
      %p73 = scmp.ne.s32.totalorder %s61, %s62
      %p74 = scmp.eq.s32.totalorder %s31, 1
      %p75 = por %p73, %p74
      %p77 = scmp.ne.s32.totalorder %s62, %s76
      %p78 = scmp.eq.s32.totalorder %s31, 0
      %p79 = por %p77, %p78
      %s81 = sadd.s32 %s80, 1
      %p84 = scmp.eq.s32.totalorder %s25, 1
      %p85 = scmp.ne.s32.totalorder %s80, %s82
      %p86 = scmp.eq.s32.totalorder %s25, 0
      %p87 = por %p85, %p86
      %p88 = scmp.ne.s32.totalorder %s80, %s82
      %p89 = scmp.eq.s32.totalorder %s30, 1
      %p90 = por %p88, %p89
      %p91 = scmp.ne.s32.totalorder %s82, %s83
      %p92 = scmp.eq.s32.totalorder %s30, 0
      %p93 = por %p91, %p92
      %p94 = scmp.ne.s32.totalorder %s82, %s83
      %p95 = scmp.eq.s32.totalorder %s31, 1
      %p96 = por %p94, %p95
      %p98 = scmp.ne.s32.totalorder %s83, %s97
      %p99 = scmp.eq.s32.totalorder %s31, 0
      %p100 = por %p98, %p99
      %s102 = sadd.s32 %s101, 1
      %p105 = scmp.eq.s32.totalorder %s25, 1
      %p106 = scmp.ne.s32.totalorder %s101, %s103
      %p107 = scmp.eq.s32.totalorder %s25, 0
      %p108 = por %p106, %p107
      %p109 = scmp.ne.s32.totalorder %s101, %s103
      %p110 = scmp.eq.s32.totalorder %s30, 1
      %p111 = por %p109, %p110
      %p112 = scmp.ne.s32.totalorder %s103, %s104
      %p113 = scmp.eq.s32.totalorder %s30, 0
      %p114 = por %p112, %p113
      %p115 = scmp.ne.s32.totalorder %s103, %s104
      %p116 = scmp.eq.s32.totalorder %s31, 1
      %p117 = por %p115, %p116
      %p119 = scmp.ne.s32.totalorder %s104, %s118
      %p120 = scmp.eq.s32.totalorder %s31, 0
      %p121 = por %p119, %p120
      %s123 = sadd.s32 %s122, 1
      %p126 = scmp.eq.s32.totalorder %s25, 1
      %p127 = scmp.ne.s32.totalorder %s122, %s124
      %p128 = scmp.eq.s32.totalorder %s25, 0
      %p129 = por %p127, %p128
      %p130 = scmp.ne.s32.totalorder %s122, %s124
      %p131 = scmp.eq.s32.totalorder %s30, 1
      %p132 = por %p130, %p131
      %p133 = scmp.ne.s32.totalorder %s124, %s125
      %p134 = scmp.eq.s32.totalorder %s30, 0
      %p135 = por %p133, %p134
      %p136 = scmp.ne.s32.totalorder %s124, %s125
      %p137 = scmp.eq.s32.totalorder %s31, 1
      %p138 = por %p136, %p137
      %p140 = scmp.ne.s32.totalorder %s125, %s139
      %p141 = scmp.eq.s32.totalorder %s31, 0
      %p142 = por %p140, %p141
      %s144 = sadd.s32 %s143, 1
      %p147 = scmp.eq.s32.totalorder %s25, 1
      %p148 = scmp.ne.s32.totalorder %s143, %s145
      %p149 = scmp.eq.s32.totalorder %s25, 0
      %p150 = por %p148, %p149
      %p151 = scmp.ne.s32.totalorder %s143, %s145
      %p152 = scmp.eq.s32.totalorder %s30, 1
      %p153 = por %p151, %p152
      %p154 = scmp.ne.s32.totalorder %s145, %s146
      %p155 = scmp.eq.s32.totalorder %s30, 0
      %p156 = por %p154, %p155
      %p157 = scmp.ne.s32.totalorder %s145, %s146
      %p158 = scmp.eq.s32.totalorder %s31, 1
      %p159 = por %p157, %p158
      %p161 = scmp.ne.s32.totalorder %s146, %s160
      %p162 = scmp.eq.s32.totalorder %s31, 0
      %p163 = por %p161, %p162
      %s165 = sadd.s32 %s164, 1
      %p168 = scmp.eq.s32.totalorder %s25, 1
      %p169 = scmp.ne.s32.totalorder %s164, %s166
      %p170 = scmp.eq.s32.totalorder %s25, 0
      %p171 = por %p169, %p170
      %p172 = scmp.ne.s32.totalorder %s164, %s166
      %p173 = scmp.eq.s32.totalorder %s30, 1
      %p174 = por %p172, %p173
      %p175 = scmp.ne.s32.totalorder %s166, %s167
      %p176 = scmp.eq.s32.totalorder %s30, 0
      %p177 = por %p175, %p176
      %p178 = scmp.ne.s32.totalorder %s166, %s167
      %p179 = scmp.eq.s32.totalorder %s31, 1
      %p180 = por %p178, %p179
      %p182 = scmp.ne.s32.totalorder %s167, %s181
      %p183 = scmp.eq.s32.totalorder %s31, 0
      %p184 = por %p182, %p183
      %s186 = sadd.s32 %s185, 1
      %p189 = scmp.eq.s32.totalorder %s25, 1
      %p190 = scmp.ne.s32.totalorder %s185, %s187
      %p191 = scmp.eq.s32.totalorder %s25, 0
      %p192 = por %p190, %p191
      %p193 = scmp.ne.s32.totalorder %s185, %s187
      %p194 = scmp.eq.s32.totalorder %s30, 1
      %p195 = por %p193, %p194
      %p196 = scmp.ne.s32.totalorder %s187, %s188
      %p197 = scmp.eq.s32.totalorder %s30, 0
      %p198 = por %p196, %p197
      %p199 = scmp.ne.s32.totalorder %s187, %s188
      %p200 = scmp.eq.s32.totalorder %s31, 1
      %p201 = por %p199, %p200
      %p203 = scmp.ne.s32.totalorder %s188, %s202
      %p204 = scmp.eq.s32.totalorder %s31, 0
      %p205 = por %p203, %p204
      %s207 = sadd.s32 %s206, 1
      %p210 = scmp.eq.s32.totalorder %s25, 1
      %p211 = scmp.ne.s32.totalorder %s206, %s208
      %p212 = scmp.eq.s32.totalorder %s25, 0
      %p213 = por %p211, %p212
      %p214 = scmp.ne.s32.totalorder %s206, %s208
      %p215 = scmp.eq.s32.totalorder %s30, 1
      %p216 = por %p214, %p215
      %p217 = scmp.ne.s32.totalorder %s208, %s209
      %p218 = scmp.eq.s32.totalorder %s30, 0
      %p219 = por %p217, %p218
      %p220 = scmp.ne.s32.totalorder %s208, %s209
      %p221 = scmp.eq.s32.totalorder %s31, 1
      %p222 = por %p220, %p221
      %p224 = scmp.ne.s32.totalorder %s209, %s223
      %p225 = scmp.eq.s32.totalorder %s31, 0
      %p226 = por %p224, %p225
      %s228 = sadd.s32 %s227, 1
      %p231 = scmp.eq.s32.totalorder %s25, 1
      %p232 = scmp.ne.s32.totalorder %s227, %s229
      %p233 = scmp.eq.s32.totalorder %s25, 0
      %p234 = por %p232, %p233
      %p235 = scmp.ne.s32.totalorder %s227, %s229
      %p236 = scmp.eq.s32.totalorder %s30, 1
      %p237 = por %p235, %p236
      %p238 = scmp.ne.s32.totalorder %s229, %s230
      %p239 = scmp.eq.s32.totalorder %s30, 0
      %p240 = por %p238, %p239
      %p241 = scmp.ne.s32.totalorder %s229, %s230
      %p242 = scmp.eq.s32.totalorder %s31, 1
      %p243 = por %p241, %p242
      %p245 = scmp.ne.s32.totalorder %s230, %s244
      %p246 = scmp.eq.s32.totalorder %s31, 0
      %p247 = por %p245, %p246
      %s249 = sadd.s32 %s248, 1
      %p252 = scmp.eq.s32.totalorder %s25, 1
      %p253 = scmp.ne.s32.totalorder %s248, %s250
      %p254 = scmp.eq.s32.totalorder %s25, 0
      %p255 = por %p253, %p254
      %p256 = scmp.ne.s32.totalorder %s248, %s250
      %p257 = scmp.eq.s32.totalorder %s30, 1
      %p258 = por %p256, %p257
      %p259 = scmp.ne.s32.totalorder %s250, %s251
      %p260 = scmp.eq.s32.totalorder %s30, 0
      %p261 = por %p259, %p260
      %p262 = scmp.ne.s32.totalorder %s250, %s251
      %p263 = scmp.eq.s32.totalorder %s31, 1
      %p264 = por %p262, %p263
      %p266 = scmp.ne.s32.totalorder %s251, %s265
      %p267 = scmp.eq.s32.totalorder %s31, 0
      %p268 = por %p266, %p267
      %s269 = ssub.s32 %s25, %s32
      %p270 = scmp.eq.s32.totalorder %s269, 0
      %s272 = sadd.s32 %s271, 1
      %s273 = scalar_select %p270, %s271, %s272
      %p276 = pneg %p270
      %p277 = scmp.eq.s32.totalorder %s25, 1
      %p278 = por %p276, %p277
      %p279 = scmp.ne.s32.totalorder %s271, %s274
      %p280 = scmp.eq.s32.totalorder %s25, 0
      %p281 = por %p279, %p280
      %p282 = scmp.ne.s32.totalorder %s271, %s274
      %p283 = scmp.eq.s32.totalorder %s30, 1
      %p284 = por %p282, %p283
      %p285 = scmp.ne.s32.totalorder %s274, %s275
      %p286 = scmp.eq.s32.totalorder %s30, 0
      %p287 = por %p285, %p286
      %p288 = scmp.ne.s32.totalorder %s274, %s275
      %p289 = scmp.eq.s32.totalorder %s31, 1
      %p290 = por %p288, %p289
      %p292 = scmp.ne.s32.totalorder %s275, %s291
      %p293 = scmp.eq.s32.totalorder %s31, 0
      %p294 = por %p292, %p293
      %p295 = scmp.le.s32.totalorder 1, %s25
      %p296 = scmp.lt.s32.totalorder %s25, 3
      %p297 = pnand %p295, %p296
      %p298 = pneg %p297
      // Predicated region
      $region9: #{tpu_custom_call.1} parent=5 // pred_check
        _
      $region10: #{tpu_custom_call.1} parent=5 // pred_check_branch
        %300 = sbr.rel (%p297) target = $region12
      $region11: #{tpu_custom_call.1} parent=5 // pred_region
        %s301 = ssub.s32 %s25, 1
        // Predicated region
        $region13: #{tpu_custom_call.1} parent=11 // pred_check
          %p302 = pneg %p72
        $region14: #{tpu_custom_call.1} parent=11 // pred_check_branch
          %304 = sbr.rel (%p302) target = $region16
        $region15: #{tpu_custom_call.1} parent=11 // pred_region
          _
        $region16: #{tpu_custom_call.1} parent=11 // pred_fallthru
          _
        // Predicated region
        $region17: #{tpu_custom_call.1} parent=11 // pred_check
          %p305 = pneg %p93
        $region18: #{tpu_custom_call.1} parent=11 // pred_check_branch
          %307 = sbr.rel (%p305) target = $region20
        $region19: #{tpu_custom_call.1} parent=11 // pred_region
          _
        $region20: #{tpu_custom_call.1} parent=11 // pred_fallthru
          _
        // Predicated region
        $region21: #{tpu_custom_call.1} parent=11 // pred_check
          %p308 = pneg %p114
        $region22: #{tpu_custom_call.1} parent=11 // pred_check_branch
          %310 = sbr.rel (%p308) target = $region24
        $region23: #{tpu_custom_call.1} parent=11 // pred_region
          %s312 = ssub.s32 2048, 2048
          %313 = vsyncadd [#allocation6], %s312
          %s314 = sshll.u32 [#allocation5], 4
          %s315 = int_to_ptr.vmem [resolvable:$true] %s314
          %320 = dma.hbm_to_vmem [thread:$0]  %s3, 2048, %s315, [#allocation6], 128, 128, 8
        $region24: #{tpu_custom_call.1} parent=11 // pred_fallthru
          _
        // Predicated region
        $region25: #{tpu_custom_call.1} parent=11 // pred_check
          %p321 = pneg %p135
        $region26: #{tpu_custom_call.1} parent=11 // pred_check_branch
          %323 = sbr.rel (%p321) target = $region28
        $region27: #{tpu_custom_call.1} parent=11 // pred_region
          _
        $region28: #{tpu_custom_call.1} parent=11 // pred_fallthru
          _
        // Predicated region
        $region29: #{tpu_custom_call.1} parent=11 // pred_check
          %p324 = pneg %p156
        $region30: #{tpu_custom_call.1} parent=11 // pred_check_branch
          %326 = sbr.rel (%p324) target = $region32
        $region31: #{tpu_custom_call.1} parent=11 // pred_region
          _
        $region32: #{tpu_custom_call.1} parent=11 // pred_fallthru
          _
        // Predicated region
        $region33: #{tpu_custom_call.1} parent=11 // pred_check
          %p327 = pneg %p177
        $region34: #{tpu_custom_call.1} parent=11 // pred_check_branch
          %329 = sbr.rel (%p327) target = $region36
        $region35: #{tpu_custom_call.1} parent=11 // pred_region
          _
        $region36: #{tpu_custom_call.1} parent=11 // pred_fallthru
          _
        // Predicated region
        $region37: #{tpu_custom_call.1} parent=11 // pred_check
          %p330 = pneg %p198
        $region38: #{tpu_custom_call.1} parent=11 // pred_check_branch
          %332 = sbr.rel (%p330) target = $region40
        $region39: #{tpu_custom_call.1} parent=11 // pred_region
          %s334 = ssub.s32 2048, 2048
          %335 = vsyncadd [#allocation6], %s334
          %s336 = sshll.u32 [#allocation7], 4
          %s337 = int_to_ptr.vmem [resolvable:$true] %s336
          %342 = dma.hbm_to_vmem [thread:$0]  %s7, 2048, %s337, [#allocation6], 128, 128, 8
        $region40: #{tpu_custom_call.1} parent=11 // pred_fallthru
          _
        // Predicated region
        $region41: #{tpu_custom_call.1} parent=11 // pred_check
          %p343 = pneg %p219
        $region42: #{tpu_custom_call.1} parent=11 // pred_check_branch
          %345 = sbr.rel (%p343) target = $region44
        $region43: #{tpu_custom_call.1} parent=11 // pred_region
          _
        $region44: #{tpu_custom_call.1} parent=11 // pred_fallthru
          _
        // Predicated region
        $region45: #{tpu_custom_call.1} parent=11 // pred_check
          %p346 = pneg %p240
        $region46: #{tpu_custom_call.1} parent=11 // pred_check_branch
          %348 = sbr.rel (%p346) target = $region48
        $region47: #{tpu_custom_call.1} parent=11 // pred_region
          %s350 = ssub.s32 2048, 2048
          %351 = vsyncadd [#allocation9], %s350
          %s352 = sshll.u32 [#allocation8], 4
          %s353 = int_to_ptr.vmem [resolvable:$true] %s352
          %358 = dma.hbm_to_vmem [thread:$0]  %s9, 2048, %s353, [#allocation9], 128, 128, 8
        $region48: #{tpu_custom_call.1} parent=11 // pred_fallthru
          _
        // Predicated region
        $region49: #{tpu_custom_call.1} parent=11 // pred_check
          %p359 = pneg %p261
        $region50: #{tpu_custom_call.1} parent=11 // pred_check_branch
          %361 = sbr.rel (%p359) target = $region52
        $region51: #{tpu_custom_call.1} parent=11 // pred_region
          _
        $region52: #{tpu_custom_call.1} parent=11 // pred_fallthru
          _
      $region12: #{tpu_custom_call.1} parent=5 // pred_fallthru
        _
      %p362 = scmp.lt.s32.totalorder %s25, 2
      // Predicated region
      $region53: #{tpu_custom_call.1} parent=5 // pred_check
        %p363 = pneg %p362
      $region54: #{tpu_custom_call.1} parent=5 // pred_check_branch
        %365 = sbr.rel (%p363) target = $region56
      $region55: #{tpu_custom_call.1} parent=5 // pred_region
        // Predicated region
        $region57: #{tpu_custom_call.1} parent=55 // pred_check
          %p366 = pneg %p45
        $region58: #{tpu_custom_call.1} parent=55 // pred_check_branch
          %368 = sbr.rel (%p366) target = $region60
        $region59: #{tpu_custom_call.1} parent=55 // pred_region
          %s369 = sand.u32 %s35, 1
          %s370 = scalar_lea.sflag [#allocation3], %s369
          %s371 = sand.u32 %s35, 1
          %s372 = smul.addr %s371, 256
          %s373 = scalar_lea.vmem [#allocation2], %s372
          %s374 = smul.u32 32, %s25
          %s376 = ssub.s32 4096, 4096
          %377 = vsyncadd %s370, %s376
          %s378 = smul.addr %s374, 128
          %s379 = scalar_lea.hbm %s0, %s378
          %s380 = sshll.u32 %s373, 4
          %s381 = int_to_ptr.vmem [resolvable:$true] %s380
          %386 = dma.hbm_to_vmem [thread:$0]  %s379, 4096, %s381, %s370, 128, 128, 8
        $region60: #{tpu_custom_call.1} parent=55 // pred_fallthru
          _
      $region56: #{tpu_custom_call.1} parent=5 // pred_fallthru
        _
      %p387 = scmp.le.s32.totalorder 1, %s25
      %p388 = scmp.lt.s32.totalorder %s25, 3
      %p389 = pnand %p387, %p388
      %p390 = pneg %p389
      // Predicated region
      $region61: #{tpu_custom_call.1} parent=5 // pred_check
        _
      $region62: #{tpu_custom_call.1} parent=5 // pred_check_branch
        %392 = sbr.rel (%p389) target = $region64
      $region63: #{tpu_custom_call.1} parent=5 // pred_region
        %s393 = ssub.s32 %s25, 1
        %s394 = sand.u32 %s38, 1
        %s395 = scalar_lea.sflag [#allocation3], %s394
        %s396 = sand.u32 %s38, 1
        %s397 = smul.addr %s396, 256
        %s398 = scalar_lea.vmem [#allocation2], %s397
        // Predicated region
        $region65: #{tpu_custom_call.1} parent=63 // pred_check
          %p399 = pneg %p51
        $region66: #{tpu_custom_call.1} parent=63 // pred_check_branch
          %401 = sbr.rel (%p399) target = $region68
        $region67: #{tpu_custom_call.1} parent=63 // pred_region
          %402 = dma.done %s395, 4096
        $region68: #{tpu_custom_call.1} parent=63 // pred_fallthru
          _
        // Predicated region
        $region69: #{tpu_custom_call.1} parent=63 // pred_check
          %p403 = pneg %p114
        $region70: #{tpu_custom_call.1} parent=63 // pred_check_branch
          %405 = sbr.rel (%p403) target = $region72
        $region71: #{tpu_custom_call.1} parent=63 // pred_region
          %406 = dma.done [#allocation6], 2048
        $region72: #{tpu_custom_call.1} parent=63 // pred_fallthru
          _
        // Predicated region
        $region73: #{tpu_custom_call.1} parent=63 // pred_check
          %p407 = pneg %p198
        $region74: #{tpu_custom_call.1} parent=63 // pred_check_branch
          %409 = sbr.rel (%p407) target = $region76
        $region75: #{tpu_custom_call.1} parent=63 // pred_region
          %410 = dma.done [#allocation6], 2048
        $region76: #{tpu_custom_call.1} parent=63 // pred_fallthru
          _
        // Predicated region
        $region77: #{tpu_custom_call.1} parent=63 // pred_check
          %p411 = pneg %p240
        $region78: #{tpu_custom_call.1} parent=63 // pred_check_branch
          %413 = sbr.rel (%p411) target = $region80
        $region79: #{tpu_custom_call.1} parent=63 // pred_region
          %414 = dma.done [#allocation9], 2048
        $region80: #{tpu_custom_call.1} parent=63 // pred_fallthru
          _
        %s415 = sand.u32 %s38, 1
        %s416 = scalar_lea.sflag [#allocation3], %s415
        %s417 = sand.u32 %s38, 1
        %s418 = smul.addr %s417, 256
        %s419 = scalar_lea.vmem [#allocation2], %s418
        %p420 = pneg %p51
        %p421 = pneg %p48
        %p422 = pneg %p72
        %p423 = pneg %p69
        %p424 = pneg %p93
        %p425 = pneg %p90
        %p426 = pneg %p114
        %p427 = pneg %p111
        %p428 = pneg %p135
        %p429 = pneg %p132
        %p430 = pneg %p156
        %p431 = pneg %p153
        %p432 = pneg %p177
        %p433 = pneg %p174
        %p434 = pneg %p198
        %p435 = pneg %p195
        %p436 = pneg %p219
        %p437 = pneg %p216
        %p438 = pneg %p240
        %p439 = pneg %p237
        %p440 = pneg %p261
        %p441 = pneg %p258
        %p442 = pneg %p287
        %p443 = pneg %p284
        %s444 = sand.u32 %s274, 1
        %s445 = scalar_lea.sflag [#allocation4], %s444
        %s446 = sand.u32 %s274, 1
        %s447 = smul.addr %s446, 256
        %s448 = scalar_lea.vmem [#allocation10], %s447
        %s449 = smul.u32 32, %s30
        %s450 = smul.u32 32, %s30
        %v451 = vld [vmem:[%s398] sm:$0xff]
        %v452 = vld [vmem:[%s398 + $0x8] sm:$0xff]
        %v453 = vld [vmem:[%s398 + $0x10] sm:$0xff]
        %v454 = vld [vmem:[%s398 + $0x18] sm:$0xff]
        %v455 = vld [vmem:[%s398 + $0x20] sm:$0xff]
        %v456 = vld [vmem:[%s398 + $0x28] sm:$0xff]
        %v457 = vld [vmem:[%s398 + $0x30] sm:$0xff]
        %v458 = vld [vmem:[%s398 + $0x38] sm:$0xff]
        %v459 = vld [vmem:[%s398 + $0x40] sm:$0xff]
        %v460 = vld [vmem:[%s398 + $0x48] sm:$0xff]
        %v461 = vld [vmem:[%s398 + $0x50] sm:$0xff]
        %v462 = vld [vmem:[%s398 + $0x58] sm:$0xff]
        %v463 = vld [vmem:[%s398 + $0x60] sm:$0xff]
        %v464 = vld [vmem:[%s398 + $0x68] sm:$0xff]
        %v465 = vld [vmem:[%s398 + $0x70] sm:$0xff]
        %v466 = vld [vmem:[%s398 + $0x78] sm:$0xff]
        %v467 = vld [vmem:[%s398 + $0x80] sm:$0xff]
        %v468 = vld [vmem:[%s398 + $0x88] sm:$0xff]
        %v469 = vld [vmem:[%s398 + $0x90] sm:$0xff]
        %v470 = vld [vmem:[%s398 + $0x98] sm:$0xff]
        %v471 = vld [vmem:[%s398 + $0xa0] sm:$0xff]
        %v472 = vld [vmem:[%s398 + $0xa8] sm:$0xff]
        %v473 = vld [vmem:[%s398 + $0xb0] sm:$0xff]
        %v474 = vld [vmem:[%s398 + $0xb8] sm:$0xff]
        %v475 = vld [vmem:[%s398 + $0xc0] sm:$0xff]
        %v476 = vld [vmem:[%s398 + $0xc8] sm:$0xff]
        %v477 = vld [vmem:[%s398 + $0xd0] sm:$0xff]
        %v478 = vld [vmem:[%s398 + $0xd8] sm:$0xff]
        %v479 = vld [vmem:[%s398 + $0xe0] sm:$0xff]
        %v480 = vld [vmem:[%s398 + $0xe8] sm:$0xff]
        %v481 = vld [vmem:[%s398 + $0xf0] sm:$0xff]
        %v482 = vld [vmem:[%s398 + $0xf8] sm:$0xff]
        %v483 = vrot.slane %v451, 4
        %v484 = vmax.f32 %v451, %v483
        %v485 = vrot.slane %v484, 2
        %v486 = vmax.f32 %v484, %v485
        %v487 = vrot.slane %v486, 1
        %v488 = vmax.f32 %v486, %v487
        %v489 = vrot.slane %v452, 4
        %v490 = vmax.f32 %v452, %v489
        %v491 = vrot.slane %v490, 2
        %v492 = vmax.f32 %v490, %v491
        %v493 = vrot.slane %v492, 1
        %v494 = vmax.f32 %v492, %v493
        %v495 = vrot.slane %v453, 4
        %v496 = vmax.f32 %v453, %v495
        %v497 = vrot.slane %v496, 2
        %v498 = vmax.f32 %v496, %v497
        %v499 = vrot.slane %v498, 1
        %v500 = vmax.f32 %v498, %v499
        %v501 = vrot.slane %v454, 4
        %v502 = vmax.f32 %v454, %v501
        %v503 = vrot.slane %v502, 2
        %v504 = vmax.f32 %v502, %v503
        %v505 = vrot.slane %v504, 1
        %v506 = vmax.f32 %v504, %v505
        %v507 = vrot.slane %v455, 4
        %v508 = vmax.f32 %v455, %v507
        %v509 = vrot.slane %v508, 2
        %v510 = vmax.f32 %v508, %v509
        %v511 = vrot.slane %v510, 1
        %v512 = vmax.f32 %v510, %v511
        %v513 = vrot.slane %v456, 4
        %v514 = vmax.f32 %v456, %v513
        %v515 = vrot.slane %v514, 2
        %v516 = vmax.f32 %v514, %v515
        %v517 = vrot.slane %v516, 1
        %v518 = vmax.f32 %v516, %v517
        %v519 = vrot.slane %v457, 4
        %v520 = vmax.f32 %v457, %v519
        %v521 = vrot.slane %v520, 2
        %v522 = vmax.f32 %v520, %v521
        %v523 = vrot.slane %v522, 1
        %v524 = vmax.f32 %v522, %v523
        %v525 = vrot.slane %v458, 4
        %v526 = vmax.f32 %v458, %v525
        %v527 = vrot.slane %v526, 2
        %v528 = vmax.f32 %v526, %v527
        %v529 = vrot.slane %v528, 1
        %v530 = vmax.f32 %v528, %v529
        %v531 = vrot.slane %v459, 4
        %v532 = vmax.f32 %v459, %v531
        %v533 = vrot.slane %v532, 2
        %v534 = vmax.f32 %v532, %v533
        %v535 = vrot.slane %v534, 1
        %v536 = vmax.f32 %v534, %v535
        %v537 = vrot.slane %v460, 4
        %v538 = vmax.f32 %v460, %v537
        %v539 = vrot.slane %v538, 2
        %v540 = vmax.f32 %v538, %v539
        %v541 = vrot.slane %v540, 1
        %v542 = vmax.f32 %v540, %v541
        %v543 = vrot.slane %v461, 4
        %v544 = vmax.f32 %v461, %v543
        %v545 = vrot.slane %v544, 2
        %v546 = vmax.f32 %v544, %v545
        %v547 = vrot.slane %v546, 1
        %v548 = vmax.f32 %v546, %v547
        %v549 = vrot.slane %v462, 4
        %v550 = vmax.f32 %v462, %v549
        %v551 = vrot.slane %v550, 2
        %v552 = vmax.f32 %v550, %v551
        %v553 = vrot.slane %v552, 1
        %v554 = vmax.f32 %v552, %v553
        %v555 = vrot.slane %v463, 4
        %v556 = vmax.f32 %v463, %v555
        %v557 = vrot.slane %v556, 2
        %v558 = vmax.f32 %v556, %v557
        %v559 = vrot.slane %v558, 1
        %v560 = vmax.f32 %v558, %v559
        %v561 = vrot.slane %v464, 4
        %v562 = vmax.f32 %v464, %v561
        %v563 = vrot.slane %v562, 2
        %v564 = vmax.f32 %v562, %v563
        %v565 = vrot.slane %v564, 1
        %v566 = vmax.f32 %v564, %v565
        %v567 = vrot.slane %v465, 4
        %v568 = vmax.f32 %v465, %v567
        %v569 = vrot.slane %v568, 2
        %v570 = vmax.f32 %v568, %v569
        %v571 = vrot.slane %v570, 1
        %v572 = vmax.f32 %v570, %v571
        %v573 = vrot.slane %v466, 4
        %v574 = vmax.f32 %v466, %v573
        %v575 = vrot.slane %v574, 2
        %v576 = vmax.f32 %v574, %v575
        %v577 = vrot.slane %v576, 1
        %v578 = vmax.f32 %v576, %v577
        %v579 = vrot.slane %v467, 4
        %v580 = vmax.f32 %v467, %v579
        %v581 = vrot.slane %v580, 2
        %v582 = vmax.f32 %v580, %v581
        %v583 = vrot.slane %v582, 1
        %v584 = vmax.f32 %v582, %v583
        %v585 = vrot.slane %v468, 4
        %v586 = vmax.f32 %v468, %v585
        %v587 = vrot.slane %v586, 2
        %v588 = vmax.f32 %v586, %v587
        %v589 = vrot.slane %v588, 1
        %v590 = vmax.f32 %v588, %v589
        %v591 = vrot.slane %v469, 4
        %v592 = vmax.f32 %v469, %v591
        %v593 = vrot.slane %v592, 2
        %v594 = vmax.f32 %v592, %v593
        %v595 = vrot.slane %v594, 1
        %v596 = vmax.f32 %v594, %v595
        %v597 = vrot.slane %v470, 4
        %v598 = vmax.f32 %v470, %v597
        %v599 = vrot.slane %v598, 2
        %v600 = vmax.f32 %v598, %v599
        %v601 = vrot.slane %v600, 1
        %v602 = vmax.f32 %v600, %v601
        %v603 = vrot.slane %v471, 4
        %v604 = vmax.f32 %v471, %v603
        %v605 = vrot.slane %v604, 2
        %v606 = vmax.f32 %v604, %v605
        %v607 = vrot.slane %v606, 1
        %v608 = vmax.f32 %v606, %v607
        %v609 = vrot.slane %v472, 4
        %v610 = vmax.f32 %v472, %v609
        %v611 = vrot.slane %v610, 2
        %v612 = vmax.f32 %v610, %v611
        %v613 = vrot.slane %v612, 1
        %v614 = vmax.f32 %v612, %v613
        %v615 = vrot.slane %v473, 4
        %v616 = vmax.f32 %v473, %v615
        %v617 = vrot.slane %v616, 2
        %v618 = vmax.f32 %v616, %v617
        %v619 = vrot.slane %v618, 1
        %v620 = vmax.f32 %v618, %v619
        %v621 = vrot.slane %v474, 4
        %v622 = vmax.f32 %v474, %v621
        %v623 = vrot.slane %v622, 2
        %v624 = vmax.f32 %v622, %v623
        %v625 = vrot.slane %v624, 1
        %v626 = vmax.f32 %v624, %v625
        %v627 = vrot.slane %v475, 4
        %v628 = vmax.f32 %v475, %v627
        %v629 = vrot.slane %v628, 2
        %v630 = vmax.f32 %v628, %v629
        %v631 = vrot.slane %v630, 1
        %v632 = vmax.f32 %v630, %v631
        %v633 = vrot.slane %v476, 4
        %v634 = vmax.f32 %v476, %v633
        %v635 = vrot.slane %v634, 2
        %v636 = vmax.f32 %v634, %v635
        %v637 = vrot.slane %v636, 1
        %v638 = vmax.f32 %v636, %v637
        %v639 = vrot.slane %v477, 4
        %v640 = vmax.f32 %v477, %v639
        %v641 = vrot.slane %v640, 2
        %v642 = vmax.f32 %v640, %v641
        %v643 = vrot.slane %v642, 1
        %v644 = vmax.f32 %v642, %v643
        %v645 = vrot.slane %v478, 4
        %v646 = vmax.f32 %v478, %v645
        %v647 = vrot.slane %v646, 2
        %v648 = vmax.f32 %v646, %v647
        %v649 = vrot.slane %v648, 1
        %v650 = vmax.f32 %v648, %v649
        %v651 = vrot.slane %v479, 4
        %v652 = vmax.f32 %v479, %v651
        %v653 = vrot.slane %v652, 2
        %v654 = vmax.f32 %v652, %v653
        %v655 = vrot.slane %v654, 1
        %v656 = vmax.f32 %v654, %v655
        %v657 = vrot.slane %v480, 4
        %v658 = vmax.f32 %v480, %v657
        %v659 = vrot.slane %v658, 2
        %v660 = vmax.f32 %v658, %v659
        %v661 = vrot.slane %v660, 1
        %v662 = vmax.f32 %v660, %v661
        %v663 = vrot.slane %v481, 4
        %v664 = vmax.f32 %v481, %v663
        %v665 = vrot.slane %v664, 2
        %v666 = vmax.f32 %v664, %v665
        %v667 = vrot.slane %v666, 1
        %v668 = vmax.f32 %v666, %v667
        %v669 = vrot.slane %v482, 4
        %v670 = vmax.f32 %v482, %v669
        %v671 = vrot.slane %v670, 2
        %v672 = vmax.f32 %v670, %v671
        %v673 = vrot.slane %v672, 1
        %v674 = vmax.f32 %v672, %v673
        %v675 = vxor.u32 %v451, 2147483648
        %v676 = vxor.u32 %v452, 2147483648
        %v677 = vxor.u32 %v453, 2147483648
        %v678 = vxor.u32 %v454, 2147483648
        %v679 = vxor.u32 %v455, 2147483648
        %v680 = vxor.u32 %v456, 2147483648
        %v681 = vxor.u32 %v457, 2147483648
        %v682 = vxor.u32 %v458, 2147483648
        %v683 = vxor.u32 %v459, 2147483648
        %v684 = vxor.u32 %v460, 2147483648
        %v685 = vxor.u32 %v461, 2147483648
        %v686 = vxor.u32 %v462, 2147483648
        %v687 = vxor.u32 %v463, 2147483648
        %v688 = vxor.u32 %v464, 2147483648
        %v689 = vxor.u32 %v465, 2147483648
        %v690 = vxor.u32 %v466, 2147483648
        %v691 = vxor.u32 %v467, 2147483648
        %v692 = vxor.u32 %v468, 2147483648
        %v693 = vxor.u32 %v469, 2147483648
        %v694 = vxor.u32 %v470, 2147483648
        %v695 = vxor.u32 %v471, 2147483648
        %v696 = vxor.u32 %v472, 2147483648
        %v697 = vxor.u32 %v473, 2147483648
        %v698 = vxor.u32 %v474, 2147483648
        %v699 = vxor.u32 %v475, 2147483648
        %v700 = vxor.u32 %v476, 2147483648
        %v701 = vxor.u32 %v477, 2147483648
        %v702 = vxor.u32 %v478, 2147483648
        %v703 = vxor.u32 %v479, 2147483648
        %v704 = vxor.u32 %v480, 2147483648
        %v705 = vxor.u32 %v481, 2147483648
        %v706 = vxor.u32 %v482, 2147483648
        %v707 = vmul.f32 %v675, 1.442695
        %v708 = vpow.pop %v707
        %v709 = vmul.f32 %v676, 1.442695
        %v710 = vpow.pop %v709
        %v711 = vmul.f32 %v677, 1.442695
        %v712 = vpow.pop %v711
        %v713 = vmul.f32 %v678, 1.442695
        %v714 = vpow.pop %v713
        %v715 = vmul.f32 %v679, 1.442695
        %v716 = vpow.pop %v715
        %v717 = vmul.f32 %v680, 1.442695
        %v718 = vpow.pop %v717
        %v719 = vmul.f32 %v681, 1.442695
        %v720 = vpow.pop %v719
        %v721 = vmul.f32 %v682, 1.442695
        %v722 = vpow.pop %v721
        %v723 = vmul.f32 %v683, 1.442695
        %v724 = vpow.pop %v723
        %v725 = vmul.f32 %v684, 1.442695
        %v726 = vpow.pop %v725
        %v727 = vmul.f32 %v685, 1.442695
        %v728 = vpow.pop %v727
        %v729 = vmul.f32 %v686, 1.442695
        %v730 = vpow.pop %v729
        %v731 = vmul.f32 %v687, 1.442695
        %v732 = vpow.pop %v731
        %v733 = vmul.f32 %v688, 1.442695
        %v734 = vpow.pop %v733
        %v735 = vmul.f32 %v689, 1.442695
        %v736 = vpow.pop %v735
        %v737 = vmul.f32 %v690, 1.442695
        %v738 = vpow.pop %v737
        %v739 = vmul.f32 %v691, 1.442695
        %v740 = vpow.pop %v739
        %v741 = vmul.f32 %v692, 1.442695
        %v742 = vpow.pop %v741
        %v743 = vmul.f32 %v693, 1.442695
        %v744 = vpow.pop %v743
        %v745 = vmul.f32 %v694, 1.442695
        %v746 = vpow.pop %v745
        %v747 = vmul.f32 %v695, 1.442695
        %v748 = vpow.pop %v747
        %v749 = vmul.f32 %v696, 1.442695
        %v750 = vpow.pop %v749
        %v751 = vmul.f32 %v697, 1.442695
        %v752 = vpow.pop %v751
        %v753 = vmul.f32 %v698, 1.442695
        %v754 = vpow.pop %v753
        %v755 = vmul.f32 %v699, 1.442695
        %v756 = vpow.pop %v755
        %v757 = vmul.f32 %v700, 1.442695
        %v758 = vpow.pop %v757
        %v759 = vmul.f32 %v701, 1.442695
        %v760 = vpow.pop %v759
        %v761 = vmul.f32 %v702, 1.442695
        %v762 = vpow.pop %v761
        %v763 = vmul.f32 %v703, 1.442695
        %v764 = vpow.pop %v763
        %v765 = vmul.f32 %v704, 1.442695
        %v766 = vpow.pop %v765
        %v767 = vmul.f32 %v705, 1.442695
        %v768 = vpow.pop %v767
        %v769 = vmul.f32 %v706, 1.442695
        %v770 = vpow.pop %v769
        %v771 = vadd.f32 %v708, 1.0
        %v772 = vadd.f32 %v710, 1.0
        %v773 = vadd.f32 %v712, 1.0
        %v774 = vadd.f32 %v714, 1.0
        %v775 = vadd.f32 %v716, 1.0
        %v776 = vadd.f32 %v718, 1.0
        %v777 = vadd.f32 %v720, 1.0
        %v778 = vadd.f32 %v722, 1.0
        %v779 = vadd.f32 %v724, 1.0
        %v780 = vadd.f32 %v726, 1.0
        %v781 = vadd.f32 %v728, 1.0
        %v782 = vadd.f32 %v730, 1.0
        %v783 = vadd.f32 %v732, 1.0
        %v784 = vadd.f32 %v734, 1.0
        %v785 = vadd.f32 %v736, 1.0
        %v786 = vadd.f32 %v738, 1.0
        %v787 = vadd.f32 %v740, 1.0
        %v788 = vadd.f32 %v742, 1.0
        %v789 = vadd.f32 %v744, 1.0
        %v790 = vadd.f32 %v746, 1.0
        %v791 = vadd.f32 %v748, 1.0
        %v792 = vadd.f32 %v750, 1.0
        %v793 = vadd.f32 %v752, 1.0
        %v794 = vadd.f32 %v754, 1.0
        %v795 = vadd.f32 %v756, 1.0
        %v796 = vadd.f32 %v758, 1.0
        %v797 = vadd.f32 %v760, 1.0
        %v798 = vadd.f32 %v762, 1.0
        %v799 = vadd.f32 %v764, 1.0
        %v800 = vadd.f32 %v766, 1.0
        %v801 = vadd.f32 %v768, 1.0
        %v802 = vadd.f32 %v770, 1.0
        %v803 = vrcp.pop %v771
        %v804 = vmul.f32 1.0, %v803
        %v805 = vrcp.pop %v772
        %v806 = vmul.f32 1.0, %v805
        %v807 = vrcp.pop %v773
        %v808 = vmul.f32 1.0, %v807
        %v809 = vrcp.pop %v774
        %v810 = vmul.f32 1.0, %v809
        %v811 = vrcp.pop %v775
        %v812 = vmul.f32 1.0, %v811
        %v813 = vrcp.pop %v776
        %v814 = vmul.f32 1.0, %v813
        %v815 = vrcp.pop %v777
        %v816 = vmul.f32 1.0, %v815
        %v817 = vrcp.pop %v778
        %v818 = vmul.f32 1.0, %v817
        %v819 = vrcp.pop %v779
        %v820 = vmul.f32 1.0, %v819
        %v821 = vrcp.pop %v780
        %v822 = vmul.f32 1.0, %v821
        %v823 = vrcp.pop %v781
        %v824 = vmul.f32 1.0, %v823
        %v825 = vrcp.pop %v782
        %v826 = vmul.f32 1.0, %v825
        %v827 = vrcp.pop %v783
        %v828 = vmul.f32 1.0, %v827
        %v829 = vrcp.pop %v784
        %v830 = vmul.f32 1.0, %v829
        %v831 = vrcp.pop %v785
        %v832 = vmul.f32 1.0, %v831
        %v833 = vrcp.pop %v786
        %v834 = vmul.f32 1.0, %v833
        %v835 = vrcp.pop %v787
        %v836 = vmul.f32 1.0, %v835
        %v837 = vrcp.pop %v788
        %v838 = vmul.f32 1.0, %v837
        %v839 = vrcp.pop %v789
        %v840 = vmul.f32 1.0, %v839
        %v841 = vrcp.pop %v790
        %v842 = vmul.f32 1.0, %v841
        %v843 = vrcp.pop %v791
        %v844 = vmul.f32 1.0, %v843
        %v845 = vrcp.pop %v792
        %v846 = vmul.f32 1.0, %v845
        %v847 = vrcp.pop %v793
        %v848 = vmul.f32 1.0, %v847
        %v849 = vrcp.pop %v794
        %v850 = vmul.f32 1.0, %v849
        %v851 = vrcp.pop %v795
        %v852 = vmul.f32 1.0, %v851
        %v853 = vrcp.pop %v796
        %v854 = vmul.f32 1.0, %v853
        %v855 = vrcp.pop %v797
        %v856 = vmul.f32 1.0, %v855
        %v857 = vrcp.pop %v798
        %v858 = vmul.f32 1.0, %v857
        %v859 = vrcp.pop %v799
        %v860 = vmul.f32 1.0, %v859
        %v861 = vrcp.pop %v800
        %v862 = vmul.f32 1.0, %v861
        %v863 = vrcp.pop %v801
        %v864 = vmul.f32 1.0, %v863
        %v865 = vrcp.pop %v802
        %v866 = vmul.f32 1.0, %v865
        %v867 = vmul.f32 %v451, %v804
        %v868 = vmul.f32 %v452, %v806
        %v869 = vmul.f32 %v453, %v808
        %v870 = vmul.f32 %v454, %v810
        %v871 = vmul.f32 %v455, %v812
        %v872 = vmul.f32 %v456, %v814
        %v873 = vmul.f32 %v457, %v816
        %v874 = vmul.f32 %v458, %v818
        %v875 = vmul.f32 %v459, %v820
        %v876 = vmul.f32 %v460, %v822
        %v877 = vmul.f32 %v461, %v824
        %v878 = vmul.f32 %v462, %v826
        %v879 = vmul.f32 %v463, %v828
        %v880 = vmul.f32 %v464, %v830
        %v881 = vmul.f32 %v465, %v832
        %v882 = vmul.f32 %v466, %v834
        %v883 = vmul.f32 %v467, %v836
        %v884 = vmul.f32 %v468, %v838
        %v885 = vmul.f32 %v469, %v840
        %v886 = vmul.f32 %v470, %v842
        %v887 = vmul.f32 %v471, %v844
        %v888 = vmul.f32 %v472, %v846
        %v889 = vmul.f32 %v473, %v848
        %v890 = vmul.f32 %v474, %v850
        %v891 = vmul.f32 %v475, %v852
        %v892 = vmul.f32 %v476, %v854
        %v893 = vmul.f32 %v477, %v856
        %v894 = vmul.f32 %v478, %v858
        %v895 = vmul.f32 %v479, %v860
        %v896 = vmul.f32 %v480, %v862
        %v897 = vmul.f32 %v481, %v864
        %v898 = vmul.f32 %v482, %v866
        %v899 = vld [vmem:[%s1] sm:$0x1]
        %v900 = vld [vmem:[%s2] sm:$0x1]
        %901 = vadd.xlane.f32.xlu0 %v867
        %v902 = vpop.xlane.xlu0 %901
        %903 = vadd.xlane.f32.xlu0 %v868
        %v904 = vpop.xlane.xlu0 %903
        %905 = vadd.xlane.f32.xlu0 %v869
        %v906 = vpop.xlane.xlu0 %905
        %907 = vadd.xlane.f32.xlu0 %v870
        %v908 = vpop.xlane.xlu0 %907
        %909 = vadd.xlane.f32.xlu0 %v871
        %v910 = vpop.xlane.xlu0 %909
        %911 = vadd.xlane.f32.xlu0 %v872
        %v912 = vpop.xlane.xlu0 %911
        %913 = vadd.xlane.f32.xlu0 %v873
        %v914 = vpop.xlane.xlu0 %913
        %915 = vadd.xlane.f32.xlu0 %v874
        %v916 = vpop.xlane.xlu0 %915
        %917 = vadd.xlane.f32.xlu0 %v875
        %v918 = vpop.xlane.xlu0 %917
        %919 = vadd.xlane.f32.xlu0 %v876
        %v920 = vpop.xlane.xlu0 %919
        %921 = vadd.xlane.f32.xlu0 %v877
        %v922 = vpop.xlane.xlu0 %921
        %923 = vadd.xlane.f32.xlu0 %v878
        %v924 = vpop.xlane.xlu0 %923
        %925 = vadd.xlane.f32.xlu0 %v879
        %v926 = vpop.xlane.xlu0 %925
        %927 = vadd.xlane.f32.xlu0 %v880
        %v928 = vpop.xlane.xlu0 %927
        %929 = vadd.xlane.f32.xlu0 %v881
        %v930 = vpop.xlane.xlu0 %929
        %931 = vadd.xlane.f32.xlu0 %v882
        %v932 = vpop.xlane.xlu0 %931
        %933 = vadd.xlane.f32.xlu0 %v883
        %v934 = vpop.xlane.xlu0 %933
        %935 = vadd.xlane.f32.xlu0 %v884
        %v936 = vpop.xlane.xlu0 %935
        %937 = vadd.xlane.f32.xlu0 %v885
        %v938 = vpop.xlane.xlu0 %937
        %939 = vadd.xlane.f32.xlu0 %v886
        %v940 = vpop.xlane.xlu0 %939
        %941 = vadd.xlane.f32.xlu0 %v887
        %v942 = vpop.xlane.xlu0 %941
        %943 = vadd.xlane.f32.xlu0 %v888
        %v944 = vpop.xlane.xlu0 %943
        %945 = vadd.xlane.f32.xlu0 %v889
        %v946 = vpop.xlane.xlu0 %945
        %947 = vadd.xlane.f32.xlu0 %v890
        %v948 = vpop.xlane.xlu0 %947
        %949 = vadd.xlane.f32.xlu0 %v891
        %v950 = vpop.xlane.xlu0 %949
        %951 = vadd.xlane.f32.xlu0 %v892
        %v952 = vpop.xlane.xlu0 %951
        %953 = vadd.xlane.f32.xlu0 %v893
        %v954 = vpop.xlane.xlu0 %953
        %955 = vadd.xlane.f32.xlu0 %v894
        %v956 = vpop.xlane.xlu0 %955
        %957 = vadd.xlane.f32.xlu0 %v895
        %v958 = vpop.xlane.xlu0 %957
        %959 = vadd.xlane.f32.xlu0 %v896
        %v960 = vpop.xlane.xlu0 %959
        %961 = vadd.xlane.f32.xlu0 %v897
        %v962 = vpop.xlane.xlu0 %961
        %963 = vadd.xlane.f32.xlu0 %v898
        %v964 = vpop.xlane.xlu0 %963
        %v965 = vrcp.pop 128.0
        %v966 = vmul.f32 %v902, %v965
        %v967 = vmul.f32 %v904, %v965
        %v968 = vmul.f32 %v906, %v965
        %v969 = vmul.f32 %v908, %v965
        %v970 = vmul.f32 %v910, %v965
        %v971 = vmul.f32 %v912, %v965
        %v972 = vmul.f32 %v914, %v965
        %v973 = vmul.f32 %v916, %v965
        %v974 = vmul.f32 %v918, %v965
        %v975 = vmul.f32 %v920, %v965
        %v976 = vmul.f32 %v922, %v965
        %v977 = vmul.f32 %v924, %v965
        %v978 = vmul.f32 %v926, %v965
        %v979 = vmul.f32 %v928, %v965
        %v980 = vmul.f32 %v930, %v965
        %v981 = vmul.f32 %v932, %v965
        %v982 = vmul.f32 %v934, %v965
        %v983 = vmul.f32 %v936, %v965
        %v984 = vmul.f32 %v938, %v965
        %v985 = vmul.f32 %v940, %v965
        %v986 = vmul.f32 %v942, %v965
        %v987 = vmul.f32 %v944, %v965
        %v988 = vmul.f32 %v946, %v965
        %v989 = vmul.f32 %v948, %v965
        %v990 = vmul.f32 %v950, %v965
        %v991 = vmul.f32 %v952, %v965
        %v992 = vmul.f32 %v954, %v965
        %v993 = vmul.f32 %v956, %v965
        %v994 = vmul.f32 %v958, %v965
        %v995 = vmul.f32 %v960, %v965
        %v996 = vmul.f32 %v962, %v965
        %v997 = vmul.f32 %v964, %v965
        %v998 = vsub.f32 %v867, %v966
        %v999 = vsub.f32 %v868, %v967
        %v1000 = vsub.f32 %v869, %v968
        %v1001 = vsub.f32 %v870, %v969
        %v1002 = vsub.f32 %v871, %v970
        %v1003 = vsub.f32 %v872, %v971
        %v1004 = vsub.f32 %v873, %v972
        %v1005 = vsub.f32 %v874, %v973
        %v1006 = vsub.f32 %v875, %v974
        %v1007 = vsub.f32 %v876, %v975
        %v1008 = vsub.f32 %v877, %v976
        %v1009 = vsub.f32 %v878, %v977
        %v1010 = vsub.f32 %v879, %v978
        %v1011 = vsub.f32 %v880, %v979
        %v1012 = vsub.f32 %v881, %v980
        %v1013 = vsub.f32 %v882, %v981
        %v1014 = vsub.f32 %v883, %v982
        %v1015 = vsub.f32 %v884, %v983
        %v1016 = vsub.f32 %v885, %v984
        %v1017 = vsub.f32 %v886, %v985
        %v1018 = vsub.f32 %v887, %v986
        %v1019 = vsub.f32 %v888, %v987
        %v1020 = vsub.f32 %v889, %v988
        %v1021 = vsub.f32 %v890, %v989
        %v1022 = vsub.f32 %v891, %v990
        %v1023 = vsub.f32 %v892, %v991
        %v1024 = vsub.f32 %v893, %v992
        %v1025 = vsub.f32 %v894, %v993
        %v1026 = vsub.f32 %v895, %v994
        %v1027 = vsub.f32 %v896, %v995
        %v1028 = vsub.f32 %v897, %v996
        %v1029 = vsub.f32 %v898, %v997
        %v1030 = vmul.f32 %v998, %v998
        %v1031 = vmul.f32 %v999, %v999
        %v1032 = vmul.f32 %v1000, %v1000
        %v1033 = vmul.f32 %v1001, %v1001
        %v1034 = vmul.f32 %v1002, %v1002
        %v1035 = vmul.f32 %v1003, %v1003
        %v1036 = vmul.f32 %v1004, %v1004
        %v1037 = vmul.f32 %v1005, %v1005
        %v1038 = vmul.f32 %v1006, %v1006
        %v1039 = vmul.f32 %v1007, %v1007
        %v1040 = vmul.f32 %v1008, %v1008
        %v1041 = vmul.f32 %v1009, %v1009
        %v1042 = vmul.f32 %v1010, %v1010
        %v1043 = vmul.f32 %v1011, %v1011
        %v1044 = vmul.f32 %v1012, %v1012
        %v1045 = vmul.f32 %v1013, %v1013
        %v1046 = vmul.f32 %v1014, %v1014
        %v1047 = vmul.f32 %v1015, %v1015
        %v1048 = vmul.f32 %v1016, %v1016
        %v1049 = vmul.f32 %v1017, %v1017
        %v1050 = vmul.f32 %v1018, %v1018
        %v1051 = vmul.f32 %v1019, %v1019
        %v1052 = vmul.f32 %v1020, %v1020
        %v1053 = vmul.f32 %v1021, %v1021
        %v1054 = vmul.f32 %v1022, %v1022
        %v1055 = vmul.f32 %v1023, %v1023
        %v1056 = vmul.f32 %v1024, %v1024
        %v1057 = vmul.f32 %v1025, %v1025
        %v1058 = vmul.f32 %v1026, %v1026
        %v1059 = vmul.f32 %v1027, %v1027
        %v1060 = vmul.f32 %v1028, %v1028
        %v1061 = vmul.f32 %v1029, %v1029
        %1062 = vadd.xlane.f32.xlu0 %v1030
        %v1063 = vpop.xlane.xlu0 %1062
        %1064 = vadd.xlane.f32.xlu0 %v1031
        %v1065 = vpop.xlane.xlu0 %1064
        %1066 = vadd.xlane.f32.xlu0 %v1032
        %v1067 = vpop.xlane.xlu0 %1066
        %1068 = vadd.xlane.f32.xlu0 %v1033
        %v1069 = vpop.xlane.xlu0 %1068
        %1070 = vadd.xlane.f32.xlu0 %v1034
        %v1071 = vpop.xlane.xlu0 %1070
        %1072 = vadd.xlane.f32.xlu0 %v1035
        %v1073 = vpop.xlane.xlu0 %1072
        %1074 = vadd.xlane.f32.xlu0 %v1036
        %v1075 = vpop.xlane.xlu0 %1074
        %1076 = vadd.xlane.f32.xlu0 %v1037
        %v1077 = vpop.xlane.xlu0 %1076
        %1078 = vadd.xlane.f32.xlu0 %v1038
        %v1079 = vpop.xlane.xlu0 %1078
        %1080 = vadd.xlane.f32.xlu0 %v1039
        %v1081 = vpop.xlane.xlu0 %1080
        %1082 = vadd.xlane.f32.xlu0 %v1040
        %v1083 = vpop.xlane.xlu0 %1082
        %1084 = vadd.xlane.f32.xlu0 %v1041
        %v1085 = vpop.xlane.xlu0 %1084
        %1086 = vadd.xlane.f32.xlu0 %v1042
        %v1087 = vpop.xlane.xlu0 %1086
        %1088 = vadd.xlane.f32.xlu0 %v1043
        %v1089 = vpop.xlane.xlu0 %1088
        %1090 = vadd.xlane.f32.xlu0 %v1044
        %v1091 = vpop.xlane.xlu0 %1090
        %1092 = vadd.xlane.f32.xlu0 %v1045
        %v1093 = vpop.xlane.xlu0 %1092
        %1094 = vadd.xlane.f32.xlu0 %v1046
        %v1095 = vpop.xlane.xlu0 %1094
        %1096 = vadd.xlane.f32.xlu0 %v1047
        %v1097 = vpop.xlane.xlu0 %1096
        %1098 = vadd.xlane.f32.xlu0 %v1048
        %v1099 = vpop.xlane.xlu0 %1098
        %1100 = vadd.xlane.f32.xlu0 %v1049
        %v1101 = vpop.xlane.xlu0 %1100
        %1102 = vadd.xlane.f32.xlu0 %v1050
        %v1103 = vpop.xlane.xlu0 %1102
        %1104 = vadd.xlane.f32.xlu0 %v1051
        %v1105 = vpop.xlane.xlu0 %1104
        %1106 = vadd.xlane.f32.xlu0 %v1052
        %v1107 = vpop.xlane.xlu0 %1106
        %1108 = vadd.xlane.f32.xlu0 %v1053
        %v1109 = vpop.xlane.xlu0 %1108
        %1110 = vadd.xlane.f32.xlu0 %v1054
        %v1111 = vpop.xlane.xlu0 %1110
        %1112 = vadd.xlane.f32.xlu0 %v1055
        %v1113 = vpop.xlane.xlu0 %1112
        %1114 = vadd.xlane.f32.xlu0 %v1056
        %v1115 = vpop.xlane.xlu0 %1114
        %1116 = vadd.xlane.f32.xlu0 %v1057
        %v1117 = vpop.xlane.xlu0 %1116
        %1118 = vadd.xlane.f32.xlu0 %v1058
        %v1119 = vpop.xlane.xlu0 %1118
        %1120 = vadd.xlane.f32.xlu0 %v1059
        %v1121 = vpop.xlane.xlu0 %1120
        %1122 = vadd.xlane.f32.xlu0 %v1060
        %v1123 = vpop.xlane.xlu0 %1122
        %1124 = vadd.xlane.f32.xlu0 %v1061
        %v1125 = vpop.xlane.xlu0 %1124
        %v1126 = vmul.f32 %v1063, %v965
        %v1127 = vmul.f32 %v1065, %v965
        %v1128 = vmul.f32 %v1067, %v965
        %v1129 = vmul.f32 %v1069, %v965
        %v1130 = vmul.f32 %v1071, %v965
        %v1131 = vmul.f32 %v1073, %v965
        %v1132 = vmul.f32 %v1075, %v965
        %v1133 = vmul.f32 %v1077, %v965
        %v1134 = vmul.f32 %v1079, %v965
        %v1135 = vmul.f32 %v1081, %v965
        %v1136 = vmul.f32 %v1083, %v965
        %v1137 = vmul.f32 %v1085, %v965
        %v1138 = vmul.f32 %v1087, %v965
        %v1139 = vmul.f32 %v1089, %v965
        %v1140 = vmul.f32 %v1091, %v965
        %v1141 = vmul.f32 %v1093, %v965
        %v1142 = vmul.f32 %v1095, %v965
        %v1143 = vmul.f32 %v1097, %v965
        %v1144 = vmul.f32 %v1099, %v965
        %v1145 = vmul.f32 %v1101, %v965
        %v1146 = vmul.f32 %v1103, %v965
        %v1147 = vmul.f32 %v1105, %v965
        %v1148 = vmul.f32 %v1107, %v965
        %v1149 = vmul.f32 %v1109, %v965
        %v1150 = vmul.f32 %v1111, %v965
        %v1151 = vmul.f32 %v1113, %v965
        %v1152 = vmul.f32 %v1115, %v965
        %v1153 = vmul.f32 %v1117, %v965
        %v1154 = vmul.f32 %v1119, %v965
        %v1155 = vmul.f32 %v1121, %v965
        %v1156 = vmul.f32 %v1123, %v965
        %v1157 = vmul.f32 %v1125, %v965
        %v1158 = vadd.f32 %v1126, 1e-05
        %v1159 = vadd.f32 %v1127, 1e-05
        %v1160 = vadd.f32 %v1128, 1e-05
        %v1161 = vadd.f32 %v1129, 1e-05
        %v1162 = vadd.f32 %v1130, 1e-05
        %v1163 = vadd.f32 %v1131, 1e-05
        %v1164 = vadd.f32 %v1132, 1e-05
        %v1165 = vadd.f32 %v1133, 1e-05
        %v1166 = vadd.f32 %v1134, 1e-05
        %v1167 = vadd.f32 %v1135, 1e-05
        %v1168 = vadd.f32 %v1136, 1e-05
        %v1169 = vadd.f32 %v1137, 1e-05
        %v1170 = vadd.f32 %v1138, 1e-05
        %v1171 = vadd.f32 %v1139, 1e-05
        %v1172 = vadd.f32 %v1140, 1e-05
        %v1173 = vadd.f32 %v1141, 1e-05
        %v1174 = vadd.f32 %v1142, 1e-05
        %v1175 = vadd.f32 %v1143, 1e-05
        %v1176 = vadd.f32 %v1144, 1e-05
        %v1177 = vadd.f32 %v1145, 1e-05
        %v1178 = vadd.f32 %v1146, 1e-05
        %v1179 = vadd.f32 %v1147, 1e-05
        %v1180 = vadd.f32 %v1148, 1e-05
        %v1181 = vadd.f32 %v1149, 1e-05
        %v1182 = vadd.f32 %v1150, 1e-05
        %v1183 = vadd.f32 %v1151, 1e-05
        %v1184 = vadd.f32 %v1152, 1e-05
        %v1185 = vadd.f32 %v1153, 1e-05
        %v1186 = vadd.f32 %v1154, 1e-05
        %v1187 = vadd.f32 %v1155, 1e-05
        %v1188 = vadd.f32 %v1156, 1e-05
        %v1189 = vadd.f32 %v1157, 1e-05
        %v1190 = vrsqrt.pop %v1158
        %v1191 = vrsqrt.pop %v1159
        %v1192 = vrsqrt.pop %v1160
        %v1193 = vrsqrt.pop %v1161
        %v1194 = vrsqrt.pop %v1162
        %v1195 = vrsqrt.pop %v1163
        %v1196 = vrsqrt.pop %v1164
        %v1197 = vrsqrt.pop %v1165
        %v1198 = vrsqrt.pop %v1166
        %v1199 = vrsqrt.pop %v1167
        %v1200 = vrsqrt.pop %v1168
        %v1201 = vrsqrt.pop %v1169
        %v1202 = vrsqrt.pop %v1170
        %v1203 = vrsqrt.pop %v1171
        %v1204 = vrsqrt.pop %v1172
        %v1205 = vrsqrt.pop %v1173
        %v1206 = vrsqrt.pop %v1174
        %v1207 = vrsqrt.pop %v1175
        %v1208 = vrsqrt.pop %v1176
        %v1209 = vrsqrt.pop %v1177
        %v1210 = vrsqrt.pop %v1178
        %v1211 = vrsqrt.pop %v1179
        %v1212 = vrsqrt.pop %v1180
        %v1213 = vrsqrt.pop %v1181
        %v1214 = vrsqrt.pop %v1182
        %v1215 = vrsqrt.pop %v1183
        %v1216 = vrsqrt.pop %v1184
        %v1217 = vrsqrt.pop %v1185
        %v1218 = vrsqrt.pop %v1186
        %v1219 = vrsqrt.pop %v1187
        %v1220 = vrsqrt.pop %v1188
        %v1221 = vrsqrt.pop %v1189
        %v1222 = vmul.f32 %v998, %v1190
        %v1223 = vmul.f32 %v999, %v1191
        %v1224 = vmul.f32 %v1000, %v1192
        %v1225 = vmul.f32 %v1001, %v1193
        %v1226 = vmul.f32 %v1002, %v1194
        %v1227 = vmul.f32 %v1003, %v1195
        %v1228 = vmul.f32 %v1004, %v1196
        %v1229 = vmul.f32 %v1005, %v1197
        %v1230 = vmul.f32 %v1006, %v1198
        %v1231 = vmul.f32 %v1007, %v1199
        %v1232 = vmul.f32 %v1008, %v1200
        %v1233 = vmul.f32 %v1009, %v1201
        %v1234 = vmul.f32 %v1010, %v1202
        %v1235 = vmul.f32 %v1011, %v1203
        %v1236 = vmul.f32 %v1012, %v1204
        %v1237 = vmul.f32 %v1013, %v1205
        %v1238 = vmul.f32 %v1014, %v1206
        %v1239 = vmul.f32 %v1015, %v1207
        %v1240 = vmul.f32 %v1016, %v1208
        %v1241 = vmul.f32 %v1017, %v1209
        %v1242 = vmul.f32 %v1018, %v1210
        %v1243 = vmul.f32 %v1019, %v1211
        %v1244 = vmul.f32 %v1020, %v1212
        %v1245 = vmul.f32 %v1021, %v1213
        %v1246 = vmul.f32 %v1022, %v1214
        %v1247 = vmul.f32 %v1023, %v1215
        %v1248 = vmul.f32 %v1024, %v1216
        %v1249 = vmul.f32 %v1025, %v1217
        %v1250 = vmul.f32 %v1026, %v1218
        %v1251 = vmul.f32 %v1027, %v1219
        %v1252 = vmul.f32 %v1028, %v1220
        %v1253 = vmul.f32 %v1029, %v1221
        %v1255 = vlaneseq
        %v1256 = vshrl.u32 %v1255, 7
        %v1257 = vsub.s32 0, %v1256
        %v1258 = vrot.slane %v899, %v1257
        %v1260 = vmul.f32 %v1222, %v1258
        %v1261 = vmul.f32 %v1223, %v1258
        %v1262 = vmul.f32 %v1224, %v1258
        %v1263 = vmul.f32 %v1225, %v1258
        %v1264 = vmul.f32 %v1226, %v1258
        %v1265 = vmul.f32 %v1227, %v1258
        %v1266 = vmul.f32 %v1228, %v1258
        %v1267 = vmul.f32 %v1229, %v1258
        %v1268 = vmul.f32 %v1230, %v1258
        %v1269 = vmul.f32 %v1231, %v1258
        %v1270 = vmul.f32 %v1232, %v1258
        %v1271 = vmul.f32 %v1233, %v1258
        %v1272 = vmul.f32 %v1234, %v1258
        %v1273 = vmul.f32 %v1235, %v1258
        %v1274 = vmul.f32 %v1236, %v1258
        %v1275 = vmul.f32 %v1237, %v1258
        %v1276 = vmul.f32 %v1238, %v1258
        %v1277 = vmul.f32 %v1239, %v1258
        %v1278 = vmul.f32 %v1240, %v1258
        %v1279 = vmul.f32 %v1241, %v1258
        %v1280 = vmul.f32 %v1242, %v1258
        %v1281 = vmul.f32 %v1243, %v1258
        %v1282 = vmul.f32 %v1244, %v1258
        %v1283 = vmul.f32 %v1245, %v1258
        %v1284 = vmul.f32 %v1246, %v1258
        %v1285 = vmul.f32 %v1247, %v1258
        %v1286 = vmul.f32 %v1248, %v1258
        %v1287 = vmul.f32 %v1249, %v1258
        %v1288 = vmul.f32 %v1250, %v1258
        %v1289 = vmul.f32 %v1251, %v1258
        %v1290 = vmul.f32 %v1252, %v1258
        %v1291 = vmul.f32 %v1253, %v1258
        %v1293 = vlaneseq
        %v1294 = vshrl.u32 %v1293, 7
        %v1295 = vsub.s32 0, %v1294
        %v1296 = vrot.slane %v900, %v1295
        %v1298 = vadd.f32 %v1260, %v1296
        %v1299 = vadd.f32 %v1261, %v1296
        %v1300 = vadd.f32 %v1262, %v1296
        %v1301 = vadd.f32 %v1263, %v1296
        %v1302 = vadd.f32 %v1264, %v1296
        %v1303 = vadd.f32 %v1265, %v1296
        %v1304 = vadd.f32 %v1266, %v1296
        %v1305 = vadd.f32 %v1267, %v1296
        %v1306 = vadd.f32 %v1268, %v1296
        %v1307 = vadd.f32 %v1269, %v1296
        %v1308 = vadd.f32 %v1270, %v1296
        %v1309 = vadd.f32 %v1271, %v1296
        %v1310 = vadd.f32 %v1272, %v1296
        %v1311 = vadd.f32 %v1273, %v1296
        %v1312 = vadd.f32 %v1274, %v1296
        %v1313 = vadd.f32 %v1275, %v1296
        %v1314 = vadd.f32 %v1276, %v1296
        %v1315 = vadd.f32 %v1277, %v1296
        %v1316 = vadd.f32 %v1278, %v1296
        %v1317 = vadd.f32 %v1279, %v1296
        %v1318 = vadd.f32 %v1280, %v1296
        %v1319 = vadd.f32 %v1281, %v1296
        %v1320 = vadd.f32 %v1282, %v1296
        %v1321 = vadd.f32 %v1283, %v1296
        %v1322 = vadd.f32 %v1284, %v1296
        %v1323 = vadd.f32 %v1285, %v1296
        %v1324 = vadd.f32 %v1286, %v1296
        %v1325 = vadd.f32 %v1287, %v1296
        %v1326 = vadd.f32 %v1288, %v1296
        %v1327 = vadd.f32 %v1289, %v1296
        %v1328 = vadd.f32 %v1290, %v1296
        %v1329 = vadd.f32 %v1291, %v1296
        %v1330 = vld [vmem:[#allocation5] sm:$0xff]
        %v1331 = vld [vmem:[#allocation5 + $0x8] sm:$0xff]
        %v1332 = vld [vmem:[#allocation5 + $0x10] sm:$0xff]
        %v1333 = vld [vmem:[#allocation5 + $0x18] sm:$0xff]
        %v1334 = vld [vmem:[#allocation5 + $0x20] sm:$0xff]
        %v1335 = vld [vmem:[#allocation5 + $0x28] sm:$0xff]
        %v1336 = vld [vmem:[#allocation5 + $0x30] sm:$0xff]
        %v1337 = vld [vmem:[#allocation5 + $0x38] sm:$0xff]
        %v1338 = vld [vmem:[#allocation5 + $0x40] sm:$0xff]
        %v1339 = vld [vmem:[#allocation5 + $0x48] sm:$0xff]
        %v1340 = vld [vmem:[#allocation5 + $0x50] sm:$0xff]
        %v1341 = vld [vmem:[#allocation5 + $0x58] sm:$0xff]
        %v1342 = vld [vmem:[#allocation5 + $0x60] sm:$0xff]
        %v1343 = vld [vmem:[#allocation5 + $0x68] sm:$0xff]
        %v1344 = vld [vmem:[#allocation5 + $0x70] sm:$0xff]
        %v1345 = vld [vmem:[#allocation5 + $0x78] sm:$0xff]
        %v1346 = vld [vmem:[%s4] sm:$0x1]
        %v1348 = vlaneseq
        %v1349 = vshrl.u32 %v1348, 7
        %v1350 = vsub.s32 0, %v1349
        %v1351 = vrot.slane %v1346, %v1350
        %1353 = vmatprep.subr.mxu0 0.0
        %1354 = vmatpush1.msra.mxu0 %v1330
        %1355 = vmatprep.subr.mxu0 0.0
        %1356 = vmatpush1.msra.mxu0 %v1331
        %1357 = vmatprep.subr.mxu0 0.0
        %1358 = vmatpush1.msra.mxu0 %v1332
        %1359 = vmatprep.subr.mxu0 0.0
        %1360 = vmatpush1.msra.mxu0 %v1333
        %1361 = vmatprep.subr.mxu0 0.0
        %1362 = vmatpush1.msra.mxu0 %v1334
        %1363 = vmatprep.subr.mxu0 0.0
        %1364 = vmatpush1.msra.mxu0 %v1335
        %1365 = vmatprep.subr.mxu0 0.0
        %1366 = vmatpush1.msra.mxu0 %v1336
        %1367 = vmatprep.subr.mxu0 0.0
        %1368 = vmatpush1.msra.mxu0 %v1337
        %1369 = vmatprep.subr.mxu0 0.0
        %1370 = vmatpush1.msra.mxu0 %v1338
        %1371 = vmatprep.subr.mxu0 0.0
        %1372 = vmatpush1.msra.mxu0 %v1339
        %1373 = vmatprep.subr.mxu0 0.0
        %1374 = vmatpush1.msra.mxu0 %v1340
        %1375 = vmatprep.subr.mxu0 0.0
        %1376 = vmatpush1.msra.mxu0 %v1341
        %1377 = vmatprep.subr.mxu0 0.0
        %1378 = vmatpush1.msra.mxu0 %v1342
        %1379 = vmatprep.subr.mxu0 0.0
        %1380 = vmatpush1.msra.mxu0 %v1343
        %1381 = vmatprep.subr.mxu0 0.0
        %1382 = vmatpush1.msra.mxu0 %v1344
        %1383 = vmatprep.subr.mxu0 0.0
        %1384 = vmatpush1.msra.mxu0 %v1345
        %1385 = vmatprep.subr.mxu0 0.0
        %1386 = vmatpush1.msra.mxu0 0.0
        %1387 = vmatprep.subr.mxu0 0.0
        %1388 = vmatpush1.msra.mxu0 0.0
        %1389 = vmatprep.subr.mxu0 0.0
        %1390 = vmatpush1.msra.mxu0 0.0
        %1391 = vmatprep.subr.mxu0 0.0
        %1392 = vmatpush1.msra.mxu0 0.0
        %1393 = vmatprep.subr.mxu0 0.0
        %1394 = vmatpush1.msra.mxu0 0.0
        %1395 = vmatprep.subr.mxu0 0.0
        %1396 = vmatpush1.msra.mxu0 0.0
        %1397 = vmatprep.subr.mxu0 0.0
        %1398 = vmatpush1.msra.mxu0 0.0
        %1399 = vmatprep.subr.mxu0 0.0
        %1400 = vmatpush1.msra.mxu0 0.0
        %1401 = vmatprep.subr.mxu0 0.0
        %1402 = vmatpush1.msra.mxu0 0.0
        %1403 = vmatprep.subr.mxu0 0.0
        %1404 = vmatpush1.msra.mxu0 0.0
        %1405 = vmatprep.subr.mxu0 0.0
        %1406 = vmatpush1.msra.mxu0 0.0
        %1407 = vmatprep.subr.mxu0 0.0
        %1408 = vmatpush1.msra.mxu0 0.0
        %1409 = vmatprep.subr.mxu0 0.0
        %1410 = vmatpush1.msra.mxu0 0.0
        %1411 = vmatprep.subr.mxu0 0.0
        %1412 = vmatpush1.msra.mxu0 0.0
        %1413 = vmatprep.subr.mxu0 0.0
        %1414 = vmatpush1.msra.mxu0 0.0
        %1415 = vmatprep.subr.mxu0 0.0
        %1416 = vmatpush1.msra.mxu0 0.0
        %1417 = vmatprep.mubr.f32.mxu0 0.0
        %1418 = vmatmul.mubr.f32.gmra.mrb[0].mxu0 %v1298
        %v1419 = vpop.f32.mrb[0].mxu0
        %v1420 = vadd.f32 %v1351, %v1419
        %v1421 = vpop.f32.mrb[0].mxu0
        %1422 = vmatprep.mubr.f32.mxu0 0.0
        %1423 = vmatmul.mubr.f32.gmra.mrb[0].mxu0 %v1299
        %v1424 = vpop.f32.mrb[0].mxu0
        %v1425 = vadd.f32 %v1351, %v1424
        %v1426 = vpop.f32.mrb[0].mxu0
        %1427 = vmatprep.mubr.f32.mxu0 0.0
        %1428 = vmatmul.mubr.f32.gmra.mrb[0].mxu0 %v1300
        %v1429 = vpop.f32.mrb[0].mxu0
        %v1430 = vadd.f32 %v1351, %v1429
        %v1431 = vpop.f32.mrb[0].mxu0
        %1432 = vmatprep.mubr.f32.mxu0 0.0
        %1433 = vmatmul.mubr.f32.gmra.mrb[0].mxu0 %v1301
        %v1434 = vpop.f32.mrb[0].mxu0
        %v1435 = vadd.f32 %v1351, %v1434
        %v1436 = vpop.f32.mrb[0].mxu0
        %1437 = vmatprep.mubr.f32.mxu0 0.0
        %1438 = vmatmul.mubr.f32.gmra.mrb[0].mxu0 %v1302
        %v1439 = vpop.f32.mrb[0].mxu0
        %v1440 = vadd.f32 %v1351, %v1439
        %v1441 = vpop.f32.mrb[0].mxu0
        %1442 = vmatprep.mubr.f32.mxu0 0.0
        %1443 = vmatmul.mubr.f32.gmra.mrb[0].mxu0 %v1303
        %v1444 = vpop.f32.mrb[0].mxu0
        %v1445 = vadd.f32 %v1351, %v1444
        %v1446 = vpop.f32.mrb[0].mxu0
        %1447 = vmatprep.mubr.f32.mxu0 0.0
        %1448 = vmatmul.mubr.f32.gmra.mrb[0].mxu0 %v1304
        %v1449 = vpop.f32.mrb[0].mxu0
        %v1450 = vadd.f32 %v1351, %v1449
        %v1451 = vpop.f32.mrb[0].mxu0
        %1452 = vmatprep.mubr.f32.mxu0 0.0
        %1453 = vmatmul.mubr.f32.gmra.mrb[0].mxu0 %v1305
        %v1454 = vpop.f32.mrb[0].mxu0
        %v1455 = vadd.f32 %v1351, %v1454
        %v1456 = vpop.f32.mrb[0].mxu0
        %1457 = vmatprep.mubr.f32.mxu0 0.0
        %1458 = vmatmul.mubr.f32.gmra.mrb[0].mxu0 %v1306
        %v1459 = vpop.f32.mrb[0].mxu0
        %v1460 = vadd.f32 %v1351, %v1459
        %v1461 = vpop.f32.mrb[0].mxu0
        %1462 = vmatprep.mubr.f32.mxu0 0.0
        %1463 = vmatmul.mubr.f32.gmra.mrb[0].mxu0 %v1307
        %v1464 = vpop.f32.mrb[0].mxu0
        %v1465 = vadd.f32 %v1351, %v1464
        %v1466 = vpop.f32.mrb[0].mxu0
        %1467 = vmatprep.mubr.f32.mxu0 0.0
        %1468 = vmatmul.mubr.f32.gmra.mrb[0].mxu0 %v1308
        %v1469 = vpop.f32.mrb[0].mxu0
        %v1470 = vadd.f32 %v1351, %v1469
        %v1471 = vpop.f32.mrb[0].mxu0
        %1472 = vmatprep.mubr.f32.mxu0 0.0
        %1473 = vmatmul.mubr.f32.gmra.mrb[0].mxu0 %v1309
        %v1474 = vpop.f32.mrb[0].mxu0
        %v1475 = vadd.f32 %v1351, %v1474
        %v1476 = vpop.f32.mrb[0].mxu0
        %1477 = vmatprep.mubr.f32.mxu0 0.0
        %1478 = vmatmul.mubr.f32.gmra.mrb[0].mxu0 %v1310
        %v1479 = vpop.f32.mrb[0].mxu0
        %v1480 = vadd.f32 %v1351, %v1479
        %v1481 = vpop.f32.mrb[0].mxu0
        %1482 = vmatprep.mubr.f32.mxu0 0.0
        %1483 = vmatmul.mubr.f32.gmra.mrb[0].mxu0 %v1311
        %v1484 = vpop.f32.mrb[0].mxu0
        %v1485 = vadd.f32 %v1351, %v1484
        %v1486 = vpop.f32.mrb[0].mxu0
        %1487 = vmatprep.mubr.f32.mxu0 0.0
        %1488 = vmatmul.mubr.f32.gmra.mrb[0].mxu0 %v1312
        %v1489 = vpop.f32.mrb[0].mxu0
        %v1490 = vadd.f32 %v1351, %v1489
        %v1491 = vpop.f32.mrb[0].mxu0
        %1492 = vmatprep.mubr.f32.mxu0 0.0
        %1493 = vmatmul.mubr.f32.gmra.mrb[0].mxu0 %v1313
        %v1494 = vpop.f32.mrb[0].mxu0
        %v1495 = vadd.f32 %v1351, %v1494
        %v1496 = vpop.f32.mrb[0].mxu0
        %1497 = vmatprep.mubr.f32.mxu0 0.0
        %1498 = vmatmul.mubr.f32.gmra.mrb[0].mxu0 %v1314
        %v1499 = vpop.f32.mrb[0].mxu0
        %v1500 = vadd.f32 %v1351, %v1499
        %v1501 = vpop.f32.mrb[0].mxu0
        %1502 = vmatprep.mubr.f32.mxu0 0.0
        %1503 = vmatmul.mubr.f32.gmra.mrb[0].mxu0 %v1315
        %v1504 = vpop.f32.mrb[0].mxu0
        %v1505 = vadd.f32 %v1351, %v1504
        %v1506 = vpop.f32.mrb[0].mxu0
        %1507 = vmatprep.mubr.f32.mxu0 0.0
        %1508 = vmatmul.mubr.f32.gmra.mrb[0].mxu0 %v1316
        %v1509 = vpop.f32.mrb[0].mxu0
        %v1510 = vadd.f32 %v1351, %v1509
        %v1511 = vpop.f32.mrb[0].mxu0
        %1512 = vmatprep.mubr.f32.mxu0 0.0
        %1513 = vmatmul.mubr.f32.gmra.mrb[0].mxu0 %v1317
        %v1514 = vpop.f32.mrb[0].mxu0
        %v1515 = vadd.f32 %v1351, %v1514
        %v1516 = vpop.f32.mrb[0].mxu0
        %1517 = vmatprep.mubr.f32.mxu0 0.0
        %1518 = vmatmul.mubr.f32.gmra.mrb[0].mxu0 %v1318
        %v1519 = vpop.f32.mrb[0].mxu0
        %v1520 = vadd.f32 %v1351, %v1519
        %v1521 = vpop.f32.mrb[0].mxu0
        %1522 = vmatprep.mubr.f32.mxu0 0.0
        %1523 = vmatmul.mubr.f32.gmra.mrb[0].mxu0 %v1319
        %v1524 = vpop.f32.mrb[0].mxu0
        %v1525 = vadd.f32 %v1351, %v1524
        %v1526 = vpop.f32.mrb[0].mxu0
        %1527 = vmatprep.mubr.f32.mxu0 0.0
        %1528 = vmatmul.mubr.f32.gmra.mrb[0].mxu0 %v1320
        %v1529 = vpop.f32.mrb[0].mxu0
        %v1530 = vadd.f32 %v1351, %v1529
        %v1531 = vpop.f32.mrb[0].mxu0
        %1532 = vmatprep.mubr.f32.mxu0 0.0
        %1533 = vmatmul.mubr.f32.gmra.mrb[0].mxu0 %v1321
        %v1534 = vpop.f32.mrb[0].mxu0
        %v1535 = vadd.f32 %v1351, %v1534
        %v1536 = vpop.f32.mrb[0].mxu0
        %1537 = vmatprep.mubr.f32.mxu0 0.0
        %1538 = vmatmul.mubr.f32.gmra.mrb[0].mxu0 %v1322
        %v1539 = vpop.f32.mrb[0].mxu0
        %v1540 = vadd.f32 %v1351, %v1539
        %v1541 = vpop.f32.mrb[0].mxu0
        %1542 = vmatprep.mubr.f32.mxu0 0.0
        %1543 = vmatmul.mubr.f32.gmra.mrb[0].mxu0 %v1323
        %v1544 = vpop.f32.mrb[0].mxu0
        %v1545 = vadd.f32 %v1351, %v1544
        %v1546 = vpop.f32.mrb[0].mxu0
        %1547 = vmatprep.mubr.f32.mxu0 0.0
        %1548 = vmatmul.mubr.f32.gmra.mrb[0].mxu0 %v1324
        %v1549 = vpop.f32.mrb[0].mxu0
        %v1550 = vadd.f32 %v1351, %v1549
        %v1551 = vpop.f32.mrb[0].mxu0
        %1552 = vmatprep.mubr.f32.mxu0 0.0
        %1553 = vmatmul.mubr.f32.gmra.mrb[0].mxu0 %v1325
        %v1554 = vpop.f32.mrb[0].mxu0
        %v1555 = vadd.f32 %v1351, %v1554
        %v1556 = vpop.f32.mrb[0].mxu0
        %1557 = vmatprep.mubr.f32.mxu0 0.0
        %1558 = vmatmul.mubr.f32.gmra.mrb[0].mxu0 %v1326
        %v1559 = vpop.f32.mrb[0].mxu0
        %v1560 = vadd.f32 %v1351, %v1559
        %v1561 = vpop.f32.mrb[0].mxu0
        %1562 = vmatprep.mubr.f32.mxu0 0.0
        %1563 = vmatmul.mubr.f32.gmra.mrb[0].mxu0 %v1327
        %v1564 = vpop.f32.mrb[0].mxu0
        %v1565 = vadd.f32 %v1351, %v1564
        %v1566 = vpop.f32.mrb[0].mxu0
        %1567 = vmatprep.mubr.f32.mxu0 0.0
        %1568 = vmatmul.mubr.f32.gmra.mrb[0].mxu0 %v1328
        %v1569 = vpop.f32.mrb[0].mxu0
        %v1570 = vadd.f32 %v1351, %v1569
        %v1571 = vpop.f32.mrb[0].mxu0
        %1572 = vmatprep.mubr.f32.mxu0 0.0
        %1573 = vmatmul.mubr.f32.gmra.mrb[0].mxu0 %v1329
        %v1574 = vpop.f32.mrb[0].mxu0
        %v1575 = vadd.f32 %v1351, %v1574
        %v1576 = vpop.f32.mrb[0].mxu0
        %1577 = vdwg.mxu0
        %v1578 = vxor.u32 %v1420, 2147483648
        %v1579 = vxor.u32 %v1425, 2147483648
        %v1580 = vxor.u32 %v1430, 2147483648
        %v1581 = vxor.u32 %v1435, 2147483648
        %v1582 = vxor.u32 %v1440, 2147483648
        %v1583 = vxor.u32 %v1445, 2147483648
        %v1584 = vxor.u32 %v1450, 2147483648
        %v1585 = vxor.u32 %v1455, 2147483648
        %v1586 = vxor.u32 %v1460, 2147483648
        %v1587 = vxor.u32 %v1465, 2147483648
        %v1588 = vxor.u32 %v1470, 2147483648
        %v1589 = vxor.u32 %v1475, 2147483648
        %v1590 = vxor.u32 %v1480, 2147483648
        %v1591 = vxor.u32 %v1485, 2147483648
        %v1592 = vxor.u32 %v1490, 2147483648
        %v1593 = vxor.u32 %v1495, 2147483648
        %v1594 = vxor.u32 %v1500, 2147483648
        %v1595 = vxor.u32 %v1505, 2147483648
        %v1596 = vxor.u32 %v1510, 2147483648
        %v1597 = vxor.u32 %v1515, 2147483648
        %v1598 = vxor.u32 %v1520, 2147483648
        %v1599 = vxor.u32 %v1525, 2147483648
        %v1600 = vxor.u32 %v1530, 2147483648
        %v1601 = vxor.u32 %v1535, 2147483648
        %v1602 = vxor.u32 %v1540, 2147483648
        %v1603 = vxor.u32 %v1545, 2147483648
        %v1604 = vxor.u32 %v1550, 2147483648
        %v1605 = vxor.u32 %v1555, 2147483648
        %v1606 = vxor.u32 %v1560, 2147483648
        %v1607 = vxor.u32 %v1565, 2147483648
        %v1608 = vxor.u32 %v1570, 2147483648
        %v1609 = vxor.u32 %v1575, 2147483648
        %v1610 = vmul.f32 %v1578, 1.442695
        %v1611 = vpow.pop %v1610
        %v1612 = vmul.f32 %v1579, 1.442695
        %v1613 = vpow.pop %v1612
        %v1614 = vmul.f32 %v1580, 1.442695
        %v1615 = vpow.pop %v1614
        %v1616 = vmul.f32 %v1581, 1.442695
        %v1617 = vpow.pop %v1616
        %v1618 = vmul.f32 %v1582, 1.442695
        %v1619 = vpow.pop %v1618
        %v1620 = vmul.f32 %v1583, 1.442695
        %v1621 = vpow.pop %v1620
        %v1622 = vmul.f32 %v1584, 1.442695
        %v1623 = vpow.pop %v1622
        %v1624 = vmul.f32 %v1585, 1.442695
        %v1625 = vpow.pop %v1624
        %v1626 = vmul.f32 %v1586, 1.442695
        %v1627 = vpow.pop %v1626
        %v1628 = vmul.f32 %v1587, 1.442695
        %v1629 = vpow.pop %v1628
        %v1630 = vmul.f32 %v1588, 1.442695
        %v1631 = vpow.pop %v1630
        %v1632 = vmul.f32 %v1589, 1.442695
        %v1633 = vpow.pop %v1632
        %v1634 = vmul.f32 %v1590, 1.442695
        %v1635 = vpow.pop %v1634
        %v1636 = vmul.f32 %v1591, 1.442695
        %v1637 = vpow.pop %v1636
        %v1638 = vmul.f32 %v1592, 1.442695
        %v1639 = vpow.pop %v1638
        %v1640 = vmul.f32 %v1593, 1.442695
        %v1641 = vpow.pop %v1640
        %v1642 = vmul.f32 %v1594, 1.442695
        %v1643 = vpow.pop %v1642
        %v1644 = vmul.f32 %v1595, 1.442695
        %v1645 = vpow.pop %v1644
        %v1646 = vmul.f32 %v1596, 1.442695
        %v1647 = vpow.pop %v1646
        %v1648 = vmul.f32 %v1597, 1.442695
        %v1649 = vpow.pop %v1648
        %v1650 = vmul.f32 %v1598, 1.442695
        %v1651 = vpow.pop %v1650
        %v1652 = vmul.f32 %v1599, 1.442695
        %v1653 = vpow.pop %v1652
        %v1654 = vmul.f32 %v1600, 1.442695
        %v1655 = vpow.pop %v1654
        %v1656 = vmul.f32 %v1601, 1.442695
        %v1657 = vpow.pop %v1656
        %v1658 = vmul.f32 %v1602, 1.442695
        %v1659 = vpow.pop %v1658
        %v1660 = vmul.f32 %v1603, 1.442695
        %v1661 = vpow.pop %v1660
        %v1662 = vmul.f32 %v1604, 1.442695
        %v1663 = vpow.pop %v1662
        %v1664 = vmul.f32 %v1605, 1.442695
        %v1665 = vpow.pop %v1664
        %v1666 = vmul.f32 %v1606, 1.442695
        %v1667 = vpow.pop %v1666
        %v1668 = vmul.f32 %v1607, 1.442695
        %v1669 = vpow.pop %v1668
        %v1670 = vmul.f32 %v1608, 1.442695
        %v1671 = vpow.pop %v1670
        %v1672 = vmul.f32 %v1609, 1.442695
        %v1673 = vpow.pop %v1672
        %v1674 = vadd.f32 %v1611, 1.0
        %v1675 = vadd.f32 %v1613, 1.0
        %v1676 = vadd.f32 %v1615, 1.0
        %v1677 = vadd.f32 %v1617, 1.0
        %v1678 = vadd.f32 %v1619, 1.0
        %v1679 = vadd.f32 %v1621, 1.0
        %v1680 = vadd.f32 %v1623, 1.0
        %v1681 = vadd.f32 %v1625, 1.0
        %v1682 = vadd.f32 %v1627, 1.0
        %v1683 = vadd.f32 %v1629, 1.0
        %v1684 = vadd.f32 %v1631, 1.0
        %v1685 = vadd.f32 %v1633, 1.0
        %v1686 = vadd.f32 %v1635, 1.0
        %v1687 = vadd.f32 %v1637, 1.0
        %v1688 = vadd.f32 %v1639, 1.0
        %v1689 = vadd.f32 %v1641, 1.0
        %v1690 = vadd.f32 %v1643, 1.0
        %v1691 = vadd.f32 %v1645, 1.0
        %v1692 = vadd.f32 %v1647, 1.0
        %v1693 = vadd.f32 %v1649, 1.0
        %v1694 = vadd.f32 %v1651, 1.0
        %v1695 = vadd.f32 %v1653, 1.0
        %v1696 = vadd.f32 %v1655, 1.0
        %v1697 = vadd.f32 %v1657, 1.0
        %v1698 = vadd.f32 %v1659, 1.0
        %v1699 = vadd.f32 %v1661, 1.0
        %v1700 = vadd.f32 %v1663, 1.0
        %v1701 = vadd.f32 %v1665, 1.0
        %v1702 = vadd.f32 %v1667, 1.0
        %v1703 = vadd.f32 %v1669, 1.0
        %v1704 = vadd.f32 %v1671, 1.0
        %v1705 = vadd.f32 %v1673, 1.0
        %v1706 = vrcp.pop %v1674
        %v1707 = vmul.f32 1.0, %v1706
        %v1708 = vrcp.pop %v1675
        %v1709 = vmul.f32 1.0, %v1708
        %v1710 = vrcp.pop %v1676
        %v1711 = vmul.f32 1.0, %v1710
        %v1712 = vrcp.pop %v1677
        %v1713 = vmul.f32 1.0, %v1712
        %v1714 = vrcp.pop %v1678
        %v1715 = vmul.f32 1.0, %v1714
        %v1716 = vrcp.pop %v1679
        %v1717 = vmul.f32 1.0, %v1716
        %v1718 = vrcp.pop %v1680
        %v1719 = vmul.f32 1.0, %v1718
        %v1720 = vrcp.pop %v1681
        %v1721 = vmul.f32 1.0, %v1720
        %v1722 = vrcp.pop %v1682
        %v1723 = vmul.f32 1.0, %v1722
        %v1724 = vrcp.pop %v1683
        %v1725 = vmul.f32 1.0, %v1724
        %v1726 = vrcp.pop %v1684
        %v1727 = vmul.f32 1.0, %v1726
        %v1728 = vrcp.pop %v1685
        %v1729 = vmul.f32 1.0, %v1728
        %v1730 = vrcp.pop %v1686
        %v1731 = vmul.f32 1.0, %v1730
        %v1732 = vrcp.pop %v1687
        %v1733 = vmul.f32 1.0, %v1732
        %v1734 = vrcp.pop %v1688
        %v1735 = vmul.f32 1.0, %v1734
        %v1736 = vrcp.pop %v1689
        %v1737 = vmul.f32 1.0, %v1736
        %v1738 = vrcp.pop %v1690
        %v1739 = vmul.f32 1.0, %v1738
        %v1740 = vrcp.pop %v1691
        %v1741 = vmul.f32 1.0, %v1740
        %v1742 = vrcp.pop %v1692
        %v1743 = vmul.f32 1.0, %v1742
        %v1744 = vrcp.pop %v1693
        %v1745 = vmul.f32 1.0, %v1744
        %v1746 = vrcp.pop %v1694
        %v1747 = vmul.f32 1.0, %v1746
        %v1748 = vrcp.pop %v1695
        %v1749 = vmul.f32 1.0, %v1748
        %v1750 = vrcp.pop %v1696
        %v1751 = vmul.f32 1.0, %v1750
        %v1752 = vrcp.pop %v1697
        %v1753 = vmul.f32 1.0, %v1752
        %v1754 = vrcp.pop %v1698
        %v1755 = vmul.f32 1.0, %v1754
        %v1756 = vrcp.pop %v1699
        %v1757 = vmul.f32 1.0, %v1756
        %v1758 = vrcp.pop %v1700
        %v1759 = vmul.f32 1.0, %v1758
        %v1760 = vrcp.pop %v1701
        %v1761 = vmul.f32 1.0, %v1760
        %v1762 = vrcp.pop %v1702
        %v1763 = vmul.f32 1.0, %v1762
        %v1764 = vrcp.pop %v1703
        %v1765 = vmul.f32 1.0, %v1764
        %v1766 = vrcp.pop %v1704
        %v1767 = vmul.f32 1.0, %v1766
        %v1768 = vrcp.pop %v1705
        %v1769 = vmul.f32 1.0, %v1768
        %v1770 = vmul.f32 %v1420, %v1707
        %v1771 = vmul.f32 %v1425, %v1709
        %v1772 = vmul.f32 %v1430, %v1711
        %v1773 = vmul.f32 %v1435, %v1713
        %v1774 = vmul.f32 %v1440, %v1715
        %v1775 = vmul.f32 %v1445, %v1717
        %v1776 = vmul.f32 %v1450, %v1719
        %v1777 = vmul.f32 %v1455, %v1721
        %v1778 = vmul.f32 %v1460, %v1723
        %v1779 = vmul.f32 %v1465, %v1725
        %v1780 = vmul.f32 %v1470, %v1727
        %v1781 = vmul.f32 %v1475, %v1729
        %v1782 = vmul.f32 %v1480, %v1731
        %v1783 = vmul.f32 %v1485, %v1733
        %v1784 = vmul.f32 %v1490, %v1735
        %v1785 = vmul.f32 %v1495, %v1737
        %v1786 = vmul.f32 %v1500, %v1739
        %v1787 = vmul.f32 %v1505, %v1741
        %v1788 = vmul.f32 %v1510, %v1743
        %v1789 = vmul.f32 %v1515, %v1745
        %v1790 = vmul.f32 %v1520, %v1747
        %v1791 = vmul.f32 %v1525, %v1749
        %v1792 = vmul.f32 %v1530, %v1751
        %v1793 = vmul.f32 %v1535, %v1753
        %v1794 = vmul.f32 %v1540, %v1755
        %v1795 = vmul.f32 %v1545, %v1757
        %v1796 = vmul.f32 %v1550, %v1759
        %v1797 = vmul.f32 %v1555, %v1761
        %v1798 = vmul.f32 %v1560, %v1763
        %v1799 = vmul.f32 %v1565, %v1765
        %v1800 = vmul.f32 %v1570, %v1767
        %v1801 = vmul.f32 %v1575, %v1769
        %v1802 = vld [vmem:[%s5] sm:$0x1]
        %v1803 = vld [vmem:[%s6] sm:$0x1]
        %1804 = vadd.xlane.f32.xlu0 %v1770
        %v1805 = vpop.xlane.xlu0 %1804
        %1806 = vadd.xlane.f32.xlu0 %v1771
        %v1807 = vpop.xlane.xlu0 %1806
        %1808 = vadd.xlane.f32.xlu0 %v1772
        %v1809 = vpop.xlane.xlu0 %1808
        %1810 = vadd.xlane.f32.xlu0 %v1773
        %v1811 = vpop.xlane.xlu0 %1810
        %1812 = vadd.xlane.f32.xlu0 %v1774
        %v1813 = vpop.xlane.xlu0 %1812
        %1814 = vadd.xlane.f32.xlu0 %v1775
        %v1815 = vpop.xlane.xlu0 %1814
        %1816 = vadd.xlane.f32.xlu0 %v1776
        %v1817 = vpop.xlane.xlu0 %1816
        %1818 = vadd.xlane.f32.xlu0 %v1777
        %v1819 = vpop.xlane.xlu0 %1818
        %1820 = vadd.xlane.f32.xlu0 %v1778
        %v1821 = vpop.xlane.xlu0 %1820
        %1822 = vadd.xlane.f32.xlu0 %v1779
        %v1823 = vpop.xlane.xlu0 %1822
        %1824 = vadd.xlane.f32.xlu0 %v1780
        %v1825 = vpop.xlane.xlu0 %1824
        %1826 = vadd.xlane.f32.xlu0 %v1781
        %v1827 = vpop.xlane.xlu0 %1826
        %1828 = vadd.xlane.f32.xlu0 %v1782
        %v1829 = vpop.xlane.xlu0 %1828
        %1830 = vadd.xlane.f32.xlu0 %v1783
        %v1831 = vpop.xlane.xlu0 %1830
        %1832 = vadd.xlane.f32.xlu0 %v1784
        %v1833 = vpop.xlane.xlu0 %1832
        %1834 = vadd.xlane.f32.xlu0 %v1785
        %v1835 = vpop.xlane.xlu0 %1834
        %1836 = vadd.xlane.f32.xlu0 %v1786
        %v1837 = vpop.xlane.xlu0 %1836
        %1838 = vadd.xlane.f32.xlu0 %v1787
        %v1839 = vpop.xlane.xlu0 %1838
        %1840 = vadd.xlane.f32.xlu0 %v1788
        %v1841 = vpop.xlane.xlu0 %1840
        %1842 = vadd.xlane.f32.xlu0 %v1789
        %v1843 = vpop.xlane.xlu0 %1842
        %1844 = vadd.xlane.f32.xlu0 %v1790
        %v1845 = vpop.xlane.xlu0 %1844
        %1846 = vadd.xlane.f32.xlu0 %v1791
        %v1847 = vpop.xlane.xlu0 %1846
        %1848 = vadd.xlane.f32.xlu0 %v1792
        %v1849 = vpop.xlane.xlu0 %1848
        %1850 = vadd.xlane.f32.xlu0 %v1793
        %v1851 = vpop.xlane.xlu0 %1850
        %1852 = vadd.xlane.f32.xlu0 %v1794
        %v1853 = vpop.xlane.xlu0 %1852
        %1854 = vadd.xlane.f32.xlu0 %v1795
        %v1855 = vpop.xlane.xlu0 %1854
        %1856 = vadd.xlane.f32.xlu0 %v1796
        %v1857 = vpop.xlane.xlu0 %1856
        %1858 = vadd.xlane.f32.xlu0 %v1797
        %v1859 = vpop.xlane.xlu0 %1858
        %1860 = vadd.xlane.f32.xlu0 %v1798
        %v1861 = vpop.xlane.xlu0 %1860
        %1862 = vadd.xlane.f32.xlu0 %v1799
        %v1863 = vpop.xlane.xlu0 %1862
        %1864 = vadd.xlane.f32.xlu0 %v1800
        %v1865 = vpop.xlane.xlu0 %1864
        %1866 = vadd.xlane.f32.xlu0 %v1801
        %v1867 = vpop.xlane.xlu0 %1866
        %v1868 = vmul.f32 %v1805, %v965
        %v1869 = vmul.f32 %v1807, %v965
        %v1870 = vmul.f32 %v1809, %v965
        %v1871 = vmul.f32 %v1811, %v965
        %v1872 = vmul.f32 %v1813, %v965
        %v1873 = vmul.f32 %v1815, %v965
        %v1874 = vmul.f32 %v1817, %v965
        %v1875 = vmul.f32 %v1819, %v965
        %v1876 = vmul.f32 %v1821, %v965
        %v1877 = vmul.f32 %v1823, %v965
        %v1878 = vmul.f32 %v1825, %v965
        %v1879 = vmul.f32 %v1827, %v965
        %v1880 = vmul.f32 %v1829, %v965
        %v1881 = vmul.f32 %v1831, %v965
        %v1882 = vmul.f32 %v1833, %v965
        %v1883 = vmul.f32 %v1835, %v965
        %v1884 = vmul.f32 %v1837, %v965
        %v1885 = vmul.f32 %v1839, %v965
        %v1886 = vmul.f32 %v1841, %v965
        %v1887 = vmul.f32 %v1843, %v965
        %v1888 = vmul.f32 %v1845, %v965
        %v1889 = vmul.f32 %v1847, %v965
        %v1890 = vmul.f32 %v1849, %v965
        %v1891 = vmul.f32 %v1851, %v965
        %v1892 = vmul.f32 %v1853, %v965
        %v1893 = vmul.f32 %v1855, %v965
        %v1894 = vmul.f32 %v1857, %v965
        %v1895 = vmul.f32 %v1859, %v965
        %v1896 = vmul.f32 %v1861, %v965
        %v1897 = vmul.f32 %v1863, %v965
        %v1898 = vmul.f32 %v1865, %v965
        %v1899 = vmul.f32 %v1867, %v965
        %v1900 = vsub.f32 %v1770, %v1868
        %v1901 = vsub.f32 %v1771, %v1869
        %v1902 = vsub.f32 %v1772, %v1870
        %v1903 = vsub.f32 %v1773, %v1871
        %v1904 = vsub.f32 %v1774, %v1872
        %v1905 = vsub.f32 %v1775, %v1873
        %v1906 = vsub.f32 %v1776, %v1874
        %v1907 = vsub.f32 %v1777, %v1875
        %v1908 = vsub.f32 %v1778, %v1876
        %v1909 = vsub.f32 %v1779, %v1877
        %v1910 = vsub.f32 %v1780, %v1878
        %v1911 = vsub.f32 %v1781, %v1879
        %v1912 = vsub.f32 %v1782, %v1880
        %v1913 = vsub.f32 %v1783, %v1881
        %v1914 = vsub.f32 %v1784, %v1882
        %v1915 = vsub.f32 %v1785, %v1883
        %v1916 = vsub.f32 %v1786, %v1884
        %v1917 = vsub.f32 %v1787, %v1885
        %v1918 = vsub.f32 %v1788, %v1886
        %v1919 = vsub.f32 %v1789, %v1887
        %v1920 = vsub.f32 %v1790, %v1888
        %v1921 = vsub.f32 %v1791, %v1889
        %v1922 = vsub.f32 %v1792, %v1890
        %v1923 = vsub.f32 %v1793, %v1891
        %v1924 = vsub.f32 %v1794, %v1892
        %v1925 = vsub.f32 %v1795, %v1893
        %v1926 = vsub.f32 %v1796, %v1894
        %v1927 = vsub.f32 %v1797, %v1895
        %v1928 = vsub.f32 %v1798, %v1896
        %v1929 = vsub.f32 %v1799, %v1897
        %v1930 = vsub.f32 %v1800, %v1898
        %v1931 = vsub.f32 %v1801, %v1899
        %v1932 = vmul.f32 %v1900, %v1900
        %v1933 = vmul.f32 %v1901, %v1901
        %v1934 = vmul.f32 %v1902, %v1902
        %v1935 = vmul.f32 %v1903, %v1903
        %v1936 = vmul.f32 %v1904, %v1904
        %v1937 = vmul.f32 %v1905, %v1905
        %v1938 = vmul.f32 %v1906, %v1906
        %v1939 = vmul.f32 %v1907, %v1907
        %v1940 = vmul.f32 %v1908, %v1908
        %v1941 = vmul.f32 %v1909, %v1909
        %v1942 = vmul.f32 %v1910, %v1910
        %v1943 = vmul.f32 %v1911, %v1911
        %v1944 = vmul.f32 %v1912, %v1912
        %v1945 = vmul.f32 %v1913, %v1913
        %v1946 = vmul.f32 %v1914, %v1914
        %v1947 = vmul.f32 %v1915, %v1915
        %v1948 = vmul.f32 %v1916, %v1916
        %v1949 = vmul.f32 %v1917, %v1917
        %v1950 = vmul.f32 %v1918, %v1918
        %v1951 = vmul.f32 %v1919, %v1919
        %v1952 = vmul.f32 %v1920, %v1920
        %v1953 = vmul.f32 %v1921, %v1921
        %v1954 = vmul.f32 %v1922, %v1922
        %v1955 = vmul.f32 %v1923, %v1923
        %v1956 = vmul.f32 %v1924, %v1924
        %v1957 = vmul.f32 %v1925, %v1925
        %v1958 = vmul.f32 %v1926, %v1926
        %v1959 = vmul.f32 %v1927, %v1927
        %v1960 = vmul.f32 %v1928, %v1928
        %v1961 = vmul.f32 %v1929, %v1929
        %v1962 = vmul.f32 %v1930, %v1930
        %v1963 = vmul.f32 %v1931, %v1931
        %1964 = vadd.xlane.f32.xlu0 %v1932
        %v1965 = vpop.xlane.xlu0 %1964
        %1966 = vadd.xlane.f32.xlu0 %v1933
        %v1967 = vpop.xlane.xlu0 %1966
        %1968 = vadd.xlane.f32.xlu0 %v1934
        %v1969 = vpop.xlane.xlu0 %1968
        %1970 = vadd.xlane.f32.xlu0 %v1935
        %v1971 = vpop.xlane.xlu0 %1970
        %1972 = vadd.xlane.f32.xlu0 %v1936
        %v1973 = vpop.xlane.xlu0 %1972
        %1974 = vadd.xlane.f32.xlu0 %v1937
        %v1975 = vpop.xlane.xlu0 %1974
        %1976 = vadd.xlane.f32.xlu0 %v1938
        %v1977 = vpop.xlane.xlu0 %1976
        %1978 = vadd.xlane.f32.xlu0 %v1939
        %v1979 = vpop.xlane.xlu0 %1978
        %1980 = vadd.xlane.f32.xlu0 %v1940
        %v1981 = vpop.xlane.xlu0 %1980
        %1982 = vadd.xlane.f32.xlu0 %v1941
        %v1983 = vpop.xlane.xlu0 %1982
        %1984 = vadd.xlane.f32.xlu0 %v1942
        %v1985 = vpop.xlane.xlu0 %1984
        %1986 = vadd.xlane.f32.xlu0 %v1943
        %v1987 = vpop.xlane.xlu0 %1986
        %1988 = vadd.xlane.f32.xlu0 %v1944
        %v1989 = vpop.xlane.xlu0 %1988
        %1990 = vadd.xlane.f32.xlu0 %v1945
        %v1991 = vpop.xlane.xlu0 %1990
        %1992 = vadd.xlane.f32.xlu0 %v1946
        %v1993 = vpop.xlane.xlu0 %1992
        %1994 = vadd.xlane.f32.xlu0 %v1947
        %v1995 = vpop.xlane.xlu0 %1994
        %1996 = vadd.xlane.f32.xlu0 %v1948
        %v1997 = vpop.xlane.xlu0 %1996
        %1998 = vadd.xlane.f32.xlu0 %v1949
        %v1999 = vpop.xlane.xlu0 %1998
        %2000 = vadd.xlane.f32.xlu0 %v1950
        %v2001 = vpop.xlane.xlu0 %2000
        %2002 = vadd.xlane.f32.xlu0 %v1951
        %v2003 = vpop.xlane.xlu0 %2002
        %2004 = vadd.xlane.f32.xlu0 %v1952
        %v2005 = vpop.xlane.xlu0 %2004
        %2006 = vadd.xlane.f32.xlu0 %v1953
        %v2007 = vpop.xlane.xlu0 %2006
        %2008 = vadd.xlane.f32.xlu0 %v1954
        %v2009 = vpop.xlane.xlu0 %2008
        %2010 = vadd.xlane.f32.xlu0 %v1955
        %v2011 = vpop.xlane.xlu0 %2010
        %2012 = vadd.xlane.f32.xlu0 %v1956
        %v2013 = vpop.xlane.xlu0 %2012
        %2014 = vadd.xlane.f32.xlu0 %v1957
        %v2015 = vpop.xlane.xlu0 %2014
        %2016 = vadd.xlane.f32.xlu0 %v1958
        %v2017 = vpop.xlane.xlu0 %2016
        %2018 = vadd.xlane.f32.xlu0 %v1959
        %v2019 = vpop.xlane.xlu0 %2018
        %2020 = vadd.xlane.f32.xlu0 %v1960
        %v2021 = vpop.xlane.xlu0 %2020
        %2022 = vadd.xlane.f32.xlu0 %v1961
        %v2023 = vpop.xlane.xlu0 %2022
        %2024 = vadd.xlane.f32.xlu0 %v1962
        %v2025 = vpop.xlane.xlu0 %2024
        %2026 = vadd.xlane.f32.xlu0 %v1963
        %v2027 = vpop.xlane.xlu0 %2026
        %v2028 = vmul.f32 %v1965, %v965
        %v2029 = vmul.f32 %v1967, %v965
        %v2030 = vmul.f32 %v1969, %v965
        %v2031 = vmul.f32 %v1971, %v965
        %v2032 = vmul.f32 %v1973, %v965
        %v2033 = vmul.f32 %v1975, %v965
        %v2034 = vmul.f32 %v1977, %v965
        %v2035 = vmul.f32 %v1979, %v965
        %v2036 = vmul.f32 %v1981, %v965
        %v2037 = vmul.f32 %v1983, %v965
        %v2038 = vmul.f32 %v1985, %v965
        %v2039 = vmul.f32 %v1987, %v965
        %v2040 = vmul.f32 %v1989, %v965
        %v2041 = vmul.f32 %v1991, %v965
        %v2042 = vmul.f32 %v1993, %v965
        %v2043 = vmul.f32 %v1995, %v965
        %v2044 = vmul.f32 %v1997, %v965
        %v2045 = vmul.f32 %v1999, %v965
        %v2046 = vmul.f32 %v2001, %v965
        %v2047 = vmul.f32 %v2003, %v965
        %v2048 = vmul.f32 %v2005, %v965
        %v2049 = vmul.f32 %v2007, %v965
        %v2050 = vmul.f32 %v2009, %v965
        %v2051 = vmul.f32 %v2011, %v965
        %v2052 = vmul.f32 %v2013, %v965
        %v2053 = vmul.f32 %v2015, %v965
        %v2054 = vmul.f32 %v2017, %v965
        %v2055 = vmul.f32 %v2019, %v965
        %v2056 = vmul.f32 %v2021, %v965
        %v2057 = vmul.f32 %v2023, %v965
        %v2058 = vmul.f32 %v2025, %v965
        %v2059 = vmul.f32 %v2027, %v965
        %v2060 = vadd.f32 %v2028, 1e-05
        %v2061 = vadd.f32 %v2029, 1e-05
        %v2062 = vadd.f32 %v2030, 1e-05
        %v2063 = vadd.f32 %v2031, 1e-05
        %v2064 = vadd.f32 %v2032, 1e-05
        %v2065 = vadd.f32 %v2033, 1e-05
        %v2066 = vadd.f32 %v2034, 1e-05
        %v2067 = vadd.f32 %v2035, 1e-05
        %v2068 = vadd.f32 %v2036, 1e-05
        %v2069 = vadd.f32 %v2037, 1e-05
        %v2070 = vadd.f32 %v2038, 1e-05
        %v2071 = vadd.f32 %v2039, 1e-05
        %v2072 = vadd.f32 %v2040, 1e-05
        %v2073 = vadd.f32 %v2041, 1e-05
        %v2074 = vadd.f32 %v2042, 1e-05
        %v2075 = vadd.f32 %v2043, 1e-05
        %v2076 = vadd.f32 %v2044, 1e-05
        %v2077 = vadd.f32 %v2045, 1e-05
        %v2078 = vadd.f32 %v2046, 1e-05
        %v2079 = vadd.f32 %v2047, 1e-05
        %v2080 = vadd.f32 %v2048, 1e-05
        %v2081 = vadd.f32 %v2049, 1e-05
        %v2082 = vadd.f32 %v2050, 1e-05
        %v2083 = vadd.f32 %v2051, 1e-05
        %v2084 = vadd.f32 %v2052, 1e-05
        %v2085 = vadd.f32 %v2053, 1e-05
        %v2086 = vadd.f32 %v2054, 1e-05
        %v2087 = vadd.f32 %v2055, 1e-05
        %v2088 = vadd.f32 %v2056, 1e-05
        %v2089 = vadd.f32 %v2057, 1e-05
        %v2090 = vadd.f32 %v2058, 1e-05
        %v2091 = vadd.f32 %v2059, 1e-05
        %v2092 = vrsqrt.pop %v2060
        %v2093 = vrsqrt.pop %v2061
        %v2094 = vrsqrt.pop %v2062
        %v2095 = vrsqrt.pop %v2063
        %v2096 = vrsqrt.pop %v2064
        %v2097 = vrsqrt.pop %v2065
        %v2098 = vrsqrt.pop %v2066
        %v2099 = vrsqrt.pop %v2067
        %v2100 = vrsqrt.pop %v2068
        %v2101 = vrsqrt.pop %v2069
        %v2102 = vrsqrt.pop %v2070
        %v2103 = vrsqrt.pop %v2071
        %v2104 = vrsqrt.pop %v2072
        %v2105 = vrsqrt.pop %v2073
        %v2106 = vrsqrt.pop %v2074
        %v2107 = vrsqrt.pop %v2075
        %v2108 = vrsqrt.pop %v2076
        %v2109 = vrsqrt.pop %v2077
        %v2110 = vrsqrt.pop %v2078
        %v2111 = vrsqrt.pop %v2079
        %v2112 = vrsqrt.pop %v2080
        %v2113 = vrsqrt.pop %v2081
        %v2114 = vrsqrt.pop %v2082
        %v2115 = vrsqrt.pop %v2083
        %v2116 = vrsqrt.pop %v2084
        %v2117 = vrsqrt.pop %v2085
        %v2118 = vrsqrt.pop %v2086
        %v2119 = vrsqrt.pop %v2087
        %v2120 = vrsqrt.pop %v2088
        %v2121 = vrsqrt.pop %v2089
        %v2122 = vrsqrt.pop %v2090
        %v2123 = vrsqrt.pop %v2091
        %v2124 = vmul.f32 %v1900, %v2092
        %v2125 = vmul.f32 %v1901, %v2093
        %v2126 = vmul.f32 %v1902, %v2094
        %v2127 = vmul.f32 %v1903, %v2095
        %v2128 = vmul.f32 %v1904, %v2096
        %v2129 = vmul.f32 %v1905, %v2097
        %v2130 = vmul.f32 %v1906, %v2098
        %v2131 = vmul.f32 %v1907, %v2099
        %v2132 = vmul.f32 %v1908, %v2100
        %v2133 = vmul.f32 %v1909, %v2101
        %v2134 = vmul.f32 %v1910, %v2102
        %v2135 = vmul.f32 %v1911, %v2103
        %v2136 = vmul.f32 %v1912, %v2104
        %v2137 = vmul.f32 %v1913, %v2105
        %v2138 = vmul.f32 %v1914, %v2106
        %v2139 = vmul.f32 %v1915, %v2107
        %v2140 = vmul.f32 %v1916, %v2108
        %v2141 = vmul.f32 %v1917, %v2109
        %v2142 = vmul.f32 %v1918, %v2110
        %v2143 = vmul.f32 %v1919, %v2111
        %v2144 = vmul.f32 %v1920, %v2112
        %v2145 = vmul.f32 %v1921, %v2113
        %v2146 = vmul.f32 %v1922, %v2114
        %v2147 = vmul.f32 %v1923, %v2115
        %v2148 = vmul.f32 %v1924, %v2116
        %v2149 = vmul.f32 %v1925, %v2117
        %v2150 = vmul.f32 %v1926, %v2118
        %v2151 = vmul.f32 %v1927, %v2119
        %v2152 = vmul.f32 %v1928, %v2120
        %v2153 = vmul.f32 %v1929, %v2121
        %v2154 = vmul.f32 %v1930, %v2122
        %v2155 = vmul.f32 %v1931, %v2123
        %v2157 = vlaneseq
        %v2158 = vshrl.u32 %v2157, 7
        %v2159 = vsub.s32 0, %v2158
        %v2160 = vrot.slane %v1802, %v2159
        %v2162 = vmul.f32 %v2124, %v2160
        %v2163 = vmul.f32 %v2125, %v2160
        %v2164 = vmul.f32 %v2126, %v2160
        %v2165 = vmul.f32 %v2127, %v2160
        %v2166 = vmul.f32 %v2128, %v2160
        %v2167 = vmul.f32 %v2129, %v2160
        %v2168 = vmul.f32 %v2130, %v2160
        %v2169 = vmul.f32 %v2131, %v2160
        %v2170 = vmul.f32 %v2132, %v2160
        %v2171 = vmul.f32 %v2133, %v2160
        %v2172 = vmul.f32 %v2134, %v2160
        %v2173 = vmul.f32 %v2135, %v2160
        %v2174 = vmul.f32 %v2136, %v2160
        %v2175 = vmul.f32 %v2137, %v2160
        %v2176 = vmul.f32 %v2138, %v2160
        %v2177 = vmul.f32 %v2139, %v2160
        %v2178 = vmul.f32 %v2140, %v2160
        %v2179 = vmul.f32 %v2141, %v2160
        %v2180 = vmul.f32 %v2142, %v2160
        %v2181 = vmul.f32 %v2143, %v2160
        %v2182 = vmul.f32 %v2144, %v2160
        %v2183 = vmul.f32 %v2145, %v2160
        %v2184 = vmul.f32 %v2146, %v2160
        %v2185 = vmul.f32 %v2147, %v2160
        %v2186 = vmul.f32 %v2148, %v2160
        %v2187 = vmul.f32 %v2149, %v2160
        %v2188 = vmul.f32 %v2150, %v2160
        %v2189 = vmul.f32 %v2151, %v2160
        %v2190 = vmul.f32 %v2152, %v2160
        %v2191 = vmul.f32 %v2153, %v2160
        %v2192 = vmul.f32 %v2154, %v2160
        %v2193 = vmul.f32 %v2155, %v2160
        %v2195 = vlaneseq
        %v2196 = vshrl.u32 %v2195, 7
        %v2197 = vsub.s32 0, %v2196
        %v2198 = vrot.slane %v1803, %v2197
        %v2200 = vadd.f32 %v2162, %v2198
        %v2201 = vadd.f32 %v2163, %v2198
        %v2202 = vadd.f32 %v2164, %v2198
        %v2203 = vadd.f32 %v2165, %v2198
        %v2204 = vadd.f32 %v2166, %v2198
        %v2205 = vadd.f32 %v2167, %v2198
        %v2206 = vadd.f32 %v2168, %v2198
        %v2207 = vadd.f32 %v2169, %v2198
        %v2208 = vadd.f32 %v2170, %v2198
        %v2209 = vadd.f32 %v2171, %v2198
        %v2210 = vadd.f32 %v2172, %v2198
        %v2211 = vadd.f32 %v2173, %v2198
        %v2212 = vadd.f32 %v2174, %v2198
        %v2213 = vadd.f32 %v2175, %v2198
        %v2214 = vadd.f32 %v2176, %v2198
        %v2215 = vadd.f32 %v2177, %v2198
        %v2216 = vadd.f32 %v2178, %v2198
        %v2217 = vadd.f32 %v2179, %v2198
        %v2218 = vadd.f32 %v2180, %v2198
        %v2219 = vadd.f32 %v2181, %v2198
        %v2220 = vadd.f32 %v2182, %v2198
        %v2221 = vadd.f32 %v2183, %v2198
        %v2222 = vadd.f32 %v2184, %v2198
        %v2223 = vadd.f32 %v2185, %v2198
        %v2224 = vadd.f32 %v2186, %v2198
        %v2225 = vadd.f32 %v2187, %v2198
        %v2226 = vadd.f32 %v2188, %v2198
        %v2227 = vadd.f32 %v2189, %v2198
        %v2228 = vadd.f32 %v2190, %v2198
        %v2229 = vadd.f32 %v2191, %v2198
        %v2230 = vadd.f32 %v2192, %v2198
        %v2231 = vadd.f32 %v2193, %v2198
        %v2232 = vld [vmem:[#allocation7] sm:$0xff]
        %v2233 = vld [vmem:[#allocation7 + $0x8] sm:$0xff]
        %v2234 = vld [vmem:[#allocation7 + $0x10] sm:$0xff]
        %v2235 = vld [vmem:[#allocation7 + $0x18] sm:$0xff]
        %v2236 = vld [vmem:[#allocation7 + $0x20] sm:$0xff]
        %v2237 = vld [vmem:[#allocation7 + $0x28] sm:$0xff]
        %v2238 = vld [vmem:[#allocation7 + $0x30] sm:$0xff]
        %v2239 = vld [vmem:[#allocation7 + $0x38] sm:$0xff]
        %v2240 = vld [vmem:[#allocation7 + $0x40] sm:$0xff]
        %v2241 = vld [vmem:[#allocation7 + $0x48] sm:$0xff]
        %v2242 = vld [vmem:[#allocation7 + $0x50] sm:$0xff]
        %v2243 = vld [vmem:[#allocation7 + $0x58] sm:$0xff]
        %v2244 = vld [vmem:[#allocation7 + $0x60] sm:$0xff]
        %v2245 = vld [vmem:[#allocation7 + $0x68] sm:$0xff]
        %v2246 = vld [vmem:[#allocation7 + $0x70] sm:$0xff]
        %v2247 = vld [vmem:[#allocation7 + $0x78] sm:$0xff]
        %v2248 = vld [vmem:[%s8] sm:$0x1]
        %v2250 = vlaneseq
        %v2251 = vshrl.u32 %v2250, 7
        %v2252 = vsub.s32 0, %v2251
        %v2253 = vrot.slane %v2248, %v2252
        %2255 = vmatprep.subr.mxu0 0.0
        %2256 = vmatpush1.msra.mxu0 %v2232
        %2257 = vmatprep.subr.mxu0 0.0
        %2258 = vmatpush1.msra.mxu0 %v2233
        %2259 = vmatprep.subr.mxu0 0.0
        %2260 = vmatpush1.msra.mxu0 %v2234
        %2261 = vmatprep.subr.mxu0 0.0
        %2262 = vmatpush1.msra.mxu0 %v2235
        %2263 = vmatprep.subr.mxu0 0.0
        %2264 = vmatpush1.msra.mxu0 %v2236
        %2265 = vmatprep.subr.mxu0 0.0
        %2266 = vmatpush1.msra.mxu0 %v2237
        %2267 = vmatprep.subr.mxu0 0.0
        %2268 = vmatpush1.msra.mxu0 %v2238
        %2269 = vmatprep.subr.mxu0 0.0
        %2270 = vmatpush1.msra.mxu0 %v2239
        %2271 = vmatprep.subr.mxu0 0.0
        %2272 = vmatpush1.msra.mxu0 %v2240
        %2273 = vmatprep.subr.mxu0 0.0
        %2274 = vmatpush1.msra.mxu0 %v2241
        %2275 = vmatprep.subr.mxu0 0.0
        %2276 = vmatpush1.msra.mxu0 %v2242
        %2277 = vmatprep.subr.mxu0 0.0
        %2278 = vmatpush1.msra.mxu0 %v2243
        %2279 = vmatprep.subr.mxu0 0.0
        %2280 = vmatpush1.msra.mxu0 %v2244
        %2281 = vmatprep.subr.mxu0 0.0
        %2282 = vmatpush1.msra.mxu0 %v2245
        %2283 = vmatprep.subr.mxu0 0.0
        %2284 = vmatpush1.msra.mxu0 %v2246
        %2285 = vmatprep.subr.mxu0 0.0
        %2286 = vmatpush1.msra.mxu0 %v2247
        %2287 = vmatprep.subr.mxu0 0.0
        %2288 = vmatpush1.msra.mxu0 0.0
        %2289 = vmatprep.subr.mxu0 0.0
        %2290 = vmatpush1.msra.mxu0 0.0
        %2291 = vmatprep.subr.mxu0 0.0
        %2292 = vmatpush1.msra.mxu0 0.0
        %2293 = vmatprep.subr.mxu0 0.0
        %2294 = vmatpush1.msra.mxu0 0.0
        %2295 = vmatprep.subr.mxu0 0.0
        %2296 = vmatpush1.msra.mxu0 0.0
        %2297 = vmatprep.subr.mxu0 0.0
        %2298 = vmatpush1.msra.mxu0 0.0
        %2299 = vmatprep.subr.mxu0 0.0
        %2300 = vmatpush1.msra.mxu0 0.0
        %2301 = vmatprep.subr.mxu0 0.0
        %2302 = vmatpush1.msra.mxu0 0.0
        %2303 = vmatprep.subr.mxu0 0.0
        %2304 = vmatpush1.msra.mxu0 0.0
        %2305 = vmatprep.subr.mxu0 0.0
        %2306 = vmatpush1.msra.mxu0 0.0
        %2307 = vmatprep.subr.mxu0 0.0
        %2308 = vmatpush1.msra.mxu0 0.0
        %2309 = vmatprep.subr.mxu0 0.0
        %2310 = vmatpush1.msra.mxu0 0.0
        %2311 = vmatprep.subr.mxu0 0.0
        %2312 = vmatpush1.msra.mxu0 0.0
        %2313 = vmatprep.subr.mxu0 0.0
        %2314 = vmatpush1.msra.mxu0 0.0
        %2315 = vmatprep.subr.mxu0 0.0
        %2316 = vmatpush1.msra.mxu0 0.0
        %2317 = vmatprep.subr.mxu0 0.0
        %2318 = vmatpush1.msra.mxu0 0.0
        %2319 = vmatprep.mubr.f32.mxu0 0.0
        %2320 = vmatmul.mubr.f32.gmra.mrb[0].mxu0 %v2200
        %v2321 = vpop.f32.mrb[0].mxu0
        %v2322 = vadd.f32 %v2253, %v2321
        %v2323 = vpop.f32.mrb[0].mxu0
        %2324 = vmatprep.mubr.f32.mxu0 0.0
        %2325 = vmatmul.mubr.f32.gmra.mrb[0].mxu0 %v2201
        %v2326 = vpop.f32.mrb[0].mxu0
        %v2327 = vadd.f32 %v2253, %v2326
        %v2328 = vpop.f32.mrb[0].mxu0
        %2329 = vmatprep.mubr.f32.mxu0 0.0
        %2330 = vmatmul.mubr.f32.gmra.mrb[0].mxu0 %v2202
        %v2331 = vpop.f32.mrb[0].mxu0
        %v2332 = vadd.f32 %v2253, %v2331
        %v2333 = vpop.f32.mrb[0].mxu0
        %2334 = vmatprep.mubr.f32.mxu0 0.0
        %2335 = vmatmul.mubr.f32.gmra.mrb[0].mxu0 %v2203
        %v2336 = vpop.f32.mrb[0].mxu0
        %v2337 = vadd.f32 %v2253, %v2336
        %v2338 = vpop.f32.mrb[0].mxu0
        %2339 = vmatprep.mubr.f32.mxu0 0.0
        %2340 = vmatmul.mubr.f32.gmra.mrb[0].mxu0 %v2204
        %v2341 = vpop.f32.mrb[0].mxu0
        %v2342 = vadd.f32 %v2253, %v2341
        %v2343 = vpop.f32.mrb[0].mxu0
        %2344 = vmatprep.mubr.f32.mxu0 0.0
        %2345 = vmatmul.mubr.f32.gmra.mrb[0].mxu0 %v2205
        %v2346 = vpop.f32.mrb[0].mxu0
        %v2347 = vadd.f32 %v2253, %v2346
        %v2348 = vpop.f32.mrb[0].mxu0
        %2349 = vmatprep.mubr.f32.mxu0 0.0
        %2350 = vmatmul.mubr.f32.gmra.mrb[0].mxu0 %v2206
        %v2351 = vpop.f32.mrb[0].mxu0
        %v2352 = vadd.f32 %v2253, %v2351
        %v2353 = vpop.f32.mrb[0].mxu0
        %2354 = vmatprep.mubr.f32.mxu0 0.0
        %2355 = vmatmul.mubr.f32.gmra.mrb[0].mxu0 %v2207
        %v2356 = vpop.f32.mrb[0].mxu0
        %v2357 = vadd.f32 %v2253, %v2356
        %v2358 = vpop.f32.mrb[0].mxu0
        %2359 = vmatprep.mubr.f32.mxu0 0.0
        %2360 = vmatmul.mubr.f32.gmra.mrb[0].mxu0 %v2208
        %v2361 = vpop.f32.mrb[0].mxu0
        %v2362 = vadd.f32 %v2253, %v2361
        %v2363 = vpop.f32.mrb[0].mxu0
        %2364 = vmatprep.mubr.f32.mxu0 0.0
        %2365 = vmatmul.mubr.f32.gmra.mrb[0].mxu0 %v2209
        %v2366 = vpop.f32.mrb[0].mxu0
        %v2367 = vadd.f32 %v2253, %v2366
        %v2368 = vpop.f32.mrb[0].mxu0
        %2369 = vmatprep.mubr.f32.mxu0 0.0
        %2370 = vmatmul.mubr.f32.gmra.mrb[0].mxu0 %v2210
        %v2371 = vpop.f32.mrb[0].mxu0
        %v2372 = vadd.f32 %v2253, %v2371
        %v2373 = vpop.f32.mrb[0].mxu0
        %2374 = vmatprep.mubr.f32.mxu0 0.0
        %2375 = vmatmul.mubr.f32.gmra.mrb[0].mxu0 %v2211
        %v2376 = vpop.f32.mrb[0].mxu0
        %v2377 = vadd.f32 %v2253, %v2376
        %v2378 = vpop.f32.mrb[0].mxu0
        %2379 = vmatprep.mubr.f32.mxu0 0.0
        %2380 = vmatmul.mubr.f32.gmra.mrb[0].mxu0 %v2212
        %v2381 = vpop.f32.mrb[0].mxu0
        %v2382 = vadd.f32 %v2253, %v2381
        %v2383 = vpop.f32.mrb[0].mxu0
        %2384 = vmatprep.mubr.f32.mxu0 0.0
        %2385 = vmatmul.mubr.f32.gmra.mrb[0].mxu0 %v2213
        %v2386 = vpop.f32.mrb[0].mxu0
        %v2387 = vadd.f32 %v2253, %v2386
        %v2388 = vpop.f32.mrb[0].mxu0
        %2389 = vmatprep.mubr.f32.mxu0 0.0
        %2390 = vmatmul.mubr.f32.gmra.mrb[0].mxu0 %v2214
        %v2391 = vpop.f32.mrb[0].mxu0
        %v2392 = vadd.f32 %v2253, %v2391
        %v2393 = vpop.f32.mrb[0].mxu0
        %2394 = vmatprep.mubr.f32.mxu0 0.0
        %2395 = vmatmul.mubr.f32.gmra.mrb[0].mxu0 %v2215
        %v2396 = vpop.f32.mrb[0].mxu0
        %v2397 = vadd.f32 %v2253, %v2396
        %v2398 = vpop.f32.mrb[0].mxu0
        %2399 = vmatprep.mubr.f32.mxu0 0.0
        %2400 = vmatmul.mubr.f32.gmra.mrb[0].mxu0 %v2216
        %v2401 = vpop.f32.mrb[0].mxu0
        %v2402 = vadd.f32 %v2253, %v2401
        %v2403 = vpop.f32.mrb[0].mxu0
        %2404 = vmatprep.mubr.f32.mxu0 0.0
        %2405 = vmatmul.mubr.f32.gmra.mrb[0].mxu0 %v2217
        %v2406 = vpop.f32.mrb[0].mxu0
        %v2407 = vadd.f32 %v2253, %v2406
        %v2408 = vpop.f32.mrb[0].mxu0
        %2409 = vmatprep.mubr.f32.mxu0 0.0
        %2410 = vmatmul.mubr.f32.gmra.mrb[0].mxu0 %v2218
        %v2411 = vpop.f32.mrb[0].mxu0
        %v2412 = vadd.f32 %v2253, %v2411
        %v2413 = vpop.f32.mrb[0].mxu0
        %2414 = vmatprep.mubr.f32.mxu0 0.0
        %2415 = vmatmul.mubr.f32.gmra.mrb[0].mxu0 %v2219
        %v2416 = vpop.f32.mrb[0].mxu0
        %v2417 = vadd.f32 %v2253, %v2416
        %v2418 = vpop.f32.mrb[0].mxu0
        %2419 = vmatprep.mubr.f32.mxu0 0.0
        %2420 = vmatmul.mubr.f32.gmra.mrb[0].mxu0 %v2220
        %v2421 = vpop.f32.mrb[0].mxu0
        %v2422 = vadd.f32 %v2253, %v2421
        %v2423 = vpop.f32.mrb[0].mxu0
        %2424 = vmatprep.mubr.f32.mxu0 0.0
        %2425 = vmatmul.mubr.f32.gmra.mrb[0].mxu0 %v2221
        %v2426 = vpop.f32.mrb[0].mxu0
        %v2427 = vadd.f32 %v2253, %v2426
        %v2428 = vpop.f32.mrb[0].mxu0
        %2429 = vmatprep.mubr.f32.mxu0 0.0
        %2430 = vmatmul.mubr.f32.gmra.mrb[0].mxu0 %v2222
        %v2431 = vpop.f32.mrb[0].mxu0
        %v2432 = vadd.f32 %v2253, %v2431
        %v2433 = vpop.f32.mrb[0].mxu0
        %2434 = vmatprep.mubr.f32.mxu0 0.0
        %2435 = vmatmul.mubr.f32.gmra.mrb[0].mxu0 %v2223
        %v2436 = vpop.f32.mrb[0].mxu0
        %v2437 = vadd.f32 %v2253, %v2436
        %v2438 = vpop.f32.mrb[0].mxu0
        %2439 = vmatprep.mubr.f32.mxu0 0.0
        %2440 = vmatmul.mubr.f32.gmra.mrb[0].mxu0 %v2224
        %v2441 = vpop.f32.mrb[0].mxu0
        %v2442 = vadd.f32 %v2253, %v2441
        %v2443 = vpop.f32.mrb[0].mxu0
        %2444 = vmatprep.mubr.f32.mxu0 0.0
        %2445 = vmatmul.mubr.f32.gmra.mrb[0].mxu0 %v2225
        %v2446 = vpop.f32.mrb[0].mxu0
        %v2447 = vadd.f32 %v2253, %v2446
        %v2448 = vpop.f32.mrb[0].mxu0
        %2449 = vmatprep.mubr.f32.mxu0 0.0
        %2450 = vmatmul.mubr.f32.gmra.mrb[0].mxu0 %v2226
        %v2451 = vpop.f32.mrb[0].mxu0
        %v2452 = vadd.f32 %v2253, %v2451
        %v2453 = vpop.f32.mrb[0].mxu0
        %2454 = vmatprep.mubr.f32.mxu0 0.0
        %2455 = vmatmul.mubr.f32.gmra.mrb[0].mxu0 %v2227
        %v2456 = vpop.f32.mrb[0].mxu0
        %v2457 = vadd.f32 %v2253, %v2456
        %v2458 = vpop.f32.mrb[0].mxu0
        %2459 = vmatprep.mubr.f32.mxu0 0.0
        %2460 = vmatmul.mubr.f32.gmra.mrb[0].mxu0 %v2228
        %v2461 = vpop.f32.mrb[0].mxu0
        %v2462 = vadd.f32 %v2253, %v2461
        %v2463 = vpop.f32.mrb[0].mxu0
        %2464 = vmatprep.mubr.f32.mxu0 0.0
        %2465 = vmatmul.mubr.f32.gmra.mrb[0].mxu0 %v2229
        %v2466 = vpop.f32.mrb[0].mxu0
        %v2467 = vadd.f32 %v2253, %v2466
        %v2468 = vpop.f32.mrb[0].mxu0
        %2469 = vmatprep.mubr.f32.mxu0 0.0
        %2470 = vmatmul.mubr.f32.gmra.mrb[0].mxu0 %v2230
        %v2471 = vpop.f32.mrb[0].mxu0
        %v2472 = vadd.f32 %v2253, %v2471
        %v2473 = vpop.f32.mrb[0].mxu0
        %2474 = vmatprep.mubr.f32.mxu0 0.0
        %2475 = vmatmul.mubr.f32.gmra.mrb[0].mxu0 %v2231
        %v2476 = vpop.f32.mrb[0].mxu0
        %v2477 = vadd.f32 %v2253, %v2476
        %v2478 = vpop.f32.mrb[0].mxu0
        %2479 = vdwg.mxu0
        %v2480 = vld [vmem:[#allocation8] sm:$0xff]
        %v2481 = vld [vmem:[#allocation8 + $0x8] sm:$0xff]
        %v2482 = vld [vmem:[#allocation8 + $0x10] sm:$0xff]
        %v2483 = vld [vmem:[#allocation8 + $0x18] sm:$0xff]
        %v2484 = vld [vmem:[#allocation8 + $0x20] sm:$0xff]
        %v2485 = vld [vmem:[#allocation8 + $0x28] sm:$0xff]
        %v2486 = vld [vmem:[#allocation8 + $0x30] sm:$0xff]
        %v2487 = vld [vmem:[#allocation8 + $0x38] sm:$0xff]
        %v2488 = vld [vmem:[#allocation8 + $0x40] sm:$0xff]
        %v2489 = vld [vmem:[#allocation8 + $0x48] sm:$0xff]
        %v2490 = vld [vmem:[#allocation8 + $0x50] sm:$0xff]
        %v2491 = vld [vmem:[#allocation8 + $0x58] sm:$0xff]
        %v2492 = vld [vmem:[#allocation8 + $0x60] sm:$0xff]
        %v2493 = vld [vmem:[#allocation8 + $0x68] sm:$0xff]
        %v2494 = vld [vmem:[#allocation8 + $0x70] sm:$0xff]
        %v2495 = vld [vmem:[#allocation8 + $0x78] sm:$0xff]
        %v2496 = vld [vmem:[%s10] sm:$0x1]
        %v2498 = vlaneseq
        %v2499 = vshrl.u32 %v2498, 7
        %v2500 = vsub.s32 0, %v2499
        %v2501 = vrot.slane %v2496, %v2500
        %vm2535 = vcmask 1041409
        %v2536 = vsel %vm2535, %v494, %v488
        %vm2537 = vcmask 1042434
        %v2538 = vsel %vm2537, %v500, %v2536
        %vm2539 = vcmask 1043459
        %v2540 = vsel %vm2539, %v506, %v2538
        %vm2541 = vcmask 1044484
        %v2542 = vsel %vm2541, %v512, %v2540
        %vm2543 = vcmask 1045509
        %v2544 = vsel %vm2543, %v518, %v2542
        %vm2545 = vcmask 1046534
        %v2546 = vsel %vm2545, %v524, %v2544
        %vm2547 = vcmask 1047559
        %v2548 = vsel %vm2547, %v530, %v2546
        %v2549 = vsel %vm2535, %v542, %v536
        %v2550 = vsel %vm2537, %v548, %v2549
        %v2551 = vsel %vm2539, %v554, %v2550
        %v2552 = vsel %vm2541, %v560, %v2551
        %v2553 = vsel %vm2543, %v566, %v2552
        %v2554 = vsel %vm2545, %v572, %v2553
        %v2555 = vsel %vm2547, %v578, %v2554
        %v2556 = vsel %vm2535, %v590, %v584
        %v2557 = vsel %vm2537, %v596, %v2556
        %v2558 = vsel %vm2539, %v602, %v2557
        %v2559 = vsel %vm2541, %v608, %v2558
        %v2560 = vsel %vm2543, %v614, %v2559
        %v2561 = vsel %vm2545, %v620, %v2560
        %v2562 = vsel %vm2547, %v626, %v2561
        %v2563 = vsel %vm2535, %v638, %v632
        %v2564 = vsel %vm2537, %v644, %v2563
        %v2565 = vsel %vm2539, %v650, %v2564
        %v2566 = vsel %vm2541, %v656, %v2565
        %v2567 = vsel %vm2543, %v662, %v2566
        %v2568 = vsel %vm2545, %v668, %v2567
        %v2569 = vsel %vm2547, %v674, %v2568
        %2574 = vmatprep.subr.mxu0 0.0
        %2575 = vmatpush1.msra.mxu0 %v2480
        %2576 = vmatprep.subr.mxu0 0.0
        %2577 = vmatpush1.msra.mxu0 %v2481
        %2578 = vmatprep.subr.mxu0 0.0
        %2579 = vmatpush1.msra.mxu0 %v2482
        %2580 = vmatprep.subr.mxu0 0.0
        %2581 = vmatpush1.msra.mxu0 %v2483
        %2582 = vmatprep.subr.mxu0 0.0
        %2583 = vmatpush1.msra.mxu0 %v2484
        %2584 = vmatprep.subr.mxu0 0.0
        %2585 = vmatpush1.msra.mxu0 %v2485
        %2586 = vmatprep.subr.mxu0 0.0
        %2587 = vmatpush1.msra.mxu0 %v2486
        %2588 = vmatprep.subr.mxu0 0.0
        %2589 = vmatpush1.msra.mxu0 %v2487
        %2590 = vmatprep.subr.mxu0 0.0
        %2591 = vmatpush1.msra.mxu0 %v2488
        %2592 = vmatprep.subr.mxu0 0.0
        %2593 = vmatpush1.msra.mxu0 %v2489
        %2594 = vmatprep.subr.mxu0 0.0
        %2595 = vmatpush1.msra.mxu0 %v2490
        %2596 = vmatprep.subr.mxu0 0.0
        %2597 = vmatpush1.msra.mxu0 %v2491
        %2598 = vmatprep.subr.mxu0 0.0
        %2599 = vmatpush1.msra.mxu0 %v2492
        %2600 = vmatprep.subr.mxu0 0.0
        %2601 = vmatpush1.msra.mxu0 %v2493
        %2602 = vmatprep.subr.mxu0 0.0
        %2603 = vmatpush1.msra.mxu0 %v2494
        %2604 = vmatprep.subr.mxu0 0.0
        %2605 = vmatpush1.msra.mxu0 %v2495
        %2606 = vmatprep.subr.mxu0 0.0
        %2607 = vmatpush1.msra.mxu0 0.0
        %2608 = vmatprep.subr.mxu0 0.0
        %2609 = vmatpush1.msra.mxu0 0.0
        %2610 = vmatprep.subr.mxu0 0.0
        %2611 = vmatpush1.msra.mxu0 0.0
        %2612 = vmatprep.subr.mxu0 0.0
        %2613 = vmatpush1.msra.mxu0 0.0
        %2614 = vmatprep.subr.mxu0 0.0
        %2615 = vmatpush1.msra.mxu0 0.0
        %2616 = vmatprep.subr.mxu0 0.0
        %2617 = vmatpush1.msra.mxu0 0.0
        %2618 = vmatprep.subr.mxu0 0.0
        %2619 = vmatpush1.msra.mxu0 0.0
        %2620 = vmatprep.subr.mxu0 0.0
        %2621 = vmatpush1.msra.mxu0 0.0
        %2622 = vmatprep.subr.mxu0 0.0
        %2623 = vmatpush1.msra.mxu0 0.0
        %2624 = vmatprep.subr.mxu0 0.0
        %2625 = vmatpush1.msra.mxu0 0.0
        %2626 = vmatprep.subr.mxu0 0.0
        %2627 = vmatpush1.msra.mxu0 0.0
        %2628 = vmatprep.subr.mxu0 0.0
        %2629 = vmatpush1.msra.mxu0 0.0
        %2630 = vmatprep.subr.mxu0 0.0
        %2631 = vmatpush1.msra.mxu0 0.0
        %2632 = vmatprep.subr.mxu0 0.0
        %2633 = vmatpush1.msra.mxu0 0.0
        %2634 = vmatprep.subr.mxu0 0.0
        %2635 = vmatpush1.msra.mxu0 0.0
        %2636 = vmatprep.subr.mxu0 0.0
        %2637 = vmatpush1.msra.mxu0 0.0
        %2638 = vmatprep.mubr.f32.mxu0 0.0
        %2639 = vmatmul.mubr.f32.gmra.mrb[0].mxu0 %v2548
        %v2640 = vpop.f32.mrb[0].mxu0
        %v2641 = vadd.f32 %v2501, %v2640
        %v2642 = vpop.f32.mrb[0].mxu0
        %2643 = vmatprep.mubr.f32.mxu0 0.0
        %2644 = vmatmul.mubr.f32.gmra.mrb[0].mxu0 %v2555
        %v2645 = vpop.f32.mrb[0].mxu0
        %v2646 = vadd.f32 %v2501, %v2645
        %v2647 = vpop.f32.mrb[0].mxu0
        %2648 = vmatprep.mubr.f32.mxu0 0.0
        %2649 = vmatmul.mubr.f32.gmra.mrb[0].mxu0 %v2562
        %v2650 = vpop.f32.mrb[0].mxu0
        %v2651 = vadd.f32 %v2501, %v2650
        %v2652 = vpop.f32.mrb[0].mxu0
        %2653 = vmatprep.mubr.f32.mxu0 0.0
        %2654 = vmatmul.mubr.f32.gmra.mrb[0].mxu0 %v2569
        %v2655 = vpop.f32.mrb[0].mxu0
        %v2656 = vadd.f32 %v2501, %v2655
        %v2657 = vpop.f32.mrb[0].mxu0
        %2658 = vdwg.mxu0
        %v2659 = vtanh.pop %v2641
        %v2660 = vtanh.pop %v2646
        %v2661 = vtanh.pop %v2651
        %v2662 = vtanh.pop %v2656
        %v2667 = vcombine.high %v2659, %v2659
        %v2669 = vunpack.c.l.s4 1966171168
        %v2670 = vunpack.c.0.s8 %v2669
        %v2671 = vlaneseq
        %v2672 = vshrl.u32 %v2671, 7
        %v2673 = vsub.s32 %v2670, %v2672
        %v2674 = vrot.slane %v2659, %v2673
        %v2676 = vunpack.c.l.s4 1966171168
        %v2677 = vunpack.c.0.s8 %v2676
        %v2678 = vlaneseq
        %v2679 = vshrl.u32 %v2678, 7
        %v2680 = vsub.s32 %v2677, %v2679
        %v2681 = vrot.slane %v2667, %v2680
        %v2682 = vcombine.high %v2674, %v2674
        %v2683 = vcombine.high %v2681, %v2681
        %v2685 = vunpack.c.l.s4 1966171168
        %v2686 = vunpack.c.0.s8 %v2685
        %v2687 = vlaneseq
        %v2688 = vshrl.u32 %v2687, 7
        %v2689 = vsub.s32 %v2686, %v2688
        %v2690 = vrot.slane %v2674, %v2689
        %v2692 = vunpack.c.l.s4 1966171168
        %v2693 = vunpack.c.0.s8 %v2692
        %v2694 = vlaneseq
        %v2695 = vshrl.u32 %v2694, 7
        %v2696 = vsub.s32 %v2693, %v2695
        %v2697 = vrot.slane %v2681, %v2696
        %v2699 = vunpack.c.l.s4 1966171168
        %v2700 = vunpack.c.0.s8 %v2699
        %v2701 = vlaneseq
        %v2702 = vshrl.u32 %v2701, 7
        %v2703 = vsub.s32 %v2700, %v2702
        %v2704 = vrot.slane %v2682, %v2703
        %v2706 = vunpack.c.l.s4 1966171168
        %v2707 = vunpack.c.0.s8 %v2706
        %v2708 = vlaneseq
        %v2709 = vshrl.u32 %v2708, 7
        %v2710 = vsub.s32 %v2707, %v2709
        %v2711 = vrot.slane %v2683, %v2710
        %v2712 = vcombine.high %v2690, %v2690
        %v2713 = vcombine.high %v2697, %v2697
        %v2714 = vcombine.high %v2704, %v2704
        %v2715 = vcombine.high %v2711, %v2711
        %v2716 = vcombine.high %v2660, %v2660
        %v2718 = vunpack.c.l.s4 1966171168
        %v2719 = vunpack.c.0.s8 %v2718
        %v2720 = vlaneseq
        %v2721 = vshrl.u32 %v2720, 7
        %v2722 = vsub.s32 %v2719, %v2721
        %v2723 = vrot.slane %v2660, %v2722
        %v2725 = vunpack.c.l.s4 1966171168
        %v2726 = vunpack.c.0.s8 %v2725
        %v2727 = vlaneseq
        %v2728 = vshrl.u32 %v2727, 7
        %v2729 = vsub.s32 %v2726, %v2728
        %v2730 = vrot.slane %v2716, %v2729
        %v2731 = vcombine.high %v2723, %v2723
        %v2732 = vcombine.high %v2730, %v2730
        %v2734 = vunpack.c.l.s4 1966171168
        %v2735 = vunpack.c.0.s8 %v2734
        %v2736 = vlaneseq
        %v2737 = vshrl.u32 %v2736, 7
        %v2738 = vsub.s32 %v2735, %v2737
        %v2739 = vrot.slane %v2723, %v2738
        %v2741 = vunpack.c.l.s4 1966171168
        %v2742 = vunpack.c.0.s8 %v2741
        %v2743 = vlaneseq
        %v2744 = vshrl.u32 %v2743, 7
        %v2745 = vsub.s32 %v2742, %v2744
        %v2746 = vrot.slane %v2730, %v2745
        %v2748 = vunpack.c.l.s4 1966171168
        %v2749 = vunpack.c.0.s8 %v2748
        %v2750 = vlaneseq
        %v2751 = vshrl.u32 %v2750, 7
        %v2752 = vsub.s32 %v2749, %v2751
        %v2753 = vrot.slane %v2731, %v2752
        %v2755 = vunpack.c.l.s4 1966171168
        %v2756 = vunpack.c.0.s8 %v2755
        %v2757 = vlaneseq
        %v2758 = vshrl.u32 %v2757, 7
        %v2759 = vsub.s32 %v2756, %v2758
        %v2760 = vrot.slane %v2732, %v2759
        %v2761 = vcombine.high %v2739, %v2739
        %v2762 = vcombine.high %v2746, %v2746
        %v2763 = vcombine.high %v2753, %v2753
        %v2764 = vcombine.high %v2760, %v2760
        %v2765 = vcombine.high %v2661, %v2661
        %v2767 = vunpack.c.l.s4 1966171168
        %v2768 = vunpack.c.0.s8 %v2767
        %v2769 = vlaneseq
        %v2770 = vshrl.u32 %v2769, 7
        %v2771 = vsub.s32 %v2768, %v2770
        %v2772 = vrot.slane %v2661, %v2771
        %v2774 = vunpack.c.l.s4 1966171168
        %v2775 = vunpack.c.0.s8 %v2774
        %v2776 = vlaneseq
        %v2777 = vshrl.u32 %v2776, 7
        %v2778 = vsub.s32 %v2775, %v2777
        %v2779 = vrot.slane %v2765, %v2778
        %v2780 = vcombine.high %v2772, %v2772
        %v2781 = vcombine.high %v2779, %v2779
        %v2783 = vunpack.c.l.s4 1966171168
        %v2784 = vunpack.c.0.s8 %v2783
        %v2785 = vlaneseq
        %v2786 = vshrl.u32 %v2785, 7
        %v2787 = vsub.s32 %v2784, %v2786
        %v2788 = vrot.slane %v2772, %v2787
        %v2790 = vunpack.c.l.s4 1966171168
        %v2791 = vunpack.c.0.s8 %v2790
        %v2792 = vlaneseq
        %v2793 = vshrl.u32 %v2792, 7
        %v2794 = vsub.s32 %v2791, %v2793
        %v2795 = vrot.slane %v2779, %v2794
        %v2797 = vunpack.c.l.s4 1966171168
        %v2798 = vunpack.c.0.s8 %v2797
        %v2799 = vlaneseq
        %v2800 = vshrl.u32 %v2799, 7
        %v2801 = vsub.s32 %v2798, %v2800
        %v2802 = vrot.slane %v2780, %v2801
        %v2804 = vunpack.c.l.s4 1966171168
        %v2805 = vunpack.c.0.s8 %v2804
        %v2806 = vlaneseq
        %v2807 = vshrl.u32 %v2806, 7
        %v2808 = vsub.s32 %v2805, %v2807
        %v2809 = vrot.slane %v2781, %v2808
        %v2810 = vcombine.high %v2788, %v2788
        %v2811 = vcombine.high %v2795, %v2795
        %v2812 = vcombine.high %v2802, %v2802
        %v2813 = vcombine.high %v2809, %v2809
        %v2814 = vcombine.high %v2662, %v2662
        %v2816 = vunpack.c.l.s4 1966171168
        %v2817 = vunpack.c.0.s8 %v2816
        %v2818 = vlaneseq
        %v2819 = vshrl.u32 %v2818, 7
        %v2820 = vsub.s32 %v2817, %v2819
        %v2821 = vrot.slane %v2662, %v2820
        %v2823 = vunpack.c.l.s4 1966171168
        %v2824 = vunpack.c.0.s8 %v2823
        %v2825 = vlaneseq
        %v2826 = vshrl.u32 %v2825, 7
        %v2827 = vsub.s32 %v2824, %v2826
        %v2828 = vrot.slane %v2814, %v2827
        %v2829 = vcombine.high %v2821, %v2821
        %v2830 = vcombine.high %v2828, %v2828
        %v2832 = vunpack.c.l.s4 1966171168
        %v2833 = vunpack.c.0.s8 %v2832
        %v2834 = vlaneseq
        %v2835 = vshrl.u32 %v2834, 7
        %v2836 = vsub.s32 %v2833, %v2835
        %v2837 = vrot.slane %v2821, %v2836
        %v2839 = vunpack.c.l.s4 1966171168
        %v2840 = vunpack.c.0.s8 %v2839
        %v2841 = vlaneseq
        %v2842 = vshrl.u32 %v2841, 7
        %v2843 = vsub.s32 %v2840, %v2842
        %v2844 = vrot.slane %v2828, %v2843
        %v2846 = vunpack.c.l.s4 1966171168
        %v2847 = vunpack.c.0.s8 %v2846
        %v2848 = vlaneseq
        %v2849 = vshrl.u32 %v2848, 7
        %v2850 = vsub.s32 %v2847, %v2849
        %v2851 = vrot.slane %v2829, %v2850
        %v2853 = vunpack.c.l.s4 1966171168
        %v2854 = vunpack.c.0.s8 %v2853
        %v2855 = vlaneseq
        %v2856 = vshrl.u32 %v2855, 7
        %v2857 = vsub.s32 %v2854, %v2856
        %v2858 = vrot.slane %v2830, %v2857
        %v2859 = vcombine.high %v2837, %v2837
        %v2860 = vcombine.high %v2844, %v2844
        %v2861 = vcombine.high %v2851, %v2851
        %v2862 = vcombine.high %v2858, %v2858
        %v2863 = vlaneseq
        %v2864 = vshrl.u32 %v2863, 7
        %v2865 = vsub.s32 0, %v2864
        %v2866 = vrot.slane %v2690, %v2865
        %v2867 = vlaneseq
        %v2868 = vshrl.u32 %v2867, 7
        %v2869 = vsub.s32 0, %v2868
        %v2870 = vrot.slane %v2704, %v2869
        %v2871 = vlaneseq
        %v2872 = vshrl.u32 %v2871, 7
        %v2873 = vsub.s32 0, %v2872
        %v2874 = vrot.slane %v2712, %v2873
        %v2875 = vlaneseq
        %v2876 = vshrl.u32 %v2875, 7
        %v2877 = vsub.s32 0, %v2876
        %v2878 = vrot.slane %v2714, %v2877
        %v2879 = vlaneseq
        %v2880 = vshrl.u32 %v2879, 7
        %v2881 = vsub.s32 0, %v2880
        %v2882 = vrot.slane %v2697, %v2881
        %v2883 = vlaneseq
        %v2884 = vshrl.u32 %v2883, 7
        %v2885 = vsub.s32 0, %v2884
        %v2886 = vrot.slane %v2711, %v2885
        %v2887 = vlaneseq
        %v2888 = vshrl.u32 %v2887, 7
        %v2889 = vsub.s32 0, %v2888
        %v2890 = vrot.slane %v2713, %v2889
        %v2891 = vlaneseq
        %v2892 = vshrl.u32 %v2891, 7
        %v2893 = vsub.s32 0, %v2892
        %v2894 = vrot.slane %v2715, %v2893
        %v2895 = vlaneseq
        %v2896 = vshrl.u32 %v2895, 7
        %v2897 = vsub.s32 0, %v2896
        %v2898 = vrot.slane %v2739, %v2897
        %v2899 = vlaneseq
        %v2900 = vshrl.u32 %v2899, 7
        %v2901 = vsub.s32 0, %v2900
        %v2902 = vrot.slane %v2753, %v2901
        %v2903 = vlaneseq
        %v2904 = vshrl.u32 %v2903, 7
        %v2905 = vsub.s32 0, %v2904
        %v2906 = vrot.slane %v2761, %v2905
        %v2907 = vlaneseq
        %v2908 = vshrl.u32 %v2907, 7
        %v2909 = vsub.s32 0, %v2908
        %v2910 = vrot.slane %v2763, %v2909
        %v2911 = vlaneseq
        %v2912 = vshrl.u32 %v2911, 7
        %v2913 = vsub.s32 0, %v2912
        %v2914 = vrot.slane %v2746, %v2913
        %v2915 = vlaneseq
        %v2916 = vshrl.u32 %v2915, 7
        %v2917 = vsub.s32 0, %v2916
        %v2918 = vrot.slane %v2760, %v2917
        %v2919 = vlaneseq
        %v2920 = vshrl.u32 %v2919, 7
        %v2921 = vsub.s32 0, %v2920
        %v2922 = vrot.slane %v2762, %v2921
        %v2923 = vlaneseq
        %v2924 = vshrl.u32 %v2923, 7
        %v2925 = vsub.s32 0, %v2924
        %v2926 = vrot.slane %v2764, %v2925
        %v2927 = vlaneseq
        %v2928 = vshrl.u32 %v2927, 7
        %v2929 = vsub.s32 0, %v2928
        %v2930 = vrot.slane %v2788, %v2929
        %v2931 = vlaneseq
        %v2932 = vshrl.u32 %v2931, 7
        %v2933 = vsub.s32 0, %v2932
        %v2934 = vrot.slane %v2802, %v2933
        %v2935 = vlaneseq
        %v2936 = vshrl.u32 %v2935, 7
        %v2937 = vsub.s32 0, %v2936
        %v2938 = vrot.slane %v2810, %v2937
        %v2939 = vlaneseq
        %v2940 = vshrl.u32 %v2939, 7
        %v2941 = vsub.s32 0, %v2940
        %v2942 = vrot.slane %v2812, %v2941
        %v2943 = vlaneseq
        %v2944 = vshrl.u32 %v2943, 7
        %v2945 = vsub.s32 0, %v2944
        %v2946 = vrot.slane %v2795, %v2945
        %v2947 = vlaneseq
        %v2948 = vshrl.u32 %v2947, 7
        %v2949 = vsub.s32 0, %v2948
        %v2950 = vrot.slane %v2809, %v2949
        %v2951 = vlaneseq
        %v2952 = vshrl.u32 %v2951, 7
        %v2953 = vsub.s32 0, %v2952
        %v2954 = vrot.slane %v2811, %v2953
        %v2955 = vlaneseq
        %v2956 = vshrl.u32 %v2955, 7
        %v2957 = vsub.s32 0, %v2956
        %v2958 = vrot.slane %v2813, %v2957
        %v2959 = vlaneseq
        %v2960 = vshrl.u32 %v2959, 7
        %v2961 = vsub.s32 0, %v2960
        %v2962 = vrot.slane %v2837, %v2961
        %v2963 = vlaneseq
        %v2964 = vshrl.u32 %v2963, 7
        %v2965 = vsub.s32 0, %v2964
        %v2966 = vrot.slane %v2851, %v2965
        %v2967 = vlaneseq
        %v2968 = vshrl.u32 %v2967, 7
        %v2969 = vsub.s32 0, %v2968
        %v2970 = vrot.slane %v2859, %v2969
        %v2971 = vlaneseq
        %v2972 = vshrl.u32 %v2971, 7
        %v2973 = vsub.s32 0, %v2972
        %v2974 = vrot.slane %v2861, %v2973
        %v2975 = vlaneseq
        %v2976 = vshrl.u32 %v2975, 7
        %v2977 = vsub.s32 0, %v2976
        %v2978 = vrot.slane %v2844, %v2977
        %v2979 = vlaneseq
        %v2980 = vshrl.u32 %v2979, 7
        %v2981 = vsub.s32 0, %v2980
        %v2982 = vrot.slane %v2858, %v2981
        %v2983 = vlaneseq
        %v2984 = vshrl.u32 %v2983, 7
        %v2985 = vsub.s32 0, %v2984
        %v2986 = vrot.slane %v2860, %v2985
        %v2987 = vlaneseq
        %v2988 = vshrl.u32 %v2987, 7
        %v2989 = vsub.s32 0, %v2988
        %v2990 = vrot.slane %v2862, %v2989
        %v3023 = vmul.f32 %v2322, %v2866
        %v3024 = vmul.f32 %v2327, %v2870
        %v3025 = vmul.f32 %v2332, %v2874
        %v3026 = vmul.f32 %v2337, %v2878
        %v3027 = vmul.f32 %v2342, %v2882
        %v3028 = vmul.f32 %v2347, %v2886
        %v3029 = vmul.f32 %v2352, %v2890
        %v3030 = vmul.f32 %v2357, %v2894
        %v3031 = vmul.f32 %v2362, %v2898
        %v3032 = vmul.f32 %v2367, %v2902
        %v3033 = vmul.f32 %v2372, %v2906
        %v3034 = vmul.f32 %v2377, %v2910
        %v3035 = vmul.f32 %v2382, %v2914
        %v3036 = vmul.f32 %v2387, %v2918
        %v3037 = vmul.f32 %v2392, %v2922
        %v3038 = vmul.f32 %v2397, %v2926
        %v3039 = vmul.f32 %v2402, %v2930
        %v3040 = vmul.f32 %v2407, %v2934
        %v3041 = vmul.f32 %v2412, %v2938
        %v3042 = vmul.f32 %v2417, %v2942
        %v3043 = vmul.f32 %v2422, %v2946
        %v3044 = vmul.f32 %v2427, %v2950
        %v3045 = vmul.f32 %v2432, %v2954
        %v3046 = vmul.f32 %v2437, %v2958
        %v3047 = vmul.f32 %v2442, %v2962
        %v3048 = vmul.f32 %v2447, %v2966
        %v3049 = vmul.f32 %v2452, %v2970
        %v3050 = vmul.f32 %v2457, %v2974
        %v3051 = vmul.f32 %v2462, %v2978
        %v3052 = vmul.f32 %v2467, %v2982
        %v3053 = vmul.f32 %v2472, %v2986
        %v3054 = vmul.f32 %v2477, %v2990
        %v3055 = vadd.f32 %v451, %v3023
        %v3056 = vadd.f32 %v452, %v3024
        %v3057 = vadd.f32 %v453, %v3025
        %v3058 = vadd.f32 %v454, %v3026
        %v3059 = vadd.f32 %v455, %v3027
        %v3060 = vadd.f32 %v456, %v3028
        %v3061 = vadd.f32 %v457, %v3029
        %v3062 = vadd.f32 %v458, %v3030
        %v3063 = vadd.f32 %v459, %v3031
        %v3064 = vadd.f32 %v460, %v3032
        %v3065 = vadd.f32 %v461, %v3033
        %v3066 = vadd.f32 %v462, %v3034
        %v3067 = vadd.f32 %v463, %v3035
        %v3068 = vadd.f32 %v464, %v3036
        %v3069 = vadd.f32 %v465, %v3037
        %v3070 = vadd.f32 %v466, %v3038
        %v3071 = vadd.f32 %v467, %v3039
        %v3072 = vadd.f32 %v468, %v3040
        %v3073 = vadd.f32 %v469, %v3041
        %v3074 = vadd.f32 %v470, %v3042
        %v3075 = vadd.f32 %v471, %v3043
        %v3076 = vadd.f32 %v472, %v3044
        %v3077 = vadd.f32 %v473, %v3045
        %v3078 = vadd.f32 %v474, %v3046
        %v3079 = vadd.f32 %v475, %v3047
        %v3080 = vadd.f32 %v476, %v3048
        %v3081 = vadd.f32 %v477, %v3049
        %v3082 = vadd.f32 %v478, %v3050
        %v3083 = vadd.f32 %v479, %v3051
        %v3084 = vadd.f32 %v480, %v3052
        %v3085 = vadd.f32 %v481, %v3053
        %v3086 = vadd.f32 %v482, %v3054
        %3087 = vst [vmem:[%s448] sm:$0xff] %v3055
        %3088 = vst [vmem:[%s448 + $0x8] sm:$0xff] %v3056
        %3089 = vst [vmem:[%s448 + $0x10] sm:$0xff] %v3057
        %3090 = vst [vmem:[%s448 + $0x18] sm:$0xff] %v3058
        %3091 = vst [vmem:[%s448 + $0x20] sm:$0xff] %v3059
        %3092 = vst [vmem:[%s448 + $0x28] sm:$0xff] %v3060
        %3093 = vst [vmem:[%s448 + $0x30] sm:$0xff] %v3061
        %3094 = vst [vmem:[%s448 + $0x38] sm:$0xff] %v3062
        %3095 = vst [vmem:[%s448 + $0x40] sm:$0xff] %v3063
        %3096 = vst [vmem:[%s448 + $0x48] sm:$0xff] %v3064
        %3097 = vst [vmem:[%s448 + $0x50] sm:$0xff] %v3065
        %3098 = vst [vmem:[%s448 + $0x58] sm:$0xff] %v3066
        %3099 = vst [vmem:[%s448 + $0x60] sm:$0xff] %v3067
        %3100 = vst [vmem:[%s448 + $0x68] sm:$0xff] %v3068
        %3101 = vst [vmem:[%s448 + $0x70] sm:$0xff] %v3069
        %3102 = vst [vmem:[%s448 + $0x78] sm:$0xff] %v3070
        %3103 = vst [vmem:[%s448 + $0x80] sm:$0xff] %v3071
        %3104 = vst [vmem:[%s448 + $0x88] sm:$0xff] %v3072
        %3105 = vst [vmem:[%s448 + $0x90] sm:$0xff] %v3073
        %3106 = vst [vmem:[%s448 + $0x98] sm:$0xff] %v3074
        %3107 = vst [vmem:[%s448 + $0xa0] sm:$0xff] %v3075
        %3108 = vst [vmem:[%s448 + $0xa8] sm:$0xff] %v3076
        %3109 = vst [vmem:[%s448 + $0xb0] sm:$0xff] %v3077
        %3110 = vst [vmem:[%s448 + $0xb8] sm:$0xff] %v3078
        %3111 = vst [vmem:[%s448 + $0xc0] sm:$0xff] %v3079
        %3112 = vst [vmem:[%s448 + $0xc8] sm:$0xff] %v3080
        %3113 = vst [vmem:[%s448 + $0xd0] sm:$0xff] %v3081
        %3114 = vst [vmem:[%s448 + $0xd8] sm:$0xff] %v3082
        %3115 = vst [vmem:[%s448 + $0xe0] sm:$0xff] %v3083
        %3116 = vst [vmem:[%s448 + $0xe8] sm:$0xff] %v3084
        %3117 = vst [vmem:[%s448 + $0xf0] sm:$0xff] %v3085
        %3118 = vst [vmem:[%s448 + $0xf8] sm:$0xff] %v3086
        %s3119 = sand.u32 %s274, 1
        %s3120 = scalar_lea.sflag [#allocation4], %s3119
        %s3121 = sand.u32 %s274, 1
        %s3122 = smul.addr %s3121, 256
        %s3123 = scalar_lea.vmem [#allocation10], %s3122
        // Predicated region
        $region81: #{tpu_custom_call.1} parent=63 // pred_check
          %p3124 = pneg %p284
        $region82: #{tpu_custom_call.1} parent=63 // pred_check_branch
          %3126 = sbr.rel (%p3124) target = $region84
        $region83: #{tpu_custom_call.1} parent=63 // pred_region
          %s3127 = smul.u32 32, %s30
          %s3129 = ssub.s32 4096, 4096
          %3130 = vsyncadd %s3120, %s3129
          %s3131 = smul.addr %s3127, 128
          %s3132 = scalar_lea.hbm %s11, %s3131
          %s3133 = sshll.u32 %s3123, 4
          %s3134 = int_to_ptr.vmem [resolvable:$true] %s3133
          %3139 = dma.vmem_to_hbm [thread:$0]  %s3134, 4096, %s3132, %s3120, 128, 128, 8
        $region84: #{tpu_custom_call.1} parent=63 // pred_fallthru
          _
      $region64: #{tpu_custom_call.1} parent=5 // pred_fallthru
        _
      %p3140 = scmp.le.s32.totalorder 2, %s25
      // Predicated region
      $region85: #{tpu_custom_call.1} parent=5 // pred_check
        %p3141 = pneg %p3140
      $region86: #{tpu_custom_call.1} parent=5 // pred_check_branch
        %3143 = sbr.rel (%p3141) target = $region88
      $region87: #{tpu_custom_call.1} parent=5 // pred_region
        %s3144 = ssub.s32 %s25, 2
        // Predicated region
        $region89: #{tpu_custom_call.1} parent=87 // pred_check
          %p3145 = pneg %p290
        $region90: #{tpu_custom_call.1} parent=87 // pred_check_branch
          %3147 = sbr.rel (%p3145) target = $region92
        $region91: #{tpu_custom_call.1} parent=87 // pred_region
          %s3148 = sand.u32 %s275, 1
          %s3149 = scalar_lea.sflag [#allocation4], %s3148
          %s3150 = sand.u32 %s275, 1
          %s3151 = smul.addr %s3150, 256
          %s3152 = scalar_lea.vmem [#allocation10], %s3151
          %3153 = dma.done %s3149, 4096
        $region92: #{tpu_custom_call.1} parent=87 // pred_fallthru
          _
      $region88: #{tpu_custom_call.1} parent=5 // pred_fallthru
        _
    $region6: #{tpu_custom_call.1} parent=1 // loop_footer
      %s29 = sadd.s32 1, %s25
    $region7: #{tpu_custom_call.1} parent=1 // loop_footer_branch
      %24 = sbr.rel target = $region3
    $region8: #{tpu_custom_call.1} parent=1 // loop_exit
      _
    %3154 = vsyncpa [#allocation3], 1
    %s3155 = scalar_lea.sflag [#allocation3], 1
    %3156 = vsyncpa %s3155, 1
    %3157 = vsyncpa [#allocation6], 1
    %3158 = vsyncpa [#allocation9], 1
    %3159 = vsyncpa [#allocation4], 1
    %s3160 = scalar_lea.sflag [#allocation4], 1
    %3161 = vsyncpa %s3160, 1

</llo_original>
